<compile_context>
chip_gen: v5e
topology: v5e:2x2
jax: 0.10.0
libtpu: 0.0.40
codegen_flags: <defaults>
</compile_context>

<pallas_src>
import math
import numpy as np
import jax
import jax.numpy as jnp
from jax.experimental import pallas as pl
from jax.experimental.pallas import tpu as pltpu

# ----------------------------- configuration --------------------------------
IMG_SIZE = 16
IN_CHANS_INPUT = 1          # input arrives with 1 channel -> repeated to 3
IN_CHANS = 3
PATCH_SIZE = 4
GRID = IMG_SIZE // PATCH_SIZE          # 4 x 4 patch grid
N_TOKENS = GRID * GRID                 # 16 tokens (== one window)
EMBED_DIM = 32
NUM_HEADS = 2
HEAD_DIM = EMBED_DIM // NUM_HEADS
WINDOW_SIZE = 4                        # one window == whole 4x4 grid
MLP_RATIO = 4
MLP_HIDDEN = EMBED_DIM * MLP_RATIO
NUM_CLASSES = 4
NUM_BLOCKS = 2
LN_EPS = 1e-5
PATCH_FEAT = IN_CHANS * PATCH_SIZE * PATCH_SIZE
HEAD_OUT = PATCH_SIZE * PATCH_SIZE * NUM_CLASSES


# ------------------------------ fused kernel ---------------------------------
def fused_swin_kernel(
    patches_ref,                                   # (M, PATCH_FEAT)  M = B*N_TOKENS
    embed_w_ref, embed_b_ref,                      # (PATCH_FEAT, C), (1, C)
    embed_ln_g_ref, embed_ln_b_ref,                # (1, C) x2
    ln1_g_ref, ln1_b_ref,                          # (NB, 1, C) x2
    wq_ref, wk_ref, wv_ref,                        # (NB, H, C, D) x3
    bq_ref, bk_ref, bv_ref,                        # (NB, H, 1, D) x3
    wproj_ref, bproj_ref,                          # (NB, H, D, C), (NB, 1, C)
    attn_bias_ref,                                 # (NB, H, M, M) rel-bias + window mask
    ln2_g_ref, ln2_b_ref,                          # (NB, 1, C) x2
    mlp_w1_ref, mlp_b1_ref,                        # (NB, C, HID), (NB, 1, HID)
    mlp_w2_ref, mlp_b2_ref,                        # (NB, HID, C), (NB, 1, C)
    final_ln_g_ref, final_ln_b_ref,                # (1, C) x2
    head_w_ref, head_b_ref,                        # (C, HEAD_OUT), (1, HEAD_OUT)
    out_ref,                                       # (M, HEAD_OUT)
):
    def layernorm(x, g, b):
        mean = jnp.mean(x, axis=-1, keepdims=True)
        var = jnp.mean(jnp.square(x - mean), axis=-1, keepdims=True)
        return (x - mean) * jax.lax.rsqrt(var + LN_EPS) * g + b

    # ---- patch embed (im2col already done in wrapper) ----
    x = jnp.dot(patches_ref[...], embed_w_ref[...],
                preferred_element_type=jnp.float32) + embed_b_ref[...]
    x = layernorm(x, embed_ln_g_ref[...], embed_ln_b_ref[...])        # (M, C)

    scale = 1.0 / math.sqrt(HEAD_DIM)

    for blk in range(NUM_BLOCKS):
        # ---------------- W-MSA (all windows batched, per-head weights) -------
        h = layernorm(x, ln1_g_ref[blk], ln1_b_ref[blk])              # (M, C)
        attn_out = jnp.zeros_like(x)
        for hd in range(NUM_HEADS):
            q = jnp.dot(h, wq_ref[blk, hd],
                        preferred_element_type=jnp.float32) + bq_ref[blk, hd]
            k = jnp.dot(h, wk_ref[blk, hd],
                        preferred_element_type=jnp.float32) + bk_ref[blk, hd]
            v = jnp.dot(h, wv_ref[blk, hd],
                        preferred_element_type=jnp.float32) + bv_ref[blk, hd]
            s = jnp.dot(q * scale, k.T, preferred_element_type=jnp.float32)
            s = s + attn_bias_ref[blk, hd]     # rel-pos bias + cross-window mask
            s = s - jnp.max(s, axis=-1, keepdims=True)
            p = jnp.exp(s)
            p = p * pl.reciprocal(jnp.sum(p, axis=-1, keepdims=True), approx=False)
            o_h = jnp.dot(p, v, preferred_element_type=jnp.float32)   # (M, D)
            # head merge via per-head projection slab (no concat / lane shuffle)
            attn_out = attn_out + jnp.dot(o_h, wproj_ref[blk, hd],
                                          preferred_element_type=jnp.float32)
        x = x + attn_out + bproj_ref[blk]                              # residual

        # ---------------- MLP -------------------------------------------------
        h = layernorm(x, ln2_g_ref[blk], ln2_b_ref[blk])
        h1 = jnp.dot(h, mlp_w1_ref[blk],
                     preferred_element_type=jnp.float32) + mlp_b1_ref[blk]
        h1 = jax.nn.gelu(h1)   # TODO(synk): PyTorch nn.GELU default is exact erf
        h2 = jnp.dot(h1, mlp_w2_ref[blk],
                     preferred_element_type=jnp.float32) + mlp_b2_ref[blk]
        x = x + h2                                                     # residual

    # ---- final LN + patch-expansion head ----
    x = layernorm(x, final_ln_g_ref[...], final_ln_b_ref[...])
    out = jnp.dot(x, head_w_ref[...],
                  preferred_element_type=jnp.float32) + head_b_ref[...]
    out_ref[...] = out.astype(out_ref.dtype)


def _full_spec(shape):
    nd = len(shape)
    return pl.BlockSpec(shape, lambda *args, _nd=nd: (0,) * _nd)


# ------------------------------ parameter setup ------------------------------
def init_params(key):
    ks = jax.random.split(key, 32)
    ki = iter(ks)
    std = 0.02

    def nrm(shape):
        return (std * jax.random.normal(next(ki), shape)).astype(jnp.float32)

    p = {}
    p["embed_w"] = nrm((PATCH_FEAT, EMBED_DIM))
    p["embed_b"] = jnp.zeros((1, EMBED_DIM), jnp.float32)
    p["embed_ln_g"] = jnp.ones((1, EMBED_DIM), jnp.float32)
    p["embed_ln_b"] = jnp.zeros((1, EMBED_DIM), jnp.float32)

    p["blocks"] = []
    for _ in range(NUM_BLOCKS):
        blk = {
            "ln1_g": jnp.ones((1, EMBED_DIM), jnp.float32),
            "ln1_b": jnp.zeros((1, EMBED_DIM), jnp.float32),
            "wqkv": nrm((EMBED_DIM, 3 * EMBED_DIM)),
            "bqkv": jnp.zeros((1, 3 * EMBED_DIM), jnp.float32),
            "wproj": nrm((EMBED_DIM, EMBED_DIM)),
            "bproj": jnp.zeros((1, EMBED_DIM), jnp.float32),
            "rel_table": nrm(((2 * WINDOW_SIZE - 1) ** 2, NUM_HEADS)),
            "ln2_g": jnp.ones((1, EMBED_DIM), jnp.float32),
            "ln2_b": jnp.zeros((1, EMBED_DIM), jnp.float32),
            "mlp_w1": nrm((EMBED_DIM, MLP_HIDDEN)),
            "mlp_b1": jnp.zeros((1, MLP_HIDDEN), jnp.float32),
            "mlp_w2": nrm((MLP_HIDDEN, EMBED_DIM)),
            "mlp_b2": jnp.zeros((1, EMBED_DIM), jnp.float32),
        }
        p["blocks"].append(blk)

    p["final_ln_g"] = jnp.ones((1, EMBED_DIM), jnp.float32)
    p["final_ln_b"] = jnp.zeros((1, EMBED_DIM), jnp.float32)
    p["head_w"] = nrm((EMBED_DIM, HEAD_OUT))
    p["head_b"] = jnp.zeros((1, HEAD_OUT), jnp.float32)
    return p


def relative_position_bias(table):
    """(num_heads, N, N) relative position bias for one window."""
    ws = WINDOW_SIZE
    coords = np.stack(np.meshgrid(np.arange(ws), np.arange(ws), indexing="ij"))
    coords = coords.reshape(2, -1)                                  # (2, N)
    rel = coords[:, :, None] - coords[:, None, :]                   # (2, N, N)
    rel = rel.transpose(1, 2, 0).astype(np.int64)
    rel[:, :, 0] += ws - 1
    rel[:, :, 1] += ws - 1
    rel[:, :, 0] *= 2 * ws - 1
    idx = rel.sum(-1)                                               # (N, N)
    bias = table[jnp.asarray(idx)]                                  # (N, N, H)
    return jnp.transpose(bias, (2, 0, 1)).astype(jnp.float32)


def prepare_params(params, batch):
    """Host-side (one-time) weight re-layout + rel-pos-bias precompute.

    Returns the flat tuple of arrays consumed by the fused kernel."""
    def split_qkv(wqkv, bqkv):
        w = wqkv.reshape(EMBED_DIM, 3, NUM_HEADS, HEAD_DIM)     # (C,3,H,D)
        w = jnp.transpose(w, (1, 2, 0, 3))                      # (3,H,C,D)
        b = bqkv.reshape(3, NUM_HEADS, 1, HEAD_DIM)             # (3,H,1,D)
        return w[0], w[1], w[2], b[0], b[1], b[2]

    def build_attn_bias(rel_table):
        rel = relative_position_bias(rel_table)                 # (H, N, N)
        eye = jnp.eye(batch, dtype=jnp.float32)
        big = jnp.einsum("bw,hnm->hbnwm", eye, rel)             # (H,B,N,B,N)
        big = big.reshape(NUM_HEADS, batch * N_TOKENS, batch * N_TOKENS)
        mask = jnp.kron(eye, jnp.ones((N_TOKENS, N_TOKENS), jnp.float32))
        return big + (mask - 1.0) * 1e9                         # -1e9 cross-window

    ln1_g, ln1_b, wq, wk, wv, bq, bk, bv = [], [], [], [], [], [], [], []
    wproj, bproj, abias, ln2_g, ln2_b = [], [], [], [], []
    w1, b1, w2, b2 = [], [], [], []
    for blk in params["blocks"]:
        q_w, k_w, v_w, q_b, k_b, v_b = split_qkv(blk["wqkv"], blk["bqkv"])
        ln1_g.append(blk["ln1_g"]); ln1_b.append(blk["ln1_b"])
        wq.append(q_w); wk.append(k_w); wv.append(v_w)
        bq.append(q_b); bk.append(k_b); bv.append(v_b)
        wproj.append(blk["wproj"].reshape(NUM_HEADS, HEAD_DIM, EMBED_DIM))
        bproj.append(blk["bproj"])
        abias.append(build_attn_bias(blk["rel_table"]))
        ln2_g.append(blk["ln2_g"]); ln2_b.append(blk["ln2_b"])
        w1.append(blk["mlp_w1"]); b1.append(blk["mlp_b1"])
        w2.append(blk["mlp_w2"]); b2.append(blk["mlp_b2"])

    st = jnp.stack
    return (
        params["embed_w"], params["embed_b"],
        params["embed_ln_g"], params["embed_ln_b"],
        st(ln1_g), st(ln1_b),
        st(wq), st(wk), st(wv), st(bq), st(bk), st(bv),
        st(wproj), st(bproj), st(abias),
        st(ln2_g), st(ln2_b),
        st(w1), st(b1), st(w2), st(b2),
        params["final_ln_g"], params["final_ln_b"],
        params["head_w"], params["head_b"],
    )


# --------------------------------- forward ----------------------------------
def swin_unet_forward(prepared, x, dist, cl=None):
    """x: (B, 1 or 3, H, W) NCHW.  Returns logits (B, NUM_CLASSES, H, W)."""
    del dist, cl  # TODO(synk): darswin distortion-aware sampling not available.
    B = x.shape[0]
    if x.shape[1] == 1:
        x = jnp.tile(x, (1, 3, 1, 1))       # torch: x.repeat(1, 3, 1, 1)

    # im2col for Conv2d(k=4, s=4) patch embed (layout plumbing, done by XLA)
    xb = x.reshape(B, IN_CHANS, GRID, PATCH_SIZE, GRID, PATCH_SIZE)
    xb = jnp.transpose(xb, (0, 2, 4, 1, 3, 5))              # (B,Hp,Wp,C,ph,pw)
    patches = xb.reshape(B * N_TOKENS, PATCH_FEAT)

    args = (patches,) + tuple(prepared)
    out = pl.pallas_call(
        fused_swin_kernel,
        out_shape=jax.ShapeDtypeStruct((B * N_TOKENS, HEAD_OUT), jnp.float32),
        in_specs=[_full_spec(a.shape) for a in args],
        out_specs=_full_spec((B * N_TOKENS, HEAD_OUT)),
        compiler_params=pltpu.CompilerParams(vmem_limit_bytes=8 * 1024 * 1024),
    )(*args)

    # patch-expansion -> NCHW logits (tiny reshape/transpose, done by XLA)
    out = out.reshape(B, GRID, GRID, PATCH_SIZE, PATCH_SIZE, NUM_CLASSES)
    out = jnp.transpose(out, (0, 5, 1, 3, 2, 4))            # (B,nc,Hp,ph,Wp,pw)
    return out.reshape(B, NUM_CLASSES, IMG_SIZE, IMG_SIZE)


# ----------------------------------- main ------------------------------------
if __name__ == "__main__":
    key = jax.random.PRNGKey(0)
    k_x, k_d, k_p = jax.random.split(key, 3)

    B = 2
    x = jax.random.normal(k_x, (B, IN_CHANS_INPUT, IMG_SIZE, IMG_SIZE),
                          dtype=jnp.float32)
    dist = jax.random.normal(k_d, (B, 4), dtype=jnp.float32)  # distortion params
    params = init_params(k_p)
    # one-time host-side prep: weight re-layout + rel-pos bias (hoisted out of jit)
    prepared = prepare_params(params, B)

    fwd = jax.jit(swin_unet_forward)
    logits = fwd(prepared, x, dist)
    jax.block_until_ready(logits)

    assert logits.shape == (B, NUM_CLASSES, IMG_SIZE, IMG_SIZE)
    assert bool(jnp.all(jnp.isfinite(logits)))
    print("KERNEL_OK")
</pallas_src>

<mosaic_0001>
module attributes {stable_mosaic.version = 11 : i64} {
  func.func @fused_swin_kernel(%arg0: memref<32x48xf32, #tpu.memory_space<vmem>>, %arg1: memref<48x32xf32, #tpu.memory_space<vmem>>, %arg2: memref<1x32xf32, #tpu.memory_space<vmem>>, %arg3: memref<1x32xf32, #tpu.memory_space<vmem>>, %arg4: memref<1x32xf32, #tpu.memory_space<vmem>>, %arg5: memref<2x1x32xf32, #tpu.memory_space<vmem>>, %arg6: memref<2x1x32xf32, #tpu.memory_space<vmem>>, %arg7: memref<2x2x32x16xf32, #tpu.memory_space<vmem>>, %arg8: memref<2x2x32x16xf32, #tpu.memory_space<vmem>>, %arg9: memref<2x2x32x16xf32, #tpu.memory_space<vmem>>, %arg10: memref<2x2x1x16xf32, #tpu.memory_space<vmem>>, %arg11: memref<2x2x1x16xf32, #tpu.memory_space<vmem>>, %arg12: memref<2x2x1x16xf32, #tpu.memory_space<vmem>>, %arg13: memref<2x2x16x32xf32, #tpu.memory_space<vmem>>, %arg14: memref<2x1x32xf32, #tpu.memory_space<vmem>>, %arg15: memref<2x2x32x32xf32, #tpu.memory_space<vmem>>, %arg16: memref<2x1x32xf32, #tpu.memory_space<vmem>>, %arg17: memref<2x1x32xf32, #tpu.memory_space<vmem>>, %arg18: memref<2x32x128xf32, #tpu.memory_space<vmem>>, %arg19: memref<2x1x128xf32, #tpu.memory_space<vmem>>, %arg20: memref<2x128x32xf32, #tpu.memory_space<vmem>>, %arg21: memref<2x1x32xf32, #tpu.memory_space<vmem>>, %arg22: memref<1x32xf32, #tpu.memory_space<vmem>>, %arg23: memref<1x32xf32, #tpu.memory_space<vmem>>, %arg24: memref<32x64xf32, #tpu.memory_space<vmem>>, %arg25: memref<1x64xf32, #tpu.memory_space<vmem>>, %arg26: memref<32x64xf32, #tpu.memory_space<vmem>>) attributes {dimension_semantics = [], scalar_prefetch = 0 : i64, scratch_operands = 0 : i64, tpu.core_type = #tpu.core_type<tc>} {
    %c0 = arith.constant 0 : index
    %c0_0 = arith.constant 0 : index
    %0 = vector.load %arg0[%c0, %c0_0] : memref<32x48xf32, #tpu.memory_space<vmem>>, vector<32x48xf32>
    %c0_1 = arith.constant 0 : index
    %c0_2 = arith.constant 0 : index
    %1 = vector.load %arg1[%c0_1, %c0_2] : memref<48x32xf32, #tpu.memory_space<vmem>>, vector<48x32xf32>
    %cst = arith.constant dense<0.000000e+00> : vector<32x32xf32>
    %2 = tpu.matmul %0, %1, %cst {dimension_numbers = #tpu.dot_dimension_numbers<[1], [0], [0], [1], [0, 0, 1, 1], [], []>} : vector<32x48xf32>, vector<48x32xf32>, vector<32x32xf32> -> vector<32x32xf32>
    %c0_3 = arith.constant 0 : index
    %c0_4 = arith.constant 0 : index
    %3 = vector.load %arg2[%c0_3, %c0_4] : memref<1x32xf32, #tpu.memory_space<vmem>>, vector<1x32xf32>
    %4 = vector.broadcast %3 : vector<1x32xf32> to vector<32x32xf32>
    %5 = arith.addf %2, %4 : vector<32x32xf32>
    %c0_5 = arith.constant 0 : index
    %c0_6 = arith.constant 0 : index
    %6 = vector.load %arg3[%c0_5, %c0_6] : memref<1x32xf32, #tpu.memory_space<vmem>>, vector<1x32xf32>
    %c0_7 = arith.constant 0 : index
    %c0_8 = arith.constant 0 : index
    %7 = vector.load %arg4[%c0_7, %c0_8] : memref<1x32xf32, #tpu.memory_space<vmem>>, vector<1x32xf32>
    %cst_9 = arith.constant dense<0.000000e+00> : vector<32xf32>
    %8 = vector.multi_reduction <add>, %5, %cst_9 [1] : vector<32x32xf32> to vector<32xf32>
    %9 = vector.shape_cast %8 : vector<32xf32> to vector<32x1xf32>
    %cst_10 = arith.constant 3.200000e+01 : f32
    %10 = vector.broadcast %cst_10 : f32 to vector<32x1xf32>
    %11 = arith.divf %9, %10 : vector<32x1xf32>
    %12 = vector.broadcast %11 : vector<32x1xf32> to vector<32x32xf32>
    %13 = arith.subf %5, %12 : vector<32x32xf32>
    %14 = arith.mulf %13, %13 : vector<32x32xf32>
    %cst_11 = arith.constant dense<0.000000e+00> : vector<32xf32>
    %15 = vector.multi_reduction <add>, %14, %cst_11 [1] : vector<32x32xf32> to vector<32xf32>
    %16 = vector.shape_cast %15 : vector<32xf32> to vector<32x1xf32>
    %cst_12 = arith.constant 3.200000e+01 : f32
    %17 = vector.broadcast %cst_12 : f32 to vector<32x1xf32>
    %18 = arith.divf %16, %17 : vector<32x1xf32>
    %19 = vector.broadcast %11 : vector<32x1xf32> to vector<32x32xf32>
    %20 = arith.subf %5, %19 : vector<32x32xf32>
    %cst_13 = arith.constant 9.99999974E-6 : f32
    %21 = vector.broadcast %cst_13 : f32 to vector<32x1xf32>
    %22 = arith.addf %18, %21 : vector<32x1xf32>
    %23 = math.rsqrt %22 : vector<32x1xf32>
    %24 = vector.broadcast %23 : vector<32x1xf32> to vector<32x32xf32>
    %25 = arith.mulf %20, %24 : vector<32x32xf32>
    %26 = vector.broadcast %6 : vector<1x32xf32> to vector<32x32xf32>
    %27 = arith.mulf %25, %26 : vector<32x32xf32>
    %28 = vector.broadcast %7 : vector<1x32xf32> to vector<32x32xf32>
    %29 = arith.addf %27, %28 : vector<32x32xf32>
    %c0_14 = arith.constant 0 : index
    %c0_15 = arith.constant 0 : index
    %c0_16 = arith.constant 0 : index
    %30 = vector.load %arg5[%c0_14, %c0_15, %c0_16] : memref<2x1x32xf32, #tpu.memory_space<vmem>>, vector<1x1x32xf32>
    %31 = vector.shape_cast %30 : vector<1x1x32xf32> to vector<1x32xf32>
    %c0_17 = arith.constant 0 : index
    %c0_18 = arith.constant 0 : index
    %c0_19 = arith.constant 0 : index
    %32 = vector.load %arg6[%c0_17, %c0_18, %c0_19] : memref<2x1x32xf32, #tpu.memory_space<vmem>>, vector<1x1x32xf32>
    %33 = vector.shape_cast %32 : vector<1x1x32xf32> to vector<1x32xf32>
    %cst_20 = arith.constant dense<0.000000e+00> : vector<32xf32>
    %34 = vector.multi_reduction <add>, %29, %cst_20 [1] : vector<32x32xf32> to vector<32xf32>
    %35 = vector.shape_cast %34 : vector<32xf32> to vector<32x1xf32>
    %cst_21 = arith.constant 3.200000e+01 : f32
    %36 = vector.broadcast %cst_21 : f32 to vector<32x1xf32>
    %37 = arith.divf %35, %36 : vector<32x1xf32>
    %38 = vector.broadcast %37 : vector<32x1xf32> to vector<32x32xf32>
    %39 = arith.subf %29, %38 : vector<32x32xf32>
    %40 = arith.mulf %39, %39 : vector<32x32xf32>
    %cst_22 = arith.constant dense<0.000000e+00> : vector<32xf32>
    %41 = vector.multi_reduction <add>, %40, %cst_22 [1] : vector<32x32xf32> to vector<32xf32>
    %42 = vector.shape_cast %41 : vector<32xf32> to vector<32x1xf32>
    %cst_23 = arith.constant 3.200000e+01 : f32
    %43 = vector.broadcast %cst_23 : f32 to vector<32x1xf32>
    %44 = arith.divf %42, %43 : vector<32x1xf32>
    %45 = vector.broadcast %37 : vector<32x1xf32> to vector<32x32xf32>
    %46 = arith.subf %29, %45 : vector<32x32xf32>
    %cst_24 = arith.constant 9.99999974E-6 : f32
    %47 = vector.broadcast %cst_24 : f32 to vector<32x1xf32>
    %48 = arith.addf %44, %47 : vector<32x1xf32>
    %49 = math.rsqrt %48 : vector<32x1xf32>
    %50 = vector.broadcast %49 : vector<32x1xf32> to vector<32x32xf32>
    %51 = arith.mulf %46, %50 : vector<32x32xf32>
    %52 = vector.broadcast %31 : vector<1x32xf32> to vector<32x32xf32>
    %53 = arith.mulf %51, %52 : vector<32x32xf32>
    %54 = vector.broadcast %33 : vector<1x32xf32> to vector<32x32xf32>
    %55 = arith.addf %53, %54 : vector<32x32xf32>
    %cst_25 = arith.constant 0.000000e+00 : f32
    %56 = vector.broadcast %cst_25 : f32 to vector<32x32xf32>
    %c0_26 = arith.constant 0 : index
    %c0_27 = arith.constant 0 : index
    %c0_28 = arith.constant 0 : index
    %c0_29 = arith.constant 0 : index
    %57 = vector.load %arg7[%c0_26, %c0_27, %c0_28, %c0_29] : memref<2x2x32x16xf32, #tpu.memory_space<vmem>>, vector<1x1x32x16xf32>
    %58 = vector.shape_cast %57 : vector<1x1x32x16xf32> to vector<32x16xf32>
    %cst_30 = arith.constant dense<0.000000e+00> : vector<32x16xf32>
    %59 = tpu.matmul %55, %58, %cst_30 {dimension_numbers = #tpu.dot_dimension_numbers<[1], [0], [0], [1], [0, 0, 1, 1], [], []>} : vector<32x32xf32>, vector<32x16xf32>, vector<32x16xf32> -> vector<32x16xf32>
    %c0_31 = arith.constant 0 : index
    %c0_32 = arith.constant 0 : index
    %c0_33 = arith.constant 0 : index
    %c0_34 = arith.constant 0 : index
    %60 = vector.load %arg10[%c0_31, %c0_32, %c0_33, %c0_34] : memref<2x2x1x16xf32, #tpu.memory_space<vmem>>, vector<1x1x1x16xf32>
    %61 = vector.shape_cast %60 : vector<1x1x1x16xf32> to vector<1x16xf32>
    %62 = vector.broadcast %61 : vector<1x16xf32> to vector<32x16xf32>
    %63 = arith.addf %59, %62 : vector<32x16xf32>
    %c0_35 = arith.constant 0 : index
    %c0_36 = arith.constant 0 : index
    %c0_37 = arith.constant 0 : index
    %c0_38 = arith.constant 0 : index
    %64 = vector.load %arg8[%c0_35, %c0_36, %c0_37, %c0_38] : memref<2x2x32x16xf32, #tpu.memory_space<vmem>>, vector<1x1x32x16xf32>
    %65 = vector.shape_cast %64 : vector<1x1x32x16xf32> to vector<32x16xf32>
    %cst_39 = arith.constant dense<0.000000e+00> : vector<32x16xf32>
    %66 = tpu.matmul %55, %65, %cst_39 {dimension_numbers = #tpu.dot_dimension_numbers<[1], [0], [0], [1], [0, 0, 1, 1], [], []>} : vector<32x32xf32>, vector<32x16xf32>, vector<32x16xf32> -> vector<32x16xf32>
    %c0_40 = arith.constant 0 : index
    %c0_41 = arith.constant 0 : index
    %c0_42 = arith.constant 0 : index
    %c0_43 = arith.constant 0 : index
    %67 = vector.load %arg11[%c0_40, %c0_41, %c0_42, %c0_43] : memref<2x2x1x16xf32, #tpu.memory_space<vmem>>, vector<1x1x1x16xf32>
    %68 = vector.shape_cast %67 : vector<1x1x1x16xf32> to vector<1x16xf32>
    %69 = vector.broadcast %68 : vector<1x16xf32> to vector<32x16xf32>
    %70 = arith.addf %66, %69 : vector<32x16xf32>
    %c0_44 = arith.constant 0 : index
    %c0_45 = arith.constant 0 : index
    %c0_46 = arith.constant 0 : index
    %c0_47 = arith.constant 0 : index
    %71 = vector.load %arg9[%c0_44, %c0_45, %c0_46, %c0_47] : memref<2x2x32x16xf32, #tpu.memory_space<vmem>>, vector<1x1x32x16xf32>
    %72 = vector.shape_cast %71 : vector<1x1x32x16xf32> to vector<32x16xf32>
    %cst_48 = arith.constant dense<0.000000e+00> : vector<32x16xf32>
    %73 = tpu.matmul %55, %72, %cst_48 {dimension_numbers = #tpu.dot_dimension_numbers<[1], [0], [0], [1], [0, 0, 1, 1], [], []>} : vector<32x32xf32>, vector<32x16xf32>, vector<32x16xf32> -> vector<32x16xf32>
    %c0_49 = arith.constant 0 : index
    %c0_50 = arith.constant 0 : index
    %c0_51 = arith.constant 0 : index
    %c0_52 = arith.constant 0 : index
    %74 = vector.load %arg12[%c0_49, %c0_50, %c0_51, %c0_52] : memref<2x2x1x16xf32, #tpu.memory_space<vmem>>, vector<1x1x1x16xf32>
    %75 = vector.shape_cast %74 : vector<1x1x1x16xf32> to vector<1x16xf32>
    %76 = vector.broadcast %75 : vector<1x16xf32> to vector<32x16xf32>
    %77 = arith.addf %73, %76 : vector<32x16xf32>
    %cst_53 = arith.constant 2.500000e-01 : f32
    %78 = vector.broadcast %cst_53 : f32 to vector<32x16xf32>
    %79 = arith.mulf %63, %78 : vector<32x16xf32>
    %80 = tpu.transpose %70, [1, 0] : vector<32x16xf32> -> vector<16x32xf32>
    %cst_54 = arith.constant dense<0.000000e+00> : vector<32x32xf32>
    %81 = tpu.matmul %79, %80, %cst_54 {dimension_numbers = #tpu.dot_dimension_numbers<[1], [0], [0], [1], [0, 0, 1, 1], [], []>} : vector<32x16xf32>, vector<16x32xf32>, vector<32x32xf32> -> vector<32x32xf32>
    %c0_55 = arith.constant 0 : index
    %c0_56 = arith.constant 0 : index
    %c0_57 = arith.constant 0 : index
    %c0_58 = arith.constant 0 : index
    %82 = vector.load %arg15[%c0_55, %c0_56, %c0_57, %c0_58] : memref<2x2x32x32xf32, #tpu.memory_space<vmem>>, vector<1x1x32x32xf32>
    %83 = vector.shape_cast %82 : vector<1x1x32x32xf32> to vector<32x32xf32>
    %84 = arith.addf %81, %83 : vector<32x32xf32>
    %cst_59 = arith.constant dense<0xFF800000> : vector<32xf32>
    %85 = vector.multi_reduction <maximumf>, %84, %cst_59 [1] : vector<32x32xf32> to vector<32xf32>
    %86 = vector.shape_cast %85 : vector<32xf32> to vector<32x1xf32>
    %87 = vector.broadcast %86 : vector<32x1xf32> to vector<32x32xf32>
    %88 = arith.subf %84, %87 : vector<32x32xf32>
    %89 = math.exp %88 : vector<32x32xf32>
    %cst_60 = arith.constant dense<0.000000e+00> : vector<32xf32>
    %90 = vector.multi_reduction <add>, %89, %cst_60 [1] : vector<32x32xf32> to vector<32xf32>
    %91 = vector.shape_cast %90 : vector<32xf32> to vector<32x1xf32>
    %92 = tpu.reciprocal %91 : vector<32x1xf32> -> vector<32x1xf32>
    %93 = vector.broadcast %92 : vector<32x1xf32> to vector<32x32xf32>
    %94 = arith.mulf %89, %93 : vector<32x32xf32>
    %cst_61 = arith.constant dense<0.000000e+00> : vector<32x16xf32>
    %95 = tpu.matmul %94, %77, %cst_61 {dimension_numbers = #tpu.dot_dimension_numbers<[1], [0], [0], [1], [0, 0, 1, 1], [], []>} : vector<32x32xf32>, vector<32x16xf32>, vector<32x16xf32> -> vector<32x16xf32>
    %c0_62 = arith.constant 0 : index
    %c0_63 = arith.constant 0 : index
    %c0_64 = arith.constant 0 : index
    %c0_65 = arith.constant 0 : index
    %96 = vector.load %arg13[%c0_62, %c0_63, %c0_64, %c0_65] : memref<2x2x16x32xf32, #tpu.memory_space<vmem>>, vector<1x1x16x32xf32>
    %97 = vector.shape_cast %96 : vector<1x1x16x32xf32> to vector<16x32xf32>
    %cst_66 = arith.constant dense<0.000000e+00> : vector<32x32xf32>
    %98 = tpu.matmul %95, %97, %cst_66 {dimension_numbers = #tpu.dot_dimension_numbers<[1], [0], [0], [1], [0, 0, 1, 1], [], []>} : vector<32x16xf32>, vector<16x32xf32>, vector<32x32xf32> -> vector<32x32xf32>
    %99 = arith.addf %56, %98 : vector<32x32xf32>
    %c0_67 = arith.constant 0 : index
    %c1 = arith.constant 1 : index
    %c0_68 = arith.constant 0 : index
    %c0_69 = arith.constant 0 : index
    %100 = vector.load %arg7[%c0_67, %c1, %c0_68, %c0_69] : memref<2x2x32x16xf32, #tpu.memory_space<vmem>>, vector<1x1x32x16xf32>
    %101 = vector.shape_cast %100 : vector<1x1x32x16xf32> to vector<32x16xf32>
    %cst_70 = arith.constant dense<0.000000e+00> : vector<32x16xf32>
    %102 = tpu.matmul %55, %101, %cst_70 {dimension_numbers = #tpu.dot_dimension_numbers<[1], [0], [0], [1], [0, 0, 1, 1], [], []>} : vector<32x32xf32>, vector<32x16xf32>, vector<32x16xf32> -> vector<32x16xf32>
    %c0_71 = arith.constant 0 : index
    %c1_72 = arith.constant 1 : index
    %c0_73 = arith.constant 0 : index
    %c0_74 = arith.constant 0 : index
    %103 = vector.load %arg10[%c0_71, %c1_72, %c0_73, %c0_74] : memref<2x2x1x16xf32, #tpu.memory_space<vmem>>, vector<1x1x1x16xf32>
    %104 = vector.shape_cast %103 : vector<1x1x1x16xf32> to vector<1x16xf32>
    %105 = vector.broadcast %104 : vector<1x16xf32> to vector<32x16xf32>
    %106 = arith.addf %102, %105 : vector<32x16xf32>
    %c0_75 = arith.constant 0 : index
    %c1_76 = arith.constant 1 : index
    %c0_77 = arith.constant 0 : index
    %c0_78 = arith.constant 0 : index
    %107 = vector.load %arg8[%c0_75, %c1_76, %c0_77, %c0_78] : memref<2x2x32x16xf32, #tpu.memory_space<vmem>>, vector<1x1x32x16xf32>
    %108 = vector.shape_cast %107 : vector<1x1x32x16xf32> to vector<32x16xf32>
    %cst_79 = arith.constant dense<0.000000e+00> : vector<32x16xf32>
    %109 = tpu.matmul %55, %108, %cst_79 {dimension_numbers = #tpu.dot_dimension_numbers<[1], [0], [0], [1], [0, 0, 1, 1], [], []>} : vector<32x32xf32>, vector<32x16xf32>, vector<32x16xf32> -> vector<32x16xf32>
    %c0_80 = arith.constant 0 : index
    %c1_81 = arith.constant 1 : index
    %c0_82 = arith.constant 0 : index
    %c0_83 = arith.constant 0 : index
    %110 = vector.load %arg11[%c0_80, %c1_81, %c0_82, %c0_83] : memref<2x2x1x16xf32, #tpu.memory_space<vmem>>, vector<1x1x1x16xf32>
    %111 = vector.shape_cast %110 : vector<1x1x1x16xf32> to vector<1x16xf32>
    %112 = vector.broadcast %111 : vector<1x16xf32> to vector<32x16xf32>
    %113 = arith.addf %109, %112 : vector<32x16xf32>
    %c0_84 = arith.constant 0 : index
    %c1_85 = arith.constant 1 : index
    %c0_86 = arith.constant 0 : index
    %c0_87 = arith.constant 0 : index
    %114 = vector.load %arg9[%c0_84, %c1_85, %c0_86, %c0_87] : memref<2x2x32x16xf32, #tpu.memory_space<vmem>>, vector<1x1x32x16xf32>
    %115 = vector.shape_cast %114 : vector<1x1x32x16xf32> to vector<32x16xf32>
    %cst_88 = arith.constant dense<0.000000e+00> : vector<32x16xf32>
    %116 = tpu.matmul %55, %115, %cst_88 {dimension_numbers = #tpu.dot_dimension_numbers<[1], [0], [0], [1], [0, 0, 1, 1], [], []>} : vector<32x32xf32>, vector<32x16xf32>, vector<32x16xf32> -> vector<32x16xf32>
    %c0_89 = arith.constant 0 : index
    %c1_90 = arith.constant 1 : index
    %c0_91 = arith.constant 0 : index
    %c0_92 = arith.constant 0 : index
    %117 = vector.load %arg12[%c0_89, %c1_90, %c0_91, %c0_92] : memref<2x2x1x16xf32, #tpu.memory_space<vmem>>, vector<1x1x1x16xf32>
    %118 = vector.shape_cast %117 : vector<1x1x1x16xf32> to vector<1x16xf32>
    %119 = vector.broadcast %118 : vector<1x16xf32> to vector<32x16xf32>
    %120 = arith.addf %116, %119 : vector<32x16xf32>
    %cst_93 = arith.constant 2.500000e-01 : f32
    %121 = vector.broadcast %cst_93 : f32 to vector<32x16xf32>
    %122 = arith.mulf %106, %121 : vector<32x16xf32>
    %123 = tpu.transpose %113, [1, 0] : vector<32x16xf32> -> vector<16x32xf32>
    %cst_94 = arith.constant dense<0.000000e+00> : vector<32x32xf32>
    %124 = tpu.matmul %122, %123, %cst_94 {dimension_numbers = #tpu.dot_dimension_numbers<[1], [0], [0], [1], [0, 0, 1, 1], [], []>} : vector<32x16xf32>, vector<16x32xf32>, vector<32x32xf32> -> vector<32x32xf32>
    %c0_95 = arith.constant 0 : index
    %c1_96 = arith.constant 1 : index
    %c0_97 = arith.constant 0 : index
    %c0_98 = arith.constant 0 : index
    %125 = vector.load %arg15[%c0_95, %c1_96, %c0_97, %c0_98] : memref<2x2x32x32xf32, #tpu.memory_space<vmem>>, vector<1x1x32x32xf32>
    %126 = vector.shape_cast %125 : vector<1x1x32x32xf32> to vector<32x32xf32>
    %127 = arith.addf %124, %126 : vector<32x32xf32>
    %cst_99 = arith.constant dense<0xFF800000> : vector<32xf32>
    %128 = vector.multi_reduction <maximumf>, %127, %cst_99 [1] : vector<32x32xf32> to vector<32xf32>
    %129 = vector.shape_cast %128 : vector<32xf32> to vector<32x1xf32>
    %130 = vector.broadcast %129 : vector<32x1xf32> to vector<32x32xf32>
    %131 = arith.subf %127, %130 : vector<32x32xf32>
    %132 = math.exp %131 : vector<32x32xf32>
    %cst_100 = arith.constant dense<0.000000e+00> : vector<32xf32>
    %133 = vector.multi_reduction <add>, %132, %cst_100 [1] : vector<32x32xf32> to vector<32xf32>
    %134 = vector.shape_cast %133 : vector<32xf32> to vector<32x1xf32>
    %135 = tpu.reciprocal %134 : vector<32x1xf32> -> vector<32x1xf32>
    %136 = vector.broadcast %135 : vector<32x1xf32> to vector<32x32xf32>
    %137 = arith.mulf %132, %136 : vector<32x32xf32>
    %cst_101 = arith.constant dense<0.000000e+00> : vector<32x16xf32>
    %138 = tpu.matmul %137, %120, %cst_101 {dimension_numbers = #tpu.dot_dimension_numbers<[1], [0], [0], [1], [0, 0, 1, 1], [], []>} : vector<32x32xf32>, vector<32x16xf32>, vector<32x16xf32> -> vector<32x16xf32>
    %c0_102 = arith.constant 0 : index
    %c1_103 = arith.constant 1 : index
    %c0_104 = arith.constant 0 : index
    %c0_105 = arith.constant 0 : index
    %139 = vector.load %arg13[%c0_102, %c1_103, %c0_104, %c0_105] : memref<2x2x16x32xf32, #tpu.memory_space<vmem>>, vector<1x1x16x32xf32>
    %140 = vector.shape_cast %139 : vector<1x1x16x32xf32> to vector<16x32xf32>
    %cst_106 = arith.constant dense<0.000000e+00> : vector<32x32xf32>
    %141 = tpu.matmul %138, %140, %cst_106 {dimension_numbers = #tpu.dot_dimension_numbers<[1], [0], [0], [1], [0, 0, 1, 1], [], []>} : vector<32x16xf32>, vector<16x32xf32>, vector<32x32xf32> -> vector<32x32xf32>
    %142 = arith.addf %99, %141 : vector<32x32xf32>
    %143 = arith.addf %29, %142 : vector<32x32xf32>
    %c0_107 = arith.constant 0 : index
    %c0_108 = arith.constant 0 : index
    %c0_109 = arith.constant 0 : index
    %144 = vector.load %arg14[%c0_107, %c0_108, %c0_109] : memref<2x1x32xf32, #tpu.memory_space<vmem>>, vector<1x1x32xf32>
    %145 = vector.shape_cast %144 : vector<1x1x32xf32> to vector<1x32xf32>
    %146 = vector.broadcast %145 : vector<1x32xf32> to vector<32x32xf32>
    %147 = arith.addf %143, %146 : vector<32x32xf32>
    %c0_110 = arith.constant 0 : index
    %c0_111 = arith.constant 0 : index
    %c0_112 = arith.constant 0 : index
    %148 = vector.load %arg16[%c0_110, %c0_111, %c0_112] : memref<2x1x32xf32, #tpu.memory_space<vmem>>, vector<1x1x32xf32>
    %149 = vector.shape_cast %148 : vector<1x1x32xf32> to vector<1x32xf32>
    %c0_113 = arith.constant 0 : index
    %c0_114 = arith.constant 0 : index
    %c0_115 = arith.constant 0 : index
    %150 = vector.load %arg17[%c0_113, %c0_114, %c0_115] : memref<2x1x32xf32, #tpu.memory_space<vmem>>, vector<1x1x32xf32>
    %151 = vector.shape_cast %150 : vector<1x1x32xf32> to vector<1x32xf32>
    %cst_116 = arith.constant dense<0.000000e+00> : vector<32xf32>
    %152 = vector.multi_reduction <add>, %147, %cst_116 [1] : vector<32x32xf32> to vector<32xf32>
    %153 = vector.shape_cast %152 : vector<32xf32> to vector<32x1xf32>
    %cst_117 = arith.constant 3.200000e+01 : f32
    %154 = vector.broadcast %cst_117 : f32 to vector<32x1xf32>
    %155 = arith.divf %153, %154 : vector<32x1xf32>
    %156 = vector.broadcast %155 : vector<32x1xf32> to vector<32x32xf32>
    %157 = arith.subf %147, %156 : vector<32x32xf32>
    %158 = arith.mulf %157, %157 : vector<32x32xf32>
    %cst_118 = arith.constant dense<0.000000e+00> : vector<32xf32>
    %159 = vector.multi_reduction <add>, %158, %cst_118 [1] : vector<32x32xf32> to vector<32xf32>
    %160 = vector.shape_cast %159 : vector<32xf32> to vector<32x1xf32>
    %cst_119 = arith.constant 3.200000e+01 : f32
    %161 = vector.broadcast %cst_119 : f32 to vector<32x1xf32>
    %162 = arith.divf %160, %161 : vector<32x1xf32>
    %163 = vector.broadcast %155 : vector<32x1xf32> to vector<32x32xf32>
    %164 = arith.subf %147, %163 : vector<32x32xf32>
    %cst_120 = arith.constant 9.99999974E-6 : f32
    %165 = vector.broadcast %cst_120 : f32 to vector<32x1xf32>
    %166 = arith.addf %162, %165 : vector<32x1xf32>
    %167 = math.rsqrt %166 : vector<32x1xf32>
    %168 = vector.broadcast %167 : vector<32x1xf32> to vector<32x32xf32>
    %169 = arith.mulf %164, %168 : vector<32x32xf32>
    %170 = vector.broadcast %149 : vector<1x32xf32> to vector<32x32xf32>
    %171 = arith.mulf %169, %170 : vector<32x32xf32>
    %172 = vector.broadcast %151 : vector<1x32xf32> to vector<32x32xf32>
    %173 = arith.addf %171, %172 : vector<32x32xf32>
    %c0_121 = arith.constant 0 : index
    %c0_122 = arith.constant 0 : index
    %c0_123 = arith.constant 0 : index
    %174 = vector.load %arg18[%c0_121, %c0_122, %c0_123] : memref<2x32x128xf32, #tpu.memory_space<vmem>>, vector<1x32x128xf32>
    %175 = vector.shape_cast %174 : vector<1x32x128xf32> to vector<32x128xf32>
    %cst_124 = arith.constant dense<0.000000e+00> : vector<32x128xf32>
    %176 = tpu.matmul %173, %175, %cst_124 {dimension_numbers = #tpu.dot_dimension_numbers<[1], [0], [0], [1], [0, 0, 1, 1], [], []>} : vector<32x32xf32>, vector<32x128xf32>, vector<32x128xf32> -> vector<32x128xf32>
    %c0_125 = arith.constant 0 : index
    %c0_126 = arith.constant 0 : index
    %c0_127 = arith.constant 0 : index
    %177 = vector.load %arg19[%c0_125, %c0_126, %c0_127] : memref<2x1x128xf32, #tpu.memory_space<vmem>>, vector<1x1x128xf32>
    %178 = vector.shape_cast %177 : vector<1x1x128xf32> to vector<1x128xf32>
    %179 = vector.broadcast %178 : vector<1x128xf32> to vector<32x128xf32>
    %180 = arith.addf %176, %179 : vector<32x128xf32>
    %181 = arith.mulf %180, %180 : vector<32x128xf32>
    %182 = arith.mulf %180, %181 : vector<32x128xf32>
    %cst_128 = arith.constant 4.471500e-02 : f32
    %183 = vector.broadcast %cst_128 : f32 to vector<32x128xf32>
    %184 = arith.mulf %183, %182 : vector<32x128xf32>
    %185 = arith.addf %180, %184 : vector<32x128xf32>
    %cst_129 = arith.constant 0.797884583 : f32
    %186 = vector.broadcast %cst_129 : f32 to vector<32x128xf32>
    %187 = arith.mulf %186, %185 : vector<32x128xf32>
    %188 = math.tanh %187 : vector<32x128xf32>
    %cst_130 = arith.constant 1.000000e+00 : f32
    %189 = vector.broadcast %cst_130 : f32 to vector<32x128xf32>
    %190 = arith.addf %189, %188 : vector<32x128xf32>
    %cst_131 = arith.constant 5.000000e-01 : f32
    %191 = vector.broadcast %cst_131 : f32 to vector<32x128xf32>
    %192 = arith.mulf %191, %190 : vector<32x128xf32>
    %193 = arith.mulf %180, %192 : vector<32x128xf32>
    %c0_132 = arith.constant 0 : index
    %c0_133 = arith.constant 0 : index
    %c0_134 = arith.constant 0 : index
    %194 = vector.load %arg20[%c0_132, %c0_133, %c0_134] : memref<2x128x32xf32, #tpu.memory_space<vmem>>, vector<1x128x32xf32>
    %195 = vector.shape_cast %194 : vector<1x128x32xf32> to vector<128x32xf32>
    %cst_135 = arith.constant dense<0.000000e+00> : vector<32x32xf32>
    %196 = tpu.matmul %193, %195, %cst_135 {dimension_numbers = #tpu.dot_dimension_numbers<[1], [0], [0], [1], [0, 0, 1, 1], [], []>} : vector<32x128xf32>, vector<128x32xf32>, vector<32x32xf32> -> vector<32x32xf32>
    %c0_136 = arith.constant 0 : index
    %c0_137 = arith.constant 0 : index
    %c0_138 = arith.constant 0 : index
    %197 = vector.load %arg21[%c0_136, %c0_137, %c0_138] : memref<2x1x32xf32, #tpu.memory_space<vmem>>, vector<1x1x32xf32>
    %198 = vector.shape_cast %197 : vector<1x1x32xf32> to vector<1x32xf32>
    %199 = vector.broadcast %198 : vector<1x32xf32> to vector<32x32xf32>
    %200 = arith.addf %196, %199 : vector<32x32xf32>
    %201 = arith.addf %147, %200 : vector<32x32xf32>
    %c1_139 = arith.constant 1 : index
    %c0_140 = arith.constant 0 : index
    %c0_141 = arith.constant 0 : index
    %202 = vector.load %arg5[%c1_139, %c0_140, %c0_141] : memref<2x1x32xf32, #tpu.memory_space<vmem>>, vector<1x1x32xf32>
    %203 = vector.shape_cast %202 : vector<1x1x32xf32> to vector<1x32xf32>
    %c1_142 = arith.constant 1 : index
    %c0_143 = arith.constant 0 : index
    %c0_144 = arith.constant 0 : index
    %204 = vector.load %arg6[%c1_142, %c0_143, %c0_144] : memref<2x1x32xf32, #tpu.memory_space<vmem>>, vector<1x1x32xf32>
    %205 = vector.shape_cast %204 : vector<1x1x32xf32> to vector<1x32xf32>
    %cst_145 = arith.constant dense<0.000000e+00> : vector<32xf32>
    %206 = vector.multi_reduction <add>, %201, %cst_145 [1] : vector<32x32xf32> to vector<32xf32>
    %207 = vector.shape_cast %206 : vector<32xf32> to vector<32x1xf32>
    %cst_146 = arith.constant 3.200000e+01 : f32
    %208 = vector.broadcast %cst_146 : f32 to vector<32x1xf32>
    %209 = arith.divf %207, %208 : vector<32x1xf32>
    %210 = vector.broadcast %209 : vector<32x1xf32> to vector<32x32xf32>
    %211 = arith.subf %201, %210 : vector<32x32xf32>
    %212 = arith.mulf %211, %211 : vector<32x32xf32>
    %cst_147 = arith.constant dense<0.000000e+00> : vector<32xf32>
    %213 = vector.multi_reduction <add>, %212, %cst_147 [1] : vector<32x32xf32> to vector<32xf32>
    %214 = vector.shape_cast %213 : vector<32xf32> to vector<32x1xf32>
    %cst_148 = arith.constant 3.200000e+01 : f32
    %215 = vector.broadcast %cst_148 : f32 to vector<32x1xf32>
    %216 = arith.divf %214, %215 : vector<32x1xf32>
    %217 = vector.broadcast %209 : vector<32x1xf32> to vector<32x32xf32>
    %218 = arith.subf %201, %217 : vector<32x32xf32>
    %cst_149 = arith.constant 9.99999974E-6 : f32
    %219 = vector.broadcast %cst_149 : f32 to vector<32x1xf32>
    %220 = arith.addf %216, %219 : vector<32x1xf32>
    %221 = math.rsqrt %220 : vector<32x1xf32>
    %222 = vector.broadcast %221 : vector<32x1xf32> to vector<32x32xf32>
    %223 = arith.mulf %218, %222 : vector<32x32xf32>
    %224 = vector.broadcast %203 : vector<1x32xf32> to vector<32x32xf32>
    %225 = arith.mulf %223, %224 : vector<32x32xf32>
    %226 = vector.broadcast %205 : vector<1x32xf32> to vector<32x32xf32>
    %227 = arith.addf %225, %226 : vector<32x32xf32>
    %cst_150 = arith.constant 0.000000e+00 : f32
    %228 = vector.broadcast %cst_150 : f32 to vector<32x32xf32>
    %c1_151 = arith.constant 1 : index
    %c0_152 = arith.constant 0 : index
    %c0_153 = arith.constant 0 : index
    %c0_154 = arith.constant 0 : index
    %229 = vector.load %arg7[%c1_151, %c0_152, %c0_153, %c0_154] : memref<2x2x32x16xf32, #tpu.memory_space<vmem>>, vector<1x1x32x16xf32>
    %230 = vector.shape_cast %229 : vector<1x1x32x16xf32> to vector<32x16xf32>
    %cst_155 = arith.constant dense<0.000000e+00> : vector<32x16xf32>
    %231 = tpu.matmul %227, %230, %cst_155 {dimension_numbers = #tpu.dot_dimension_numbers<[1], [0], [0], [1], [0, 0, 1, 1], [], []>} : vector<32x32xf32>, vector<32x16xf32>, vector<32x16xf32> -> vector<32x16xf32>
    %c1_156 = arith.constant 1 : index
    %c0_157 = arith.constant 0 : index
    %c0_158 = arith.constant 0 : index
    %c0_159 = arith.constant 0 : index
    %232 = vector.load %arg10[%c1_156, %c0_157, %c0_158, %c0_159] : memref<2x2x1x16xf32, #tpu.memory_space<vmem>>, vector<1x1x1x16xf32>
    %233 = vector.shape_cast %232 : vector<1x1x1x16xf32> to vector<1x16xf32>
    %234 = vector.broadcast %233 : vector<1x16xf32> to vector<32x16xf32>
    %235 = arith.addf %231, %234 : vector<32x16xf32>
    %c1_160 = arith.constant 1 : index
    %c0_161 = arith.constant 0 : index
    %c0_162 = arith.constant 0 : index
    %c0_163 = arith.constant 0 : index
    %236 = vector.load %arg8[%c1_160, %c0_161, %c0_162, %c0_163] : memref<2x2x32x16xf32, #tpu.memory_space<vmem>>, vector<1x1x32x16xf32>
    %237 = vector.shape_cast %236 : vector<1x1x32x16xf32> to vector<32x16xf32>
    %cst_164 = arith.constant dense<0.000000e+00> : vector<32x16xf32>
    %238 = tpu.matmul %227, %237, %cst_164 {dimension_numbers = #tpu.dot_dimension_numbers<[1], [0], [0], [1], [0, 0, 1, 1], [], []>} : vector<32x32xf32>, vector<32x16xf32>, vector<32x16xf32> -> vector<32x16xf32>
    %c1_165 = arith.constant 1 : index
    %c0_166 = arith.constant 0 : index
    %c0_167 = arith.constant 0 : index
    %c0_168 = arith.constant 0 : index
    %239 = vector.load %arg11[%c1_165, %c0_166, %c0_167, %c0_168] : memref<2x2x1x16xf32, #tpu.memory_space<vmem>>, vector<1x1x1x16xf32>
    %240 = vector.shape_cast %239 : vector<1x1x1x16xf32> to vector<1x16xf32>
    %241 = vector.broadcast %240 : vector<1x16xf32> to vector<32x16xf32>
    %242 = arith.addf %238, %241 : vector<32x16xf32>
    %c1_169 = arith.constant 1 : index
    %c0_170 = arith.constant 0 : index
    %c0_171 = arith.constant 0 : index
    %c0_172 = arith.constant 0 : index
    %243 = vector.load %arg9[%c1_169, %c0_170, %c0_171, %c0_172] : memref<2x2x32x16xf32, #tpu.memory_space<vmem>>, vector<1x1x32x16xf32>
    %244 = vector.shape_cast %243 : vector<1x1x32x16xf32> to vector<32x16xf32>
    %cst_173 = arith.constant dense<0.000000e+00> : vector<32x16xf32>
    %245 = tpu.matmul %227, %244, %cst_173 {dimension_numbers = #tpu.dot_dimension_numbers<[1], [0], [0], [1], [0, 0, 1, 1], [], []>} : vector<32x32xf32>, vector<32x16xf32>, vector<32x16xf32> -> vector<32x16xf32>
    %c1_174 = arith.constant 1 : index
    %c0_175 = arith.constant 0 : index
    %c0_176 = arith.constant 0 : index
    %c0_177 = arith.constant 0 : index
    %246 = vector.load %arg12[%c1_174, %c0_175, %c0_176, %c0_177] : memref<2x2x1x16xf32, #tpu.memory_space<vmem>>, vector<1x1x1x16xf32>
    %247 = vector.shape_cast %246 : vector<1x1x1x16xf32> to vector<1x16xf32>
    %248 = vector.broadcast %247 : vector<1x16xf32> to vector<32x16xf32>
    %249 = arith.addf %245, %248 : vector<32x16xf32>
    %cst_178 = arith.constant 2.500000e-01 : f32
    %250 = vector.broadcast %cst_178 : f32 to vector<32x16xf32>
    %251 = arith.mulf %235, %250 : vector<32x16xf32>
    %252 = tpu.transpose %242, [1, 0] : vector<32x16xf32> -> vector<16x32xf32>
    %cst_179 = arith.constant dense<0.000000e+00> : vector<32x32xf32>
    %253 = tpu.matmul %251, %252, %cst_179 {dimension_numbers = #tpu.dot_dimension_numbers<[1], [0], [0], [1], [0, 0, 1, 1], [], []>} : vector<32x16xf32>, vector<16x32xf32>, vector<32x32xf32> -> vector<32x32xf32>
    %c1_180 = arith.constant 1 : index
    %c0_181 = arith.constant 0 : index
    %c0_182 = arith.constant 0 : index
    %c0_183 = arith.constant 0 : index
    %254 = vector.load %arg15[%c1_180, %c0_181, %c0_182, %c0_183] : memref<2x2x32x32xf32, #tpu.memory_space<vmem>>, vector<1x1x32x32xf32>
    %255 = vector.shape_cast %254 : vector<1x1x32x32xf32> to vector<32x32xf32>
    %256 = arith.addf %253, %255 : vector<32x32xf32>
    %cst_184 = arith.constant dense<0xFF800000> : vector<32xf32>
    %257 = vector.multi_reduction <maximumf>, %256, %cst_184 [1] : vector<32x32xf32> to vector<32xf32>
    %258 = vector.shape_cast %257 : vector<32xf32> to vector<32x1xf32>
    %259 = vector.broadcast %258 : vector<32x1xf32> to vector<32x32xf32>
    %260 = arith.subf %256, %259 : vector<32x32xf32>
    %261 = math.exp %260 : vector<32x32xf32>
    %cst_185 = arith.constant dense<0.000000e+00> : vector<32xf32>
    %262 = vector.multi_reduction <add>, %261, %cst_185 [1] : vector<32x32xf32> to vector<32xf32>
    %263 = vector.shape_cast %262 : vector<32xf32> to vector<32x1xf32>
    %264 = tpu.reciprocal %263 : vector<32x1xf32> -> vector<32x1xf32>
    %265 = vector.broadcast %264 : vector<32x1xf32> to vector<32x32xf32>
    %266 = arith.mulf %261, %265 : vector<32x32xf32>
    %cst_186 = arith.constant dense<0.000000e+00> : vector<32x16xf32>
    %267 = tpu.matmul %266, %249, %cst_186 {dimension_numbers = #tpu.dot_dimension_numbers<[1], [0], [0], [1], [0, 0, 1, 1], [], []>} : vector<32x32xf32>, vector<32x16xf32>, vector<32x16xf32> -> vector<32x16xf32>
    %c1_187 = arith.constant 1 : index
    %c0_188 = arith.constant 0 : index
    %c0_189 = arith.constant 0 : index
    %c0_190 = arith.constant 0 : index
    %268 = vector.load %arg13[%c1_187, %c0_188, %c0_189, %c0_190] : memref<2x2x16x32xf32, #tpu.memory_space<vmem>>, vector<1x1x16x32xf32>
    %269 = vector.shape_cast %268 : vector<1x1x16x32xf32> to vector<16x32xf32>
    %cst_191 = arith.constant dense<0.000000e+00> : vector<32x32xf32>
    %270 = tpu.matmul %267, %269, %cst_191 {dimension_numbers = #tpu.dot_dimension_numbers<[1], [0], [0], [1], [0, 0, 1, 1], [], []>} : vector<32x16xf32>, vector<16x32xf32>, vector<32x32xf32> -> vector<32x32xf32>
    %271 = arith.addf %228, %270 : vector<32x32xf32>
    %c1_192 = arith.constant 1 : index
    %c1_193 = arith.constant 1 : index
    %c0_194 = arith.constant 0 : index
    %c0_195 = arith.constant 0 : index
    %272 = vector.load %arg7[%c1_192, %c1_193, %c0_194, %c0_195] : memref<2x2x32x16xf32, #tpu.memory_space<vmem>>, vector<1x1x32x16xf32>
    %273 = vector.shape_cast %272 : vector<1x1x32x16xf32> to vector<32x16xf32>
    %cst_196 = arith.constant dense<0.000000e+00> : vector<32x16xf32>
    %274 = tpu.matmul %227, %273, %cst_196 {dimension_numbers = #tpu.dot_dimension_numbers<[1], [0], [0], [1], [0, 0, 1, 1], [], []>} : vector<32x32xf32>, vector<32x16xf32>, vector<32x16xf32> -> vector<32x16xf32>
    %c1_197 = arith.constant 1 : index
    %c1_198 = arith.constant 1 : index
    %c0_199 = arith.constant 0 : index
    %c0_200 = arith.constant 0 : index
    %275 = vector.load %arg10[%c1_197, %c1_198, %c0_199, %c0_200] : memref<2x2x1x16xf32, #tpu.memory_space<vmem>>, vector<1x1x1x16xf32>
    %276 = vector.shape_cast %275 : vector<1x1x1x16xf32> to vector<1x16xf32>
    %277 = vector.broadcast %276 : vector<1x16xf32> to vector<32x16xf32>
    %278 = arith.addf %274, %277 : vector<32x16xf32>
    %c1_201 = arith.constant 1 : index
    %c1_202 = arith.constant 1 : index
    %c0_203 = arith.constant 0 : index
    %c0_204 = arith.constant 0 : index
    %279 = vector.load %arg8[%c1_201, %c1_202, %c0_203, %c0_204] : memref<2x2x32x16xf32, #tpu.memory_space<vmem>>, vector<1x1x32x16xf32>
    %280 = vector.shape_cast %279 : vector<1x1x32x16xf32> to vector<32x16xf32>
    %cst_205 = arith.constant dense<0.000000e+00> : vector<32x16xf32>
    %281 = tpu.matmul %227, %280, %cst_205 {dimension_numbers = #tpu.dot_dimension_numbers<[1], [0], [0], [1], [0, 0, 1, 1], [], []>} : vector<32x32xf32>, vector<32x16xf32>, vector<32x16xf32> -> vector<32x16xf32>
    %c1_206 = arith.constant 1 : index
    %c1_207 = arith.constant 1 : index
    %c0_208 = arith.constant 0 : index
    %c0_209 = arith.constant 0 : index
    %282 = vector.load %arg11[%c1_206, %c1_207, %c0_208, %c0_209] : memref<2x2x1x16xf32, #tpu.memory_space<vmem>>, vector<1x1x1x16xf32>
    %283 = vector.shape_cast %282 : vector<1x1x1x16xf32> to vector<1x16xf32>
    %284 = vector.broadcast %283 : vector<1x16xf32> to vector<32x16xf32>
    %285 = arith.addf %281, %284 : vector<32x16xf32>
    %c1_210 = arith.constant 1 : index
    %c1_211 = arith.constant 1 : index
    %c0_212 = arith.constant 0 : index
    %c0_213 = arith.constant 0 : index
    %286 = vector.load %arg9[%c1_210, %c1_211, %c0_212, %c0_213] : memref<2x2x32x16xf32, #tpu.memory_space<vmem>>, vector<1x1x32x16xf32>
    %287 = vector.shape_cast %286 : vector<1x1x32x16xf32> to vector<32x16xf32>
    %cst_214 = arith.constant dense<0.000000e+00> : vector<32x16xf32>
    %288 = tpu.matmul %227, %287, %cst_214 {dimension_numbers = #tpu.dot_dimension_numbers<[1], [0], [0], [1], [0, 0, 1, 1], [], []>} : vector<32x32xf32>, vector<32x16xf32>, vector<32x16xf32> -> vector<32x16xf32>
    %c1_215 = arith.constant 1 : index
    %c1_216 = arith.constant 1 : index
    %c0_217 = arith.constant 0 : index
    %c0_218 = arith.constant 0 : index
    %289 = vector.load %arg12[%c1_215, %c1_216, %c0_217, %c0_218] : memref<2x2x1x16xf32, #tpu.memory_space<vmem>>, vector<1x1x1x16xf32>
    %290 = vector.shape_cast %289 : vector<1x1x1x16xf32> to vector<1x16xf32>
    %291 = vector.broadcast %290 : vector<1x16xf32> to vector<32x16xf32>
    %292 = arith.addf %288, %291 : vector<32x16xf32>
    %cst_219 = arith.constant 2.500000e-01 : f32
    %293 = vector.broadcast %cst_219 : f32 to vector<32x16xf32>
    %294 = arith.mulf %278, %293 : vector<32x16xf32>
    %295 = tpu.transpose %285, [1, 0] : vector<32x16xf32> -> vector<16x32xf32>
    %cst_220 = arith.constant dense<0.000000e+00> : vector<32x32xf32>
    %296 = tpu.matmul %294, %295, %cst_220 {dimension_numbers = #tpu.dot_dimension_numbers<[1], [0], [0], [1], [0, 0, 1, 1], [], []>} : vector<32x16xf32>, vector<16x32xf32>, vector<32x32xf32> -> vector<32x32xf32>
    %c1_221 = arith.constant 1 : index
    %c1_222 = arith.constant 1 : index
    %c0_223 = arith.constant 0 : index
    %c0_224 = arith.constant 0 : index
    %297 = vector.load %arg15[%c1_221, %c1_222, %c0_223, %c0_224] : memref<2x2x32x32xf32, #tpu.memory_space<vmem>>, vector<1x1x32x32xf32>
    %298 = vector.shape_cast %297 : vector<1x1x32x32xf32> to vector<32x32xf32>
    %299 = arith.addf %296, %298 : vector<32x32xf32>
    %cst_225 = arith.constant dense<0xFF800000> : vector<32xf32>
    %300 = vector.multi_reduction <maximumf>, %299, %cst_225 [1] : vector<32x32xf32> to vector<32xf32>
    %301 = vector.shape_cast %300 : vector<32xf32> to vector<32x1xf32>
    %302 = vector.broadcast %301 : vector<32x1xf32> to vector<32x32xf32>
    %303 = arith.subf %299, %302 : vector<32x32xf32>
    %304 = math.exp %303 : vector<32x32xf32>
    %cst_226 = arith.constant dense<0.000000e+00> : vector<32xf32>
    %305 = vector.multi_reduction <add>, %304, %cst_226 [1] : vector<32x32xf32> to vector<32xf32>
    %306 = vector.shape_cast %305 : vector<32xf32> to vector<32x1xf32>
    %307 = tpu.reciprocal %306 : vector<32x1xf32> -> vector<32x1xf32>
    %308 = vector.broadcast %307 : vector<32x1xf32> to vector<32x32xf32>
    %309 = arith.mulf %304, %308 : vector<32x32xf32>
    %cst_227 = arith.constant dense<0.000000e+00> : vector<32x16xf32>
    %310 = tpu.matmul %309, %292, %cst_227 {dimension_numbers = #tpu.dot_dimension_numbers<[1], [0], [0], [1], [0, 0, 1, 1], [], []>} : vector<32x32xf32>, vector<32x16xf32>, vector<32x16xf32> -> vector<32x16xf32>
    %c1_228 = arith.constant 1 : index
    %c1_229 = arith.constant 1 : index
    %c0_230 = arith.constant 0 : index
    %c0_231 = arith.constant 0 : index
    %311 = vector.load %arg13[%c1_228, %c1_229, %c0_230, %c0_231] : memref<2x2x16x32xf32, #tpu.memory_space<vmem>>, vector<1x1x16x32xf32>
    %312 = vector.shape_cast %311 : vector<1x1x16x32xf32> to vector<16x32xf32>
    %cst_232 = arith.constant dense<0.000000e+00> : vector<32x32xf32>
    %313 = tpu.matmul %310, %312, %cst_232 {dimension_numbers = #tpu.dot_dimension_numbers<[1], [0], [0], [1], [0, 0, 1, 1], [], []>} : vector<32x16xf32>, vector<16x32xf32>, vector<32x32xf32> -> vector<32x32xf32>
    %314 = arith.addf %271, %313 : vector<32x32xf32>
    %315 = arith.addf %201, %314 : vector<32x32xf32>
    %c1_233 = arith.constant 1 : index
    %c0_234 = arith.constant 0 : index
    %c0_235 = arith.constant 0 : index
    %316 = vector.load %arg14[%c1_233, %c0_234, %c0_235] : memref<2x1x32xf32, #tpu.memory_space<vmem>>, vector<1x1x32xf32>
    %317 = vector.shape_cast %316 : vector<1x1x32xf32> to vector<1x32xf32>
    %318 = vector.broadcast %317 : vector<1x32xf32> to vector<32x32xf32>
    %319 = arith.addf %315, %318 : vector<32x32xf32>
    %c1_236 = arith.constant 1 : index
    %c0_237 = arith.constant 0 : index
    %c0_238 = arith.constant 0 : index
    %320 = vector.load %arg16[%c1_236, %c0_237, %c0_238] : memref<2x1x32xf32, #tpu.memory_space<vmem>>, vector<1x1x32xf32>
    %321 = vector.shape_cast %320 : vector<1x1x32xf32> to vector<1x32xf32>
    %c1_239 = arith.constant 1 : index
    %c0_240 = arith.constant 0 : index
    %c0_241 = arith.constant 0 : index
    %322 = vector.load %arg17[%c1_239, %c0_240, %c0_241] : memref<2x1x32xf32, #tpu.memory_space<vmem>>, vector<1x1x32xf32>
    %323 = vector.shape_cast %322 : vector<1x1x32xf32> to vector<1x32xf32>
    %cst_242 = arith.constant dense<0.000000e+00> : vector<32xf32>
    %324 = vector.multi_reduction <add>, %319, %cst_242 [1] : vector<32x32xf32> to vector<32xf32>
    %325 = vector.shape_cast %324 : vector<32xf32> to vector<32x1xf32>
    %cst_243 = arith.constant 3.200000e+01 : f32
    %326 = vector.broadcast %cst_243 : f32 to vector<32x1xf32>
    %327 = arith.divf %325, %326 : vector<32x1xf32>
    %328 = vector.broadcast %327 : vector<32x1xf32> to vector<32x32xf32>
    %329 = arith.subf %319, %328 : vector<32x32xf32>
    %330 = arith.mulf %329, %329 : vector<32x32xf32>
    %cst_244 = arith.constant dense<0.000000e+00> : vector<32xf32>
    %331 = vector.multi_reduction <add>, %330, %cst_244 [1] : vector<32x32xf32> to vector<32xf32>
    %332 = vector.shape_cast %331 : vector<32xf32> to vector<32x1xf32>
    %cst_245 = arith.constant 3.200000e+01 : f32
    %333 = vector.broadcast %cst_245 : f32 to vector<32x1xf32>
    %334 = arith.divf %332, %333 : vector<32x1xf32>
    %335 = vector.broadcast %327 : vector<32x1xf32> to vector<32x32xf32>
    %336 = arith.subf %319, %335 : vector<32x32xf32>
    %cst_246 = arith.constant 9.99999974E-6 : f32
    %337 = vector.broadcast %cst_246 : f32 to vector<32x1xf32>
    %338 = arith.addf %334, %337 : vector<32x1xf32>
    %339 = math.rsqrt %338 : vector<32x1xf32>
    %340 = vector.broadcast %339 : vector<32x1xf32> to vector<32x32xf32>
    %341 = arith.mulf %336, %340 : vector<32x32xf32>
    %342 = vector.broadcast %321 : vector<1x32xf32> to vector<32x32xf32>
    %343 = arith.mulf %341, %342 : vector<32x32xf32>
    %344 = vector.broadcast %323 : vector<1x32xf32> to vector<32x32xf32>
    %345 = arith.addf %343, %344 : vector<32x32xf32>
    %c1_247 = arith.constant 1 : index
    %c0_248 = arith.constant 0 : index
    %c0_249 = arith.constant 0 : index
    %346 = vector.load %arg18[%c1_247, %c0_248, %c0_249] : memref<2x32x128xf32, #tpu.memory_space<vmem>>, vector<1x32x128xf32>
    %347 = vector.shape_cast %346 : vector<1x32x128xf32> to vector<32x128xf32>
    %cst_250 = arith.constant dense<0.000000e+00> : vector<32x128xf32>
    %348 = tpu.matmul %345, %347, %cst_250 {dimension_numbers = #tpu.dot_dimension_numbers<[1], [0], [0], [1], [0, 0, 1, 1], [], []>} : vector<32x32xf32>, vector<32x128xf32>, vector<32x128xf32> -> vector<32x128xf32>
    %c1_251 = arith.constant 1 : index
    %c0_252 = arith.constant 0 : index
    %c0_253 = arith.constant 0 : index
    %349 = vector.load %arg19[%c1_251, %c0_252, %c0_253] : memref<2x1x128xf32, #tpu.memory_space<vmem>>, vector<1x1x128xf32>
    %350 = vector.shape_cast %349 : vector<1x1x128xf32> to vector<1x128xf32>
    %351 = vector.broadcast %350 : vector<1x128xf32> to vector<32x128xf32>
    %352 = arith.addf %348, %351 : vector<32x128xf32>
    %353 = arith.mulf %352, %352 : vector<32x128xf32>
    %354 = arith.mulf %352, %353 : vector<32x128xf32>
    %cst_254 = arith.constant 4.471500e-02 : f32
    %355 = vector.broadcast %cst_254 : f32 to vector<32x128xf32>
    %356 = arith.mulf %355, %354 : vector<32x128xf32>
    %357 = arith.addf %352, %356 : vector<32x128xf32>
    %cst_255 = arith.constant 0.797884583 : f32
    %358 = vector.broadcast %cst_255 : f32 to vector<32x128xf32>
    %359 = arith.mulf %358, %357 : vector<32x128xf32>
    %360 = math.tanh %359 : vector<32x128xf32>
    %cst_256 = arith.constant 1.000000e+00 : f32
    %361 = vector.broadcast %cst_256 : f32 to vector<32x128xf32>
    %362 = arith.addf %361, %360 : vector<32x128xf32>
    %cst_257 = arith.constant 5.000000e-01 : f32
    %363 = vector.broadcast %cst_257 : f32 to vector<32x128xf32>
    %364 = arith.mulf %363, %362 : vector<32x128xf32>
    %365 = arith.mulf %352, %364 : vector<32x128xf32>
    %c1_258 = arith.constant 1 : index
    %c0_259 = arith.constant 0 : index
    %c0_260 = arith.constant 0 : index
    %366 = vector.load %arg20[%c1_258, %c0_259, %c0_260] : memref<2x128x32xf32, #tpu.memory_space<vmem>>, vector<1x128x32xf32>
    %367 = vector.shape_cast %366 : vector<1x128x32xf32> to vector<128x32xf32>
    %cst_261 = arith.constant dense<0.000000e+00> : vector<32x32xf32>
    %368 = tpu.matmul %365, %367, %cst_261 {dimension_numbers = #tpu.dot_dimension_numbers<[1], [0], [0], [1], [0, 0, 1, 1], [], []>} : vector<32x128xf32>, vector<128x32xf32>, vector<32x32xf32> -> vector<32x32xf32>
    %c1_262 = arith.constant 1 : index
    %c0_263 = arith.constant 0 : index
    %c0_264 = arith.constant 0 : index
    %369 = vector.load %arg21[%c1_262, %c0_263, %c0_264] : memref<2x1x32xf32, #tpu.memory_space<vmem>>, vector<1x1x32xf32>
    %370 = vector.shape_cast %369 : vector<1x1x32xf32> to vector<1x32xf32>
    %371 = vector.broadcast %370 : vector<1x32xf32> to vector<32x32xf32>
    %372 = arith.addf %368, %371 : vector<32x32xf32>
    %373 = arith.addf %319, %372 : vector<32x32xf32>
    %c0_265 = arith.constant 0 : index
    %c0_266 = arith.constant 0 : index
    %374 = vector.load %arg22[%c0_265, %c0_266] : memref<1x32xf32, #tpu.memory_space<vmem>>, vector<1x32xf32>
    %c0_267 = arith.constant 0 : index
    %c0_268 = arith.constant 0 : index
    %375 = vector.load %arg23[%c0_267, %c0_268] : memref<1x32xf32, #tpu.memory_space<vmem>>, vector<1x32xf32>
    %cst_269 = arith.constant dense<0.000000e+00> : vector<32xf32>
    %376 = vector.multi_reduction <add>, %373, %cst_269 [1] : vector<32x32xf32> to vector<32xf32>
    %377 = vector.shape_cast %376 : vector<32xf32> to vector<32x1xf32>
    %cst_270 = arith.constant 3.200000e+01 : f32
    %378 = vector.broadcast %cst_270 : f32 to vector<32x1xf32>
    %379 = arith.divf %377, %378 : vector<32x1xf32>
    %380 = vector.broadcast %379 : vector<32x1xf32> to vector<32x32xf32>
    %381 = arith.subf %373, %380 : vector<32x32xf32>
    %382 = arith.mulf %381, %381 : vector<32x32xf32>
    %cst_271 = arith.constant dense<0.000000e+00> : vector<32xf32>
    %383 = vector.multi_reduction <add>, %382, %cst_271 [1] : vector<32x32xf32> to vector<32xf32>
    %384 = vector.shape_cast %383 : vector<32xf32> to vector<32x1xf32>
    %cst_272 = arith.constant 3.200000e+01 : f32
    %385 = vector.broadcast %cst_272 : f32 to vector<32x1xf32>
    %386 = arith.divf %384, %385 : vector<32x1xf32>
    %387 = vector.broadcast %379 : vector<32x1xf32> to vector<32x32xf32>
    %388 = arith.subf %373, %387 : vector<32x32xf32>
    %cst_273 = arith.constant 9.99999974E-6 : f32
    %389 = vector.broadcast %cst_273 : f32 to vector<32x1xf32>
    %390 = arith.addf %386, %389 : vector<32x1xf32>
    %391 = math.rsqrt %390 : vector<32x1xf32>
    %392 = vector.broadcast %391 : vector<32x1xf32> to vector<32x32xf32>
    %393 = arith.mulf %388, %392 : vector<32x32xf32>
    %394 = vector.broadcast %374 : vector<1x32xf32> to vector<32x32xf32>
    %395 = arith.mulf %393, %394 : vector<32x32xf32>
    %396 = vector.broadcast %375 : vector<1x32xf32> to vector<32x32xf32>
    %397 = arith.addf %395, %396 : vector<32x32xf32>
    %c0_274 = arith.constant 0 : index
    %c0_275 = arith.constant 0 : index
    %398 = vector.load %arg24[%c0_274, %c0_275] : memref<32x64xf32, #tpu.memory_space<vmem>>, vector<32x64xf32>
    %cst_276 = arith.constant dense<0.000000e+00> : vector<32x64xf32>
    %399 = tpu.matmul %397, %398, %cst_276 {dimension_numbers = #tpu.dot_dimension_numbers<[1], [0], [0], [1], [0, 0, 1, 1], [], []>} : vector<32x32xf32>, vector<32x64xf32>, vector<32x64xf32> -> vector<32x64xf32>
    %c0_277 = arith.constant 0 : index
    %c0_278 = arith.constant 0 : index
    %400 = vector.load %arg25[%c0_277, %c0_278] : memref<1x64xf32, #tpu.memory_space<vmem>>, vector<1x64xf32>
    %401 = vector.broadcast %400 : vector<1x64xf32> to vector<32x64xf32>
    %402 = arith.addf %399, %401 : vector<32x64xf32>
    %c0_279 = arith.constant 0 : index
    %c0_280 = arith.constant 0 : index
    %403 = vector.load %arg26[%c0_279, %c0_280] : memref<32x64xf32, #tpu.memory_space<vmem>>, vector<32x64xf32>
    tpu.vector_store %arg26[%c0_279, %c0_280], %402 {strides = array<i32>} : memref<32x64xf32, #tpu.memory_space<vmem>>, vector<32x64xf32>,
    return
  }
}

</mosaic_0001>

<llo_original>
// kernel: swin_unet_forward.1
$region0: #{swin_unet_forward.1}
  #allocation0 [shape = 'u32[]', space=smem, size = 0x4, offset = 0x4, fixed_abs, tag = 'smem constant byte address 0x4 - core index']
  #allocation1 [shape = 'u32[72,128]{1,0:T(1,128)}', space=vmem, size = 0x9000, scoped, tag = 'internal scratch']
  %s0 = inlined_call_operand.vmem [shape: f32[32,48], index: 0, kind: input, shape index: {}]
  %s1 = inlined_call_operand.vmem [shape: f32[48,32], index: 1, kind: input, shape index: {}]
  %s2 = inlined_call_operand.vmem [shape: f32[1,32], index: 2, kind: input, shape index: {}]
  %s3 = inlined_call_operand.vmem [shape: f32[1,32], index: 3, kind: input, shape index: {}]
  %s4 = inlined_call_operand.vmem [shape: f32[1,32], index: 4, kind: input, shape index: {}]
  %s5 = inlined_call_operand.vmem [shape: f32[2,1,32], index: 5, kind: input, shape index: {}]
  %s6 = inlined_call_operand.vmem [shape: f32[2,1,32], index: 6, kind: input, shape index: {}]
  %s7 = inlined_call_operand.vmem [shape: f32[2,2,32,16], index: 7, kind: input, shape index: {}]
  %s8 = inlined_call_operand.vmem [shape: f32[2,2,32,16], index: 8, kind: input, shape index: {}]
  %s9 = inlined_call_operand.vmem [shape: f32[2,2,32,16], index: 9, kind: input, shape index: {}]
  %s10 = inlined_call_operand.vmem [shape: f32[2,2,1,16], index: 10, kind: input, shape index: {}]
  %s11 = inlined_call_operand.vmem [shape: f32[2,2,1,16], index: 11, kind: input, shape index: {}]
  %s12 = inlined_call_operand.vmem [shape: f32[2,2,1,16], index: 12, kind: input, shape index: {}]
  %s13 = inlined_call_operand.vmem [shape: f32[2,2,16,32], index: 13, kind: input, shape index: {}]
  %s14 = inlined_call_operand.vmem [shape: f32[2,1,32], index: 14, kind: input, shape index: {}]
  %s15 = inlined_call_operand.vmem [shape: f32[2,2,32,32], index: 15, kind: input, shape index: {}]
  %s16 = inlined_call_operand.vmem [shape: f32[2,1,32], index: 16, kind: input, shape index: {}]
  %s17 = inlined_call_operand.vmem [shape: f32[2,1,32], index: 17, kind: input, shape index: {}]
  %s18 = inlined_call_operand.vmem [shape: f32[2,32,128], index: 18, kind: input, shape index: {}]
  %s19 = inlined_call_operand.vmem [shape: f32[2,1,128], index: 19, kind: input, shape index: {}]
  %s20 = inlined_call_operand.vmem [shape: f32[2,128,32], index: 20, kind: input, shape index: {}]
  %s21 = inlined_call_operand.vmem [shape: f32[2,1,32], index: 21, kind: input, shape index: {}]
  %s22 = inlined_call_operand.vmem [shape: f32[1,32], index: 22, kind: input, shape index: {}]
  %s23 = inlined_call_operand.vmem [shape: f32[1,32], index: 23, kind: input, shape index: {}]
  %s24 = inlined_call_operand.vmem [shape: f32[32,64], index: 24, kind: input, shape index: {}]
  %s25 = inlined_call_operand.vmem [shape: f32[1,64], index: 25, kind: input, shape index: {}]
  %s26 = inlined_call_operand.vmem [shape: f32[32,64], index: 26, kind: output, shape index: {}]
  %s27 = sld [smem:[#allocation0]]
  $region114: #{swin_unet_forward.1} parent=0
    _
  %s29 = ssub.s32 1, %s27
  %s30 = scalar_select 0, %s29, %s27
  // Predicated region
  $region2: #{swin_unet_forward.1} parent=0 // pred_check
    _
  $region3: #{swin_unet_forward.1} parent=0 // pred_check_branch
    %32 = sbr.rel (0) target = $region5
  $region4: #{swin_unet_forward.1} parent=0 // pred_region
    _
  $region5: #{swin_unet_forward.1} parent=0 // pred_fallthru
    _
  // Predicated region
  $region6: #{swin_unet_forward.1} parent=0 // pred_check
    _
  $region7: #{swin_unet_forward.1} parent=0 // pred_check_branch
    %34 = sbr.rel (0) target = $region9
  $region8: #{swin_unet_forward.1} parent=0 // pred_region
    _
  $region9: #{swin_unet_forward.1} parent=0 // pred_fallthru
    _
  // Predicated region
  $region10: #{swin_unet_forward.1} parent=0 // pred_check
    _
  $region11: #{swin_unet_forward.1} parent=0 // pred_check_branch
    %36 = sbr.rel (0) target = $region13
  $region12: #{swin_unet_forward.1} parent=0 // pred_region
    _
  $region13: #{swin_unet_forward.1} parent=0 // pred_fallthru
    _
  // Predicated region
  $region14: #{swin_unet_forward.1} parent=0 // pred_check
    _
  $region15: #{swin_unet_forward.1} parent=0 // pred_check_branch
    %38 = sbr.rel (0) target = $region17
  $region16: #{swin_unet_forward.1} parent=0 // pred_region
    _
  $region17: #{swin_unet_forward.1} parent=0 // pred_fallthru
    _
  // Predicated region
  $region18: #{swin_unet_forward.1} parent=0 // pred_check
    _
  $region19: #{swin_unet_forward.1} parent=0 // pred_check_branch
    %40 = sbr.rel (0) target = $region21
  $region20: #{swin_unet_forward.1} parent=0 // pred_region
    _
  $region21: #{swin_unet_forward.1} parent=0 // pred_fallthru
    _
  // Predicated region
  $region22: #{swin_unet_forward.1} parent=0 // pred_check
    _
  $region23: #{swin_unet_forward.1} parent=0 // pred_check_branch
    %42 = sbr.rel (0) target = $region25
  $region24: #{swin_unet_forward.1} parent=0 // pred_region
    _
  $region25: #{swin_unet_forward.1} parent=0 // pred_fallthru
    _
  // Predicated region
  $region26: #{swin_unet_forward.1} parent=0 // pred_check
    _
  $region27: #{swin_unet_forward.1} parent=0 // pred_check_branch
    %44 = sbr.rel (0) target = $region29
  $region28: #{swin_unet_forward.1} parent=0 // pred_region
    _
  $region29: #{swin_unet_forward.1} parent=0 // pred_fallthru
    _
  // Predicated region
  $region30: #{swin_unet_forward.1} parent=0 // pred_check
    _
  $region31: #{swin_unet_forward.1} parent=0 // pred_check_branch
    %46 = sbr.rel (0) target = $region33
  $region32: #{swin_unet_forward.1} parent=0 // pred_region
    _
  $region33: #{swin_unet_forward.1} parent=0 // pred_fallthru
    _
  // Predicated region
  $region34: #{swin_unet_forward.1} parent=0 // pred_check
    _
  $region35: #{swin_unet_forward.1} parent=0 // pred_check_branch
    %48 = sbr.rel (0) target = $region37
  $region36: #{swin_unet_forward.1} parent=0 // pred_region
    _
  $region37: #{swin_unet_forward.1} parent=0 // pred_fallthru
    _
  // Predicated region
  $region38: #{swin_unet_forward.1} parent=0 // pred_check
    _
  $region39: #{swin_unet_forward.1} parent=0 // pred_check_branch
    %50 = sbr.rel (0) target = $region41
  $region40: #{swin_unet_forward.1} parent=0 // pred_region
    _
  $region41: #{swin_unet_forward.1} parent=0 // pred_fallthru
    _
  // Predicated region
  $region42: #{swin_unet_forward.1} parent=0 // pred_check
    _
  $region43: #{swin_unet_forward.1} parent=0 // pred_check_branch
    %52 = sbr.rel (0) target = $region45
  $region44: #{swin_unet_forward.1} parent=0 // pred_region
    _
  $region45: #{swin_unet_forward.1} parent=0 // pred_fallthru
    _
  // Predicated region
  $region46: #{swin_unet_forward.1} parent=0 // pred_check
    _
  $region47: #{swin_unet_forward.1} parent=0 // pred_check_branch
    %54 = sbr.rel (0) target = $region49
  $region48: #{swin_unet_forward.1} parent=0 // pred_region
    _
  $region49: #{swin_unet_forward.1} parent=0 // pred_fallthru
    _
  // Predicated region
  $region50: #{swin_unet_forward.1} parent=0 // pred_check
    _
  $region51: #{swin_unet_forward.1} parent=0 // pred_check_branch
    %56 = sbr.rel (0) target = $region53
  $region52: #{swin_unet_forward.1} parent=0 // pred_region
    _
  $region53: #{swin_unet_forward.1} parent=0 // pred_fallthru
    _
  // Predicated region
  $region54: #{swin_unet_forward.1} parent=0 // pred_check
    _
  $region55: #{swin_unet_forward.1} parent=0 // pred_check_branch
    %58 = sbr.rel (0) target = $region57
  $region56: #{swin_unet_forward.1} parent=0 // pred_region
    _
  $region57: #{swin_unet_forward.1} parent=0 // pred_fallthru
    _
  // Predicated region
  $region58: #{swin_unet_forward.1} parent=0 // pred_check
    _
  $region59: #{swin_unet_forward.1} parent=0 // pred_check_branch
    %60 = sbr.rel (0) target = $region61
  $region60: #{swin_unet_forward.1} parent=0 // pred_region
    _
  $region61: #{swin_unet_forward.1} parent=0 // pred_fallthru
    _
  // Predicated region
  $region62: #{swin_unet_forward.1} parent=0 // pred_check
    _
  $region63: #{swin_unet_forward.1} parent=0 // pred_check_branch
    %62 = sbr.rel (0) target = $region65
  $region64: #{swin_unet_forward.1} parent=0 // pred_region
    _
  $region65: #{swin_unet_forward.1} parent=0 // pred_fallthru
    _
  // Predicated region
  $region66: #{swin_unet_forward.1} parent=0 // pred_check
    _
  $region67: #{swin_unet_forward.1} parent=0 // pred_check_branch
    %64 = sbr.rel (0) target = $region69
  $region68: #{swin_unet_forward.1} parent=0 // pred_region
    _
  $region69: #{swin_unet_forward.1} parent=0 // pred_fallthru
    _
  // Predicated region
  $region70: #{swin_unet_forward.1} parent=0 // pred_check
    _
  $region71: #{swin_unet_forward.1} parent=0 // pred_check_branch
    %66 = sbr.rel (0) target = $region73
  $region72: #{swin_unet_forward.1} parent=0 // pred_region
    _
  $region73: #{swin_unet_forward.1} parent=0 // pred_fallthru
    _
  // Predicated region
  $region74: #{swin_unet_forward.1} parent=0 // pred_check
    _
  $region75: #{swin_unet_forward.1} parent=0 // pred_check_branch
    %68 = sbr.rel (0) target = $region77
  $region76: #{swin_unet_forward.1} parent=0 // pred_region
    _
  $region77: #{swin_unet_forward.1} parent=0 // pred_fallthru
    _
  // Predicated region
  $region78: #{swin_unet_forward.1} parent=0 // pred_check
    _
  $region79: #{swin_unet_forward.1} parent=0 // pred_check_branch
    %70 = sbr.rel (0) target = $region81
  $region80: #{swin_unet_forward.1} parent=0 // pred_region
    _
  $region81: #{swin_unet_forward.1} parent=0 // pred_fallthru
    _
  // Predicated region
  $region82: #{swin_unet_forward.1} parent=0 // pred_check
    _
  $region83: #{swin_unet_forward.1} parent=0 // pred_check_branch
    %72 = sbr.rel (0) target = $region85
  $region84: #{swin_unet_forward.1} parent=0 // pred_region
    _
  $region85: #{swin_unet_forward.1} parent=0 // pred_fallthru
    _
  // Predicated region
  $region86: #{swin_unet_forward.1} parent=0 // pred_check
    _
  $region87: #{swin_unet_forward.1} parent=0 // pred_check_branch
    %74 = sbr.rel (0) target = $region89
  $region88: #{swin_unet_forward.1} parent=0 // pred_region
    _
  $region89: #{swin_unet_forward.1} parent=0 // pred_fallthru
    _
  // Predicated region
  $region90: #{swin_unet_forward.1} parent=0 // pred_check
    _
  $region91: #{swin_unet_forward.1} parent=0 // pred_check_branch
    %76 = sbr.rel (0) target = $region93
  $region92: #{swin_unet_forward.1} parent=0 // pred_region
    _
  $region93: #{swin_unet_forward.1} parent=0 // pred_fallthru
    _
  // Predicated region
  $region94: #{swin_unet_forward.1} parent=0 // pred_check
    _
  $region95: #{swin_unet_forward.1} parent=0 // pred_check_branch
    %78 = sbr.rel (0) target = $region97
  $region96: #{swin_unet_forward.1} parent=0 // pred_region
    _
  $region97: #{swin_unet_forward.1} parent=0 // pred_fallthru
    _
  // Predicated region
  $region98: #{swin_unet_forward.1} parent=0 // pred_check
    _
  $region99: #{swin_unet_forward.1} parent=0 // pred_check_branch
    %80 = sbr.rel (0) target = $region101
  $region100: #{swin_unet_forward.1} parent=0 // pred_region
    _
  $region101: #{swin_unet_forward.1} parent=0 // pred_fallthru
    _
  // Predicated region
  $region102: #{swin_unet_forward.1} parent=0 // pred_check
    _
  $region103: #{swin_unet_forward.1} parent=0 // pred_check_branch
    %82 = sbr.rel (0) target = $region105
  $region104: #{swin_unet_forward.1} parent=0 // pred_region
    _
  $region105: #{swin_unet_forward.1} parent=0 // pred_fallthru
    _
  %v83 = vld [vmem:[%s0] sm:$0xff]
  %v84 = vld [vmem:[%s0 + $0x8] sm:$0xff]
  %v85 = vld [vmem:[%s0 + $0x10] sm:$0xff]
  %v86 = vld [vmem:[%s0 + $0x18] sm:$0xff]
  %v87 = vld [vmem:[%s1] sm:$0xff]
  %v88 = vld [vmem:[%s1 + $0x8] sm:$0xff]
  %v89 = vld [vmem:[%s1 + $0x10] sm:$0xff]
  %v90 = vld [vmem:[%s1 + $0x18] sm:$0xff]
  %v91 = vld [vmem:[%s1 + $0x20] sm:$0xff]
  %v92 = vld [vmem:[%s1 + $0x28] sm:$0xff]
  %v93 = vld [vmem:[%s2] sm:$0x1]
  %v95 = vperm.slane %v93, 0
  %vm97 = vcmask 392192
  %v99 = vsel %vm97, %v83, 0
  %v102 = vsel %vm97, %v84, 0
  %v105 = vsel %vm97, %v85, 0
  %v108 = vsel %vm97, %v86, 0
  %110 = vmatpush.msra.mxu0 0.0
  %111 = vmatpush.msra.mxu0 0.0
  %112 = vmatpush.msra.mxu0 0.0
  %113 = vmatpush.msra.mxu0 0.0
  %114 = vmatpush.msra.mxu0 0.0
  %115 = vmatpush.msra.mxu0 0.0
  %116 = vmatpush.msra.mxu0 0.0
  %117 = vmatpush.msra.mxu0 0.0
  %118 = vmatpush.msra.mxu0 0.0
  %119 = vmatpush.msra.mxu0 0.0
  %120 = vmatpush.msra.mxu0 %v92
  %121 = vmatpush.msra.mxu0 %v91
  %122 = vmatpush.msra.mxu0 %v90
  %123 = vmatpush.msra.mxu0 %v89
  %124 = vmatpush.msra.mxu0 %v88
  %125 = vmatpush.msra.mxu0 %v87
  %126 = vmatmul.f32.gmra.mxu0 %v99
  %v127 = vpop.f32.mrf.mxu0
  %v128 = vadd.f32 %v95, %v127
  %129 = vmatmul.f32.gmra.mxu0 %v102
  %v130 = vpop.f32.mrf.mxu0
  %v131 = vadd.f32 %v95, %v130
  %132 = vmatmul.f32.gmra.mxu0 %v105
  %v133 = vpop.f32.mrf.mxu0
  %v134 = vadd.f32 %v95, %v133
  %135 = vmatmul.f32.gmra.mxu0 %v108
  %v136 = vpop.f32.mrf.mxu0
  %v137 = vadd.f32 %v95, %v136
  %138 = vdwg.mxu0
  %v139 = vld [vmem:[%s3] sm:$0x1]
  %v140 = vld [vmem:[%s4] sm:$0x1]
  %vm141 = vcmask 261120
  %v142 = vsel %vm141, %v128, 0.0
  %143 = vadd.xlane.f32.xlu0 %v142
  %v144 = vpop.xlane.xlu0 %143
  %v145 = vsel %vm141, %v131, 0.0
  %146 = vadd.xlane.f32.xlu0 %v145
  %v147 = vpop.xlane.xlu0 %146
  %v148 = vsel %vm141, %v134, 0.0
  %149 = vadd.xlane.f32.xlu0 %v148
  %v150 = vpop.xlane.xlu0 %149
  %v151 = vsel %vm141, %v137, 0.0
  %152 = vadd.xlane.f32.xlu0 %v151
  %v153 = vpop.xlane.xlu0 %152
  %v154 = vrcp.pop 32.0
  %v155 = vmul.f32 32.0, %v154
  %v156 = vsub.f32 1.0, %v155
  %v157 = vmul.f32 %v154, %v156
  %v158 = vadd.f32 %v154, %v157
  %vm159 = vweird.f32 %v154
  %v160 = vsel %vm159, %v154, %v158
  %v161 = vmul.f32 %v144, %v160
  %v162 = vmul.f32 %v147, %v160
  %v163 = vmul.f32 %v150, %v160
  %v164 = vmul.f32 %v153, %v160
  %v165 = vsub.f32 %v128, %v161
  %v166 = vsub.f32 %v131, %v162
  %v167 = vsub.f32 %v134, %v163
  %v168 = vsub.f32 %v137, %v164
  %v169 = vmul.f32 %v165, %v165
  %v170 = vmul.f32 %v166, %v166
  %v171 = vmul.f32 %v167, %v167
  %v172 = vmul.f32 %v168, %v168
  %v173 = vsel %vm141, %v169, 0.0
  %174 = vadd.xlane.f32.xlu0 %v173
  %v175 = vpop.xlane.xlu0 %174
  %v176 = vsel %vm141, %v170, 0.0
  %177 = vadd.xlane.f32.xlu0 %v176
  %v178 = vpop.xlane.xlu0 %177
  %v179 = vsel %vm141, %v171, 0.0
  %180 = vadd.xlane.f32.xlu0 %v179
  %v181 = vpop.xlane.xlu0 %180
  %v182 = vsel %vm141, %v172, 0.0
  %183 = vadd.xlane.f32.xlu0 %v182
  %v184 = vpop.xlane.xlu0 %183
  %v185 = vmul.f32 %v175, %v160
  %v186 = vmul.f32 %v178, %v160
  %v187 = vmul.f32 %v181, %v160
  %v188 = vmul.f32 %v184, %v160
  %v189 = vadd.f32 %v185, 1e-05
  %v190 = vadd.f32 %v186, 1e-05
  %v191 = vadd.f32 %v187, 1e-05
  %v192 = vadd.f32 %v188, 1e-05
  %v193 = vrsqrt.pop %v189
  %v194 = vmul.f32 %v193, %v189
  %v195 = vmul.f32 %v194, %v193
  %v196 = vmul.f32 0.5, %v195
  %v197 = vsub.f32 1.5, %v196
  %v198 = vmul.f32 %v193, %v197
  %vm199 = vweird.f32 %v189
  %vm200 = vweird.f32 %v193
  %vm201 = vmor %vm199, %vm200
  %v202 = vsel %vm201, %v193, %v198
  %v203 = vrsqrt.pop %v190
  %v204 = vmul.f32 %v203, %v190
  %v205 = vmul.f32 %v204, %v203
  %v206 = vmul.f32 0.5, %v205
  %v207 = vsub.f32 1.5, %v206
  %v208 = vmul.f32 %v203, %v207
  %vm209 = vweird.f32 %v190
  %vm210 = vweird.f32 %v203
  %vm211 = vmor %vm209, %vm210
  %v212 = vsel %vm211, %v203, %v208
  %v213 = vrsqrt.pop %v191
  %v214 = vmul.f32 %v213, %v191
  %v215 = vmul.f32 %v214, %v213
  %v216 = vmul.f32 0.5, %v215
  %v217 = vsub.f32 1.5, %v216
  %v218 = vmul.f32 %v213, %v217
  %vm219 = vweird.f32 %v191
  %vm220 = vweird.f32 %v213
  %vm221 = vmor %vm219, %vm220
  %v222 = vsel %vm221, %v213, %v218
  %v223 = vrsqrt.pop %v192
  %v224 = vmul.f32 %v223, %v192
  %v225 = vmul.f32 %v224, %v223
  %v226 = vmul.f32 0.5, %v225
  %v227 = vsub.f32 1.5, %v226
  %v228 = vmul.f32 %v223, %v227
  %vm229 = vweird.f32 %v192
  %vm230 = vweird.f32 %v223
  %vm231 = vmor %vm229, %vm230
  %v232 = vsel %vm231, %v223, %v228
  %v233 = vmul.f32 %v165, %v202
  %v234 = vmul.f32 %v166, %v212
  %v235 = vmul.f32 %v167, %v222
  %v236 = vmul.f32 %v168, %v232
  %v238 = vperm.slane %v139, 0
  %v240 = vmul.f32 %v233, %v238
  %v241 = vmul.f32 %v234, %v238
  %v242 = vmul.f32 %v235, %v238
  %v243 = vmul.f32 %v236, %v238
  %v245 = vperm.slane %v140, 0
  %v247 = vadd.f32 %v240, %v245
  %v248 = vadd.f32 %v241, %v245
  %v249 = vadd.f32 %v242, %v245
  %v250 = vadd.f32 %v243, %v245
  %v251 = vld [vmem:[%s5] sm:$0x1]
  %v252 = vld [vmem:[%s6] sm:$0x1]
  %v253 = vsel %vm141, %v247, 0.0
  %254 = vadd.xlane.f32.xlu0 %v253
  %v255 = vpop.xlane.xlu0 %254
  %v256 = vsel %vm141, %v248, 0.0
  %257 = vadd.xlane.f32.xlu0 %v256
  %v258 = vpop.xlane.xlu0 %257
  %v259 = vsel %vm141, %v249, 0.0
  %260 = vadd.xlane.f32.xlu0 %v259
  %v261 = vpop.xlane.xlu0 %260
  %v262 = vsel %vm141, %v250, 0.0
  %263 = vadd.xlane.f32.xlu0 %v262
  %v264 = vpop.xlane.xlu0 %263
  %v265 = vmul.f32 %v255, %v160
  %v266 = vmul.f32 %v258, %v160
  %v267 = vmul.f32 %v261, %v160
  %v268 = vmul.f32 %v264, %v160
  %v269 = vsub.f32 %v247, %v265
  %v270 = vsub.f32 %v248, %v266
  %v271 = vsub.f32 %v249, %v267
  %v272 = vsub.f32 %v250, %v268
  %v273 = vmul.f32 %v269, %v269
  %v274 = vmul.f32 %v270, %v270
  %v275 = vmul.f32 %v271, %v271
  %v276 = vmul.f32 %v272, %v272
  %v277 = vsel %vm141, %v273, 0.0
  %278 = vadd.xlane.f32.xlu0 %v277
  %v279 = vpop.xlane.xlu0 %278
  %v280 = vsel %vm141, %v274, 0.0
  %281 = vadd.xlane.f32.xlu0 %v280
  %v282 = vpop.xlane.xlu0 %281
  %v283 = vsel %vm141, %v275, 0.0
  %284 = vadd.xlane.f32.xlu0 %v283
  %v285 = vpop.xlane.xlu0 %284
  %v286 = vsel %vm141, %v276, 0.0
  %287 = vadd.xlane.f32.xlu0 %v286
  %v288 = vpop.xlane.xlu0 %287
  %v289 = vmul.f32 %v279, %v160
  %v290 = vmul.f32 %v282, %v160
  %v291 = vmul.f32 %v285, %v160
  %v292 = vmul.f32 %v288, %v160
  %v293 = vadd.f32 %v289, 1e-05
  %v294 = vadd.f32 %v290, 1e-05
  %v295 = vadd.f32 %v291, 1e-05
  %v296 = vadd.f32 %v292, 1e-05
  %v297 = vrsqrt.pop %v293
  %v298 = vmul.f32 %v297, %v293
  %v299 = vmul.f32 %v298, %v297
  %v300 = vmul.f32 0.5, %v299
  %v301 = vsub.f32 1.5, %v300
  %v302 = vmul.f32 %v297, %v301
  %vm303 = vweird.f32 %v293
  %vm304 = vweird.f32 %v297
  %vm305 = vmor %vm303, %vm304
  %v306 = vsel %vm305, %v297, %v302
  %v307 = vrsqrt.pop %v294
  %v308 = vmul.f32 %v307, %v294
  %v309 = vmul.f32 %v308, %v307
  %v310 = vmul.f32 0.5, %v309
  %v311 = vsub.f32 1.5, %v310
  %v312 = vmul.f32 %v307, %v311
  %vm313 = vweird.f32 %v294
  %vm314 = vweird.f32 %v307
  %vm315 = vmor %vm313, %vm314
  %v316 = vsel %vm315, %v307, %v312
  %v317 = vrsqrt.pop %v295
  %v318 = vmul.f32 %v317, %v295
  %v319 = vmul.f32 %v318, %v317
  %v320 = vmul.f32 0.5, %v319
  %v321 = vsub.f32 1.5, %v320
  %v322 = vmul.f32 %v317, %v321
  %vm323 = vweird.f32 %v295
  %vm324 = vweird.f32 %v317
  %vm325 = vmor %vm323, %vm324
  %v326 = vsel %vm325, %v317, %v322
  %v327 = vrsqrt.pop %v296
  %v328 = vmul.f32 %v327, %v296
  %v329 = vmul.f32 %v328, %v327
  %v330 = vmul.f32 0.5, %v329
  %v331 = vsub.f32 1.5, %v330
  %v332 = vmul.f32 %v327, %v331
  %vm333 = vweird.f32 %v296
  %vm334 = vweird.f32 %v327
  %vm335 = vmor %vm333, %vm334
  %v336 = vsel %vm335, %v327, %v332
  %v337 = vmul.f32 %v269, %v306
  %v338 = vmul.f32 %v270, %v316
  %v339 = vmul.f32 %v271, %v326
  %v340 = vmul.f32 %v272, %v336
  %v342 = vperm.slane %v251, 0
  %v344 = vmul.f32 %v337, %v342
  %v345 = vmul.f32 %v338, %v342
  %v346 = vmul.f32 %v339, %v342
  %v347 = vmul.f32 %v340, %v342
  %v349 = vperm.slane %v252, 0
  %v351 = vadd.f32 %v344, %v349
  %v352 = vadd.f32 %v345, %v349
  %v353 = vadd.f32 %v346, %v349
  %v354 = vadd.f32 %v347, %v349
  %v355 = vld [vmem:[%s7] sm:$0xff]
  %v356 = vld [vmem:[%s7 + $0x8] sm:$0xff]
  %v357 = vld [vmem:[%s7 + $0x10] sm:$0xff]
  %v358 = vld [vmem:[%s7 + $0x18] sm:$0xff]
  %v359 = vld [vmem:[%s10] sm:$0x1]
  %v361 = vperm.slane %v359, 0
  %v364 = vsel %vm141, %v351, 0
  %v367 = vsel %vm141, %v352, 0
  %v370 = vsel %vm141, %v353, 0
  %v373 = vsel %vm141, %v354, 0
  %375 = vmatpush.msra.mxu0 0.0
  %376 = vmatpush.msra.mxu0 0.0
  %377 = vmatpush.msra.mxu0 0.0
  %378 = vmatpush.msra.mxu0 0.0
  %379 = vmatpush.msra.mxu0 0.0
  %380 = vmatpush.msra.mxu0 0.0
  %381 = vmatpush.msra.mxu0 0.0
  %382 = vmatpush.msra.mxu0 0.0
  %383 = vmatpush.msra.mxu0 0.0
  %384 = vmatpush.msra.mxu0 0.0
  %385 = vmatpush.msra.mxu0 0.0
  %386 = vmatpush.msra.mxu0 0.0
  %387 = vmatpush.msra.mxu0 %v358
  %388 = vmatpush.msra.mxu0 %v357
  %389 = vmatpush.msra.mxu0 %v356
  %390 = vmatpush.msra.mxu0 %v355
  %391 = vmatmul.f32.gmra.mxu0 %v364
  %v392 = vpop.f32.mrf.mxu0
  %v393 = vadd.f32 %v361, %v392
  %394 = vmatmul.f32.gmra.mxu0 %v367
  %v395 = vpop.f32.mrf.mxu0
  %v396 = vadd.f32 %v361, %v395
  %397 = vmatmul.f32.gmra.mxu0 %v370
  %v398 = vpop.f32.mrf.mxu0
  %v399 = vadd.f32 %v361, %v398
  %400 = vmatmul.f32.gmra.mxu0 %v373
  %v401 = vpop.f32.mrf.mxu0
  %v402 = vadd.f32 %v361, %v401
  %403 = vdwg.mxu0
  %v404 = vld [vmem:[%s8] sm:$0xff]
  %v405 = vld [vmem:[%s8 + $0x8] sm:$0xff]
  %v406 = vld [vmem:[%s8 + $0x10] sm:$0xff]
  %v407 = vld [vmem:[%s8 + $0x18] sm:$0xff]
  %v408 = vld [vmem:[%s11] sm:$0x1]
  %v410 = vperm.slane %v408, 0
  %412 = vmatpush.msra.mxu0 0.0
  %413 = vmatpush.msra.mxu0 0.0
  %414 = vmatpush.msra.mxu0 0.0
  %415 = vmatpush.msra.mxu0 0.0
  %416 = vmatpush.msra.mxu0 0.0
  %417 = vmatpush.msra.mxu0 0.0
  %418 = vmatpush.msra.mxu0 0.0
  %419 = vmatpush.msra.mxu0 0.0
  %420 = vmatpush.msra.mxu0 0.0
  %421 = vmatpush.msra.mxu0 0.0
  %422 = vmatpush.msra.mxu0 0.0
  %423 = vmatpush.msra.mxu0 0.0
  %424 = vmatpush.msra.mxu0 %v407
  %425 = vmatpush.msra.mxu0 %v406
  %426 = vmatpush.msra.mxu0 %v405
  %427 = vmatpush.msra.mxu0 %v404
  %428 = vmatmul.f32.gmra.mxu0 %v364
  %v429 = vpop.f32.mrf.mxu0
  %v430 = vadd.f32 %v410, %v429
  %431 = vmatmul.f32.gmra.mxu0 %v367
  %v432 = vpop.f32.mrf.mxu0
  %v433 = vadd.f32 %v410, %v432
  %434 = vmatmul.f32.gmra.mxu0 %v370
  %v435 = vpop.f32.mrf.mxu0
  %v436 = vadd.f32 %v410, %v435
  %437 = vmatmul.f32.gmra.mxu0 %v373
  %v438 = vpop.f32.mrf.mxu0
  %v439 = vadd.f32 %v410, %v438
  %440 = vdwg.mxu0
  %v441 = vld [vmem:[%s9] sm:$0xff]
  %v442 = vld [vmem:[%s9 + $0x8] sm:$0xff]
  %v443 = vld [vmem:[%s9 + $0x10] sm:$0xff]
  %v444 = vld [vmem:[%s9 + $0x18] sm:$0xff]
  %v445 = vld [vmem:[%s12] sm:$0x1]
  %v447 = vperm.slane %v445, 0
  %449 = vmatpush.msra.mxu0 0.0
  %450 = vmatpush.msra.mxu0 0.0
  %451 = vmatpush.msra.mxu0 0.0
  %452 = vmatpush.msra.mxu0 0.0
  %453 = vmatpush.msra.mxu0 0.0
  %454 = vmatpush.msra.mxu0 0.0
  %455 = vmatpush.msra.mxu0 0.0
  %456 = vmatpush.msra.mxu0 0.0
  %457 = vmatpush.msra.mxu0 0.0
  %458 = vmatpush.msra.mxu0 0.0
  %459 = vmatpush.msra.mxu0 0.0
  %460 = vmatpush.msra.mxu0 0.0
  %461 = vmatpush.msra.mxu0 %v444
  %462 = vmatpush.msra.mxu0 %v443
  %463 = vmatpush.msra.mxu0 %v442
  %464 = vmatpush.msra.mxu0 %v441
  %465 = vmatmul.f32.gmra.mxu0 %v364
  %v466 = vpop.f32.mrf.mxu0
  %v467 = vadd.f32 %v447, %v466
  %468 = vmatmul.f32.gmra.mxu0 %v367
  %v469 = vpop.f32.mrf.mxu0
  %v470 = vadd.f32 %v447, %v469
  %471 = vmatmul.f32.gmra.mxu0 %v370
  %v472 = vpop.f32.mrf.mxu0
  %v473 = vadd.f32 %v447, %v472
  %474 = vmatmul.f32.gmra.mxu0 %v373
  %v475 = vpop.f32.mrf.mxu0
  %v476 = vadd.f32 %v447, %v475
  %477 = vdwg.mxu0
  %v478 = vmul.f32 %v393, 0.25
  %v479 = vmul.f32 %v396, 0.25
  %v480 = vmul.f32 %v399, 0.25
  %v481 = vmul.f32 %v402, 0.25
  %v482 = vld [vmem:[%s15] sm:$0xff]
  %v483 = vld [vmem:[%s15 + $0x8] sm:$0xff]
  %v484 = vld [vmem:[%s15 + $0x10] sm:$0xff]
  %v485 = vld [vmem:[%s15 + $0x18] sm:$0xff]
  %vm486 = vcmask 130048
  %v488 = vsel %vm486, %v478, 0
  %v491 = vsel %vm486, %v479, 0
  %v494 = vsel %vm486, %v480, 0
  %v497 = vsel %vm486, %v481, 0
  %v500 = vsel %vm486, %v430, 0
  %v503 = vsel %vm486, %v433, 0
  %v506 = vsel %vm486, %v436, 0
  %v509 = vsel %vm486, %v439, 0
  %511 = vmatpush.xpose.msra.mxu0 0.0
  %512 = vmatpush.xpose.msra.mxu0 0.0
  %513 = vmatpush.xpose.msra.mxu0 0.0
  %514 = vmatpush.xpose.msra.mxu0 0.0
  %515 = vmatpush.xpose.msra.mxu0 0.0
  %516 = vmatpush.xpose.msra.mxu0 0.0
  %517 = vmatpush.xpose.msra.mxu0 0.0
  %518 = vmatpush.xpose.msra.mxu0 0.0
  %519 = vmatpush.xpose.msra.mxu0 0.0
  %520 = vmatpush.xpose.msra.mxu0 0.0
  %521 = vmatpush.xpose.msra.mxu0 0.0
  %522 = vmatpush.xpose.msra.mxu0 0.0
  %523 = vmatpush.xpose.msra.mxu0 %v509
  %524 = vmatpush.xpose.msra.mxu0 %v506
  %525 = vmatpush.xpose.msra.mxu0 %v503
  %526 = vmatpush.xpose.msra.mxu0 %v500
  %527 = vmatmul.f32.gmra.mxu0 %v488
  %v528 = vpop.f32.mrf.mxu0
  %v529 = vadd.f32 %v482, %v528
  %530 = vmatmul.f32.gmra.mxu0 %v491
  %v531 = vpop.f32.mrf.mxu0
  %v532 = vadd.f32 %v483, %v531
  %533 = vmatmul.f32.gmra.mxu0 %v494
  %v534 = vpop.f32.mrf.mxu0
  %v535 = vadd.f32 %v484, %v534
  %536 = vmatmul.f32.gmra.mxu0 %v497
  %v537 = vpop.f32.mrf.mxu0
  %v538 = vadd.f32 %v485, %v537
  %539 = vdwg.mxu0
  %v540 = vsel %vm141, %v529, -inf
  %541 = vmax.xlane.f32.xlu0 %v540
  %v542 = vpop.xlane.xlu0 %541
  %v543 = vsel %vm141, %v532, -inf
  %544 = vmax.xlane.f32.xlu0 %v543
  %v545 = vpop.xlane.xlu0 %544
  %v546 = vsel %vm141, %v535, -inf
  %547 = vmax.xlane.f32.xlu0 %v546
  %v548 = vpop.xlane.xlu0 %547
  %v549 = vsel %vm141, %v538, -inf
  %550 = vmax.xlane.f32.xlu0 %v549
  %v551 = vpop.xlane.xlu0 %550
  %v552 = vsub.f32 %v529, %v542
  %v553 = vsub.f32 %v532, %v545
  %v554 = vsub.f32 %v535, %v548
  %v555 = vsub.f32 %v538, %v551
  %v556 = vmul.f32 %v552, 1.442695
  %v557 = vpow.pop %v556
  %v558 = vmul.f32 %v553, 1.442695
  %v559 = vpow.pop %v558
  %v560 = vmul.f32 %v554, 1.442695
  %v561 = vpow.pop %v560
  %v562 = vmul.f32 %v555, 1.442695
  %v563 = vpow.pop %v562
  %v564 = vsel %vm141, %v557, 0.0
  %565 = vadd.xlane.f32.xlu0 %v564
  %v566 = vpop.xlane.xlu0 %565
  %v567 = vsel %vm141, %v559, 0.0
  %568 = vadd.xlane.f32.xlu0 %v567
  %v569 = vpop.xlane.xlu0 %568
  %v570 = vsel %vm141, %v561, 0.0
  %571 = vadd.xlane.f32.xlu0 %v570
  %v572 = vpop.xlane.xlu0 %571
  %v573 = vsel %vm141, %v563, 0.0
  %574 = vadd.xlane.f32.xlu0 %v573
  %v575 = vpop.xlane.xlu0 %574
  %v576 = vrcp.pop %v566
  %v577 = vmul.f32 %v566, %v576
  %v578 = vsub.f32 1.0, %v577
  %v579 = vmul.f32 %v576, %v578
  %v580 = vadd.f32 %v576, %v579
  %vm581 = vweird.f32 %v566
  %vm582 = vweird.f32 %v576
  %vm583 = vmor %vm581, %vm582
  %v584 = vsel %vm583, %v576, %v580
  %v585 = vand.u32 2147483647, %v566
  %vm586 = vcmp.eq.f32.partialorder %v585, 8.507059e+37
  %v587 = vand.u32 %v566, 2147483648
  %v588 = vor.u32 1.1754944e-38, %v587
  %v589 = vsel %vm586, %v588, %v584
  %v590 = vrcp.pop %v569
  %v591 = vmul.f32 %v569, %v590
  %v592 = vsub.f32 1.0, %v591
  %v593 = vmul.f32 %v590, %v592
  %v594 = vadd.f32 %v590, %v593
  %vm595 = vweird.f32 %v569
  %vm596 = vweird.f32 %v590
  %vm597 = vmor %vm595, %vm596
  %v598 = vsel %vm597, %v590, %v594
  %v599 = vand.u32 2147483647, %v569
  %vm600 = vcmp.eq.f32.partialorder %v599, 8.507059e+37
  %v601 = vand.u32 %v569, 2147483648
  %v602 = vor.u32 1.1754944e-38, %v601
  %v603 = vsel %vm600, %v602, %v598
  %v604 = vrcp.pop %v572
  %v605 = vmul.f32 %v572, %v604
  %v606 = vsub.f32 1.0, %v605
  %v607 = vmul.f32 %v604, %v606
  %v608 = vadd.f32 %v604, %v607
  %vm609 = vweird.f32 %v572
  %vm610 = vweird.f32 %v604
  %vm611 = vmor %vm609, %vm610
  %v612 = vsel %vm611, %v604, %v608
  %v613 = vand.u32 2147483647, %v572
  %vm614 = vcmp.eq.f32.partialorder %v613, 8.507059e+37
  %v615 = vand.u32 %v572, 2147483648
  %v616 = vor.u32 1.1754944e-38, %v615
  %v617 = vsel %vm614, %v616, %v612
  %v618 = vrcp.pop %v575
  %v619 = vmul.f32 %v575, %v618
  %v620 = vsub.f32 1.0, %v619
  %v621 = vmul.f32 %v618, %v620
  %v622 = vadd.f32 %v618, %v621
  %vm623 = vweird.f32 %v575
  %vm624 = vweird.f32 %v618
  %vm625 = vmor %vm623, %vm624
  %v626 = vsel %vm625, %v618, %v622
  %v627 = vand.u32 2147483647, %v575
  %vm628 = vcmp.eq.f32.partialorder %v627, 8.507059e+37
  %v629 = vand.u32 %v575, 2147483648
  %v630 = vor.u32 1.1754944e-38, %v629
  %v631 = vsel %vm628, %v630, %v626
  %v632 = vmul.f32 %v557, %v589
  %v633 = vmul.f32 %v559, %v603
  %v634 = vmul.f32 %v561, %v617
  %v635 = vmul.f32 %v563, %v631
  %v637 = vsel %vm141, %v632, 0
  %v640 = vsel %vm141, %v633, 0
  %v643 = vsel %vm141, %v634, 0
  %v646 = vsel %vm141, %v635, 0
  %648 = vmatpush.msra.mxu0 0.0
  %649 = vmatpush.msra.mxu0 0.0
  %650 = vmatpush.msra.mxu0 0.0
  %651 = vmatpush.msra.mxu0 0.0
  %652 = vmatpush.msra.mxu0 0.0
  %653 = vmatpush.msra.mxu0 0.0
  %654 = vmatpush.msra.mxu0 0.0
  %655 = vmatpush.msra.mxu0 0.0
  %656 = vmatpush.msra.mxu0 0.0
  %657 = vmatpush.msra.mxu0 0.0
  %658 = vmatpush.msra.mxu0 0.0
  %659 = vmatpush.msra.mxu0 0.0
  %660 = vmatpush.msra.mxu0 %v476
  %661 = vmatpush.msra.mxu0 %v473
  %662 = vmatpush.msra.mxu0 %v470
  %663 = vmatpush.msra.mxu0 %v467
  %664 = vmatmul.f32.gmra.mxu0 %v637
  %v665 = vpop.f32.mrf.mxu0
  %v666 = vadd.f32 0.0, %v665
  %667 = vmatmul.f32.gmra.mxu0 %v640
  %v668 = vpop.f32.mrf.mxu0
  %v669 = vadd.f32 0.0, %v668
  %670 = vmatmul.f32.gmra.mxu0 %v643
  %v671 = vpop.f32.mrf.mxu0
  %v672 = vadd.f32 0.0, %v671
  %673 = vmatmul.f32.gmra.mxu0 %v646
  %v674 = vpop.f32.mrf.mxu0
  %v675 = vadd.f32 0.0, %v674
  %676 = vdwg.mxu0
  %v677 = vld [vmem:[%s13] sm:$0xff]
  %v678 = vld [vmem:[%s13 + $0x8] sm:$0xff]
  %s679 = scalar_lea.vmem %s7, 32
  %v680 = vld [vmem:[%s679] sm:$0xff]
  %v681 = vld [vmem:[%s679 + $0x8] sm:$0xff]
  %v682 = vld [vmem:[%s679 + $0x10] sm:$0xff]
  %v683 = vld [vmem:[%s679 + $0x18] sm:$0xff]
  %s684 = scalar_lea.vmem %s10, 1
  %v685 = vld [vmem:[%s684] sm:$0x1]
  %v687 = vperm.slane %v685, 0
  %689 = vmatpush.msra.mxu0 0.0
  %690 = vmatpush.msra.mxu0 0.0
  %691 = vmatpush.msra.mxu0 0.0
  %692 = vmatpush.msra.mxu0 0.0
  %693 = vmatpush.msra.mxu0 0.0
  %694 = vmatpush.msra.mxu0 0.0
  %695 = vmatpush.msra.mxu0 0.0
  %696 = vmatpush.msra.mxu0 0.0
  %697 = vmatpush.msra.mxu0 0.0
  %698 = vmatpush.msra.mxu0 0.0
  %699 = vmatpush.msra.mxu0 0.0
  %700 = vmatpush.msra.mxu0 0.0
  %701 = vmatpush.msra.mxu0 %v683
  %702 = vmatpush.msra.mxu0 %v682
  %703 = vmatpush.msra.mxu0 %v681
  %704 = vmatpush.msra.mxu0 %v680
  %705 = vmatmul.f32.gmra.mxu0 %v364
  %v706 = vpop.f32.mrf.mxu0
  %v707 = vadd.f32 %v687, %v706
  %708 = vmatmul.f32.gmra.mxu0 %v367
  %v709 = vpop.f32.mrf.mxu0
  %v710 = vadd.f32 %v687, %v709
  %711 = vmatmul.f32.gmra.mxu0 %v370
  %v712 = vpop.f32.mrf.mxu0
  %v713 = vadd.f32 %v687, %v712
  %714 = vmatmul.f32.gmra.mxu0 %v373
  %v715 = vpop.f32.mrf.mxu0
  %v716 = vadd.f32 %v687, %v715
  %717 = vdwg.mxu0
  %s718 = scalar_lea.vmem %s8, 32
  %v719 = vld [vmem:[%s718] sm:$0xff]
  %v720 = vld [vmem:[%s718 + $0x8] sm:$0xff]
  %v721 = vld [vmem:[%s718 + $0x10] sm:$0xff]
  %v722 = vld [vmem:[%s718 + $0x18] sm:$0xff]
  %s723 = scalar_lea.vmem %s11, 1
  %v724 = vld [vmem:[%s723] sm:$0x1]
  %v726 = vperm.slane %v724, 0
  %728 = vmatpush.msra.mxu0 0.0
  %729 = vmatpush.msra.mxu0 0.0
  %730 = vmatpush.msra.mxu0 0.0
  %731 = vmatpush.msra.mxu0 0.0
  %732 = vmatpush.msra.mxu0 0.0
  %733 = vmatpush.msra.mxu0 0.0
  %734 = vmatpush.msra.mxu0 0.0
  %735 = vmatpush.msra.mxu0 0.0
  %736 = vmatpush.msra.mxu0 0.0
  %737 = vmatpush.msra.mxu0 0.0
  %738 = vmatpush.msra.mxu0 0.0
  %739 = vmatpush.msra.mxu0 0.0
  %740 = vmatpush.msra.mxu0 %v722
  %741 = vmatpush.msra.mxu0 %v721
  %742 = vmatpush.msra.mxu0 %v720
  %743 = vmatpush.msra.mxu0 %v719
  %744 = vmatmul.f32.gmra.mxu0 %v364
  %v745 = vpop.f32.mrf.mxu0
  %v746 = vadd.f32 %v726, %v745
  %747 = vmatmul.f32.gmra.mxu0 %v367
  %v748 = vpop.f32.mrf.mxu0
  %v749 = vadd.f32 %v726, %v748
  %750 = vmatmul.f32.gmra.mxu0 %v370
  %v751 = vpop.f32.mrf.mxu0
  %v752 = vadd.f32 %v726, %v751
  %753 = vmatmul.f32.gmra.mxu0 %v373
  %v754 = vpop.f32.mrf.mxu0
  %v755 = vadd.f32 %v726, %v754
  %756 = vdwg.mxu0
  %s757 = scalar_lea.vmem %s9, 32
  %v758 = vld [vmem:[%s757] sm:$0xff]
  %v759 = vld [vmem:[%s757 + $0x8] sm:$0xff]
  %v760 = vld [vmem:[%s757 + $0x10] sm:$0xff]
  %v761 = vld [vmem:[%s757 + $0x18] sm:$0xff]
  %s762 = scalar_lea.vmem %s12, 1
  %v763 = vld [vmem:[%s762] sm:$0x1]
  %v765 = vperm.slane %v763, 0
  %767 = vmatpush.msra.mxu0 0.0
  %768 = vmatpush.msra.mxu0 0.0
  %769 = vmatpush.msra.mxu0 0.0
  %770 = vmatpush.msra.mxu0 0.0
  %771 = vmatpush.msra.mxu0 0.0
  %772 = vmatpush.msra.mxu0 0.0
  %773 = vmatpush.msra.mxu0 0.0
  %774 = vmatpush.msra.mxu0 0.0
  %775 = vmatpush.msra.mxu0 0.0
  %776 = vmatpush.msra.mxu0 0.0
  %777 = vmatpush.msra.mxu0 0.0
  %778 = vmatpush.msra.mxu0 0.0
  %779 = vmatpush.msra.mxu0 %v761
  %780 = vmatpush.msra.mxu0 %v760
  %781 = vmatpush.msra.mxu0 %v759
  %782 = vmatpush.msra.mxu0 %v758
  %783 = vmatmul.f32.gmra.mxu0 %v364
  %v784 = vpop.f32.mrf.mxu0
  %v785 = vadd.f32 %v765, %v784
  %786 = vmatmul.f32.gmra.mxu0 %v367
  %v787 = vpop.f32.mrf.mxu0
  %v788 = vadd.f32 %v765, %v787
  %789 = vmatmul.f32.gmra.mxu0 %v370
  %v790 = vpop.f32.mrf.mxu0
  %v791 = vadd.f32 %v765, %v790
  %792 = vmatmul.f32.gmra.mxu0 %v373
  %v793 = vpop.f32.mrf.mxu0
  %v794 = vadd.f32 %v765, %v793
  %795 = vdwg.mxu0
  %v796 = vmul.f32 %v707, 0.25
  %v797 = vmul.f32 %v710, 0.25
  %v798 = vmul.f32 %v713, 0.25
  %v799 = vmul.f32 %v716, 0.25
  %s800 = scalar_lea.vmem %s15, 32
  %v801 = vld [vmem:[%s800] sm:$0xff]
  %v802 = vld [vmem:[%s800 + $0x8] sm:$0xff]
  %v803 = vld [vmem:[%s800 + $0x10] sm:$0xff]
  %v804 = vld [vmem:[%s800 + $0x18] sm:$0xff]
  %v806 = vsel %vm486, %v796, 0
  %v809 = vsel %vm486, %v797, 0
  %v812 = vsel %vm486, %v798, 0
  %v815 = vsel %vm486, %v799, 0
  %v818 = vsel %vm486, %v746, 0
  %v821 = vsel %vm486, %v749, 0
  %v824 = vsel %vm486, %v752, 0
  %v827 = vsel %vm486, %v755, 0
  %829 = vmatpush.xpose.msra.mxu0 0.0
  %830 = vmatpush.xpose.msra.mxu0 0.0
  %831 = vmatpush.xpose.msra.mxu0 0.0
  %832 = vmatpush.xpose.msra.mxu0 0.0
  %833 = vmatpush.xpose.msra.mxu0 0.0
  %834 = vmatpush.xpose.msra.mxu0 0.0
  %835 = vmatpush.xpose.msra.mxu0 0.0
  %836 = vmatpush.xpose.msra.mxu0 0.0
  %837 = vmatpush.xpose.msra.mxu0 0.0
  %838 = vmatpush.xpose.msra.mxu0 0.0
  %839 = vmatpush.xpose.msra.mxu0 0.0
  %840 = vmatpush.xpose.msra.mxu0 0.0
  %841 = vmatpush.xpose.msra.mxu0 %v827
  %842 = vmatpush.xpose.msra.mxu0 %v824
  %843 = vmatpush.xpose.msra.mxu0 %v821
  %844 = vmatpush.xpose.msra.mxu0 %v818
  %845 = vmatmul.f32.gmra.mxu0 %v806
  %v846 = vpop.f32.mrf.mxu0
  %v847 = vadd.f32 %v801, %v846
  %848 = vmatmul.f32.gmra.mxu0 %v809
  %v849 = vpop.f32.mrf.mxu0
  %v850 = vadd.f32 %v802, %v849
  %851 = vmatmul.f32.gmra.mxu0 %v812
  %v852 = vpop.f32.mrf.mxu0
  %v853 = vadd.f32 %v803, %v852
  %854 = vmatmul.f32.gmra.mxu0 %v815
  %v855 = vpop.f32.mrf.mxu0
  %v856 = vadd.f32 %v804, %v855
  %857 = vdwg.mxu0
  %v858 = vsel %vm141, %v847, -inf
  %859 = vmax.xlane.f32.xlu0 %v858
  %v860 = vpop.xlane.xlu0 %859
  %v861 = vsel %vm141, %v850, -inf
  %862 = vmax.xlane.f32.xlu0 %v861
  %v863 = vpop.xlane.xlu0 %862
  %v864 = vsel %vm141, %v853, -inf
  %865 = vmax.xlane.f32.xlu0 %v864
  %v866 = vpop.xlane.xlu0 %865
  %v867 = vsel %vm141, %v856, -inf
  %868 = vmax.xlane.f32.xlu0 %v867
  %v869 = vpop.xlane.xlu0 %868
  %v870 = vsub.f32 %v847, %v860
  %v871 = vsub.f32 %v850, %v863
  %v872 = vsub.f32 %v853, %v866
  %v873 = vsub.f32 %v856, %v869
  %v874 = vmul.f32 %v870, 1.442695
  %v875 = vpow.pop %v874
  %v876 = vmul.f32 %v871, 1.442695
  %v877 = vpow.pop %v876
  %v878 = vmul.f32 %v872, 1.442695
  %v879 = vpow.pop %v878
  %v880 = vmul.f32 %v873, 1.442695
  %v881 = vpow.pop %v880
  %v882 = vsel %vm141, %v875, 0.0
  %883 = vadd.xlane.f32.xlu0 %v882
  %v884 = vpop.xlane.xlu0 %883
  %v885 = vsel %vm141, %v877, 0.0
  %886 = vadd.xlane.f32.xlu0 %v885
  %v887 = vpop.xlane.xlu0 %886
  %v888 = vsel %vm141, %v879, 0.0
  %889 = vadd.xlane.f32.xlu0 %v888
  %v890 = vpop.xlane.xlu0 %889
  %v891 = vsel %vm141, %v881, 0.0
  %892 = vadd.xlane.f32.xlu0 %v891
  %v893 = vpop.xlane.xlu0 %892
  %v894 = vrcp.pop %v884
  %v895 = vmul.f32 %v884, %v894
  %v896 = vsub.f32 1.0, %v895
  %v897 = vmul.f32 %v894, %v896
  %v898 = vadd.f32 %v894, %v897
  %vm899 = vweird.f32 %v884
  %vm900 = vweird.f32 %v894
  %vm901 = vmor %vm899, %vm900
  %v902 = vsel %vm901, %v894, %v898
  %v903 = vand.u32 2147483647, %v884
  %vm904 = vcmp.eq.f32.partialorder %v903, 8.507059e+37
  %v905 = vand.u32 %v884, 2147483648
  %v906 = vor.u32 1.1754944e-38, %v905
  %v907 = vsel %vm904, %v906, %v902
  %v908 = vrcp.pop %v887
  %v909 = vmul.f32 %v887, %v908
  %v910 = vsub.f32 1.0, %v909
  %v911 = vmul.f32 %v908, %v910
  %v912 = vadd.f32 %v908, %v911
  %vm913 = vweird.f32 %v887
  %vm914 = vweird.f32 %v908
  %vm915 = vmor %vm913, %vm914
  %v916 = vsel %vm915, %v908, %v912
  %v917 = vand.u32 2147483647, %v887
  %vm918 = vcmp.eq.f32.partialorder %v917, 8.507059e+37
  %v919 = vand.u32 %v887, 2147483648
  %v920 = vor.u32 1.1754944e-38, %v919
  %v921 = vsel %vm918, %v920, %v916
  %v922 = vrcp.pop %v890
  %v923 = vmul.f32 %v890, %v922
  %v924 = vsub.f32 1.0, %v923
  %v925 = vmul.f32 %v922, %v924
  %v926 = vadd.f32 %v922, %v925
  %vm927 = vweird.f32 %v890
  %vm928 = vweird.f32 %v922
  %vm929 = vmor %vm927, %vm928
  %v930 = vsel %vm929, %v922, %v926
  %v931 = vand.u32 2147483647, %v890
  %vm932 = vcmp.eq.f32.partialorder %v931, 8.507059e+37
  %v933 = vand.u32 %v890, 2147483648
  %v934 = vor.u32 1.1754944e-38, %v933
  %v935 = vsel %vm932, %v934, %v930
  %v936 = vrcp.pop %v893
  %v937 = vmul.f32 %v893, %v936
  %v938 = vsub.f32 1.0, %v937
  %v939 = vmul.f32 %v936, %v938
  %v940 = vadd.f32 %v936, %v939
  %vm941 = vweird.f32 %v893
  %vm942 = vweird.f32 %v936
  %vm943 = vmor %vm941, %vm942
  %v944 = vsel %vm943, %v936, %v940
  %v945 = vand.u32 2147483647, %v893
  %vm946 = vcmp.eq.f32.partialorder %v945, 8.507059e+37
  %v947 = vand.u32 %v893, 2147483648
  %v948 = vor.u32 1.1754944e-38, %v947
  %v949 = vsel %vm946, %v948, %v944
  %v950 = vmul.f32 %v875, %v907
  %v951 = vmul.f32 %v877, %v921
  %v952 = vmul.f32 %v879, %v935
  %v953 = vmul.f32 %v881, %v949
  %v955 = vsel %vm141, %v950, 0
  %v958 = vsel %vm141, %v951, 0
  %v961 = vsel %vm141, %v952, 0
  %v964 = vsel %vm141, %v953, 0
  %966 = vmatpush.msra.mxu0 0.0
  %967 = vmatpush.msra.mxu0 0.0
  %968 = vmatpush.msra.mxu0 0.0
  %969 = vmatpush.msra.mxu0 0.0
  %970 = vmatpush.msra.mxu0 0.0
  %971 = vmatpush.msra.mxu0 0.0
  %972 = vmatpush.msra.mxu0 0.0
  %973 = vmatpush.msra.mxu0 0.0
  %974 = vmatpush.msra.mxu0 0.0
  %975 = vmatpush.msra.mxu0 0.0
  %976 = vmatpush.msra.mxu0 0.0
  %977 = vmatpush.msra.mxu0 0.0
  %978 = vmatpush.msra.mxu0 %v794
  %979 = vmatpush.msra.mxu0 %v791
  %980 = vmatpush.msra.mxu0 %v788
  %981 = vmatpush.msra.mxu0 %v785
  %982 = vmatmul.f32.gmra.mxu0 %v955
  %v983 = vpop.f32.mrf.mxu0
  %v984 = vadd.f32 0.0, %v983
  %985 = vmatmul.f32.gmra.mxu0 %v958
  %v986 = vpop.f32.mrf.mxu0
  %v987 = vadd.f32 0.0, %v986
  %988 = vmatmul.f32.gmra.mxu0 %v961
  %v989 = vpop.f32.mrf.mxu0
  %v990 = vadd.f32 0.0, %v989
  %991 = vmatmul.f32.gmra.mxu0 %v964
  %v992 = vpop.f32.mrf.mxu0
  %v993 = vadd.f32 0.0, %v992
  %994 = vdwg.mxu0
  %s995 = scalar_lea.vmem %s13, 16
  %v996 = vld [vmem:[%s995] sm:$0xff]
  %v997 = vld [vmem:[%s995 + $0x8] sm:$0xff]
  %v999 = vsel %vm486, %v984, 0
  %v1002 = vsel %vm486, %v987, 0
  %v1005 = vsel %vm486, %v990, 0
  %v1008 = vsel %vm486, %v993, 0
  %1010 = vmatpush.msra.mxu0 0.0
  %1011 = vmatpush.msra.mxu0 0.0
  %1012 = vmatpush.msra.mxu0 0.0
  %1013 = vmatpush.msra.mxu0 0.0
  %1014 = vmatpush.msra.mxu0 0.0
  %1015 = vmatpush.msra.mxu0 0.0
  %1016 = vmatpush.msra.mxu0 0.0
  %1017 = vmatpush.msra.mxu0 0.0
  %1018 = vmatpush.msra.mxu0 0.0
  %1019 = vmatpush.msra.mxu0 0.0
  %1020 = vmatpush.msra.mxu0 0.0
  %1021 = vmatpush.msra.mxu0 0.0
  %1022 = vmatpush.msra.mxu0 0.0
  %1023 = vmatpush.msra.mxu0 0.0
  %1024 = vmatpush.msra.mxu0 %v997
  %1025 = vmatpush.msra.mxu0 %v996
  %1026 = vmatmul.f32.gmra.mxu0 %v999
  %v1027 = vpop.f32.mrf.mxu0
  %v1028 = vadd.f32 0.0, %v1027
  %1029 = vmatmul.f32.gmra.mxu0 %v1002
  %v1030 = vpop.f32.mrf.mxu0
  %v1031 = vadd.f32 0.0, %v1030
  %1032 = vmatmul.f32.gmra.mxu0 %v1005
  %v1033 = vpop.f32.mrf.mxu0
  %v1034 = vadd.f32 0.0, %v1033
  %1035 = vmatmul.f32.gmra.mxu0 %v1008
  %v1036 = vpop.f32.mrf.mxu0
  %v1037 = vadd.f32 0.0, %v1036
  %1038 = vdwg.mxu0
  %v1040 = vsel %vm486, %v666, 0
  %v1043 = vsel %vm486, %v669, 0
  %v1046 = vsel %vm486, %v672, 0
  %v1049 = vsel %vm486, %v675, 0
  %1051 = vmatpush.msra.mxu0 0.0
  %1052 = vmatpush.msra.mxu0 0.0
  %1053 = vmatpush.msra.mxu0 0.0
  %1054 = vmatpush.msra.mxu0 0.0
  %1055 = vmatpush.msra.mxu0 0.0
  %1056 = vmatpush.msra.mxu0 0.0
  %1057 = vmatpush.msra.mxu0 0.0
  %1058 = vmatpush.msra.mxu0 0.0
  %1059 = vmatpush.msra.mxu0 0.0
  %1060 = vmatpush.msra.mxu0 0.0
  %1061 = vmatpush.msra.mxu0 0.0
  %1062 = vmatpush.msra.mxu0 0.0
  %1063 = vmatpush.msra.mxu0 0.0
  %1064 = vmatpush.msra.mxu0 0.0
  %1065 = vmatpush.msra.mxu0 %v678
  %1066 = vmatpush.msra.mxu0 %v677
  %1067 = vmatmul.f32.gmra.mxu0 %v1040
  %v1068 = vpop.f32.mrf.mxu0
  %v1069 = vadd.f32 %v1028, %v1068
  %1070 = vmatmul.f32.gmra.mxu0 %v1043
  %v1071 = vpop.f32.mrf.mxu0
  %v1072 = vadd.f32 %v1031, %v1071
  %1073 = vmatmul.f32.gmra.mxu0 %v1046
  %v1074 = vpop.f32.mrf.mxu0
  %v1075 = vadd.f32 %v1034, %v1074
  %1076 = vmatmul.f32.gmra.mxu0 %v1049
  %v1077 = vpop.f32.mrf.mxu0
  %v1078 = vadd.f32 %v1037, %v1077
  %1079 = vdwg.mxu0
  %v1080 = vadd.f32 %v247, %v1069
  %v1081 = vadd.f32 %v248, %v1072
  %v1082 = vadd.f32 %v249, %v1075
  %v1083 = vadd.f32 %v250, %v1078
  %v1084 = vld [vmem:[%s14] sm:$0x1]
  %v1086 = vperm.slane %v1084, 0
  %v1088 = vadd.f32 %v1080, %v1086
  %v1089 = vadd.f32 %v1081, %v1086
  %v1090 = vadd.f32 %v1082, %v1086
  %v1091 = vadd.f32 %v1083, %v1086
  %v1092 = vld [vmem:[%s16] sm:$0x1]
  %v1093 = vld [vmem:[%s17] sm:$0x1]
  %v1094 = vsel %vm141, %v1088, 0.0
  %1095 = vadd.xlane.f32.xlu0 %v1094
  %v1096 = vpop.xlane.xlu0 %1095
  %v1097 = vsel %vm141, %v1089, 0.0
  %1098 = vadd.xlane.f32.xlu0 %v1097
  %v1099 = vpop.xlane.xlu0 %1098
  %v1100 = vsel %vm141, %v1090, 0.0
  %1101 = vadd.xlane.f32.xlu0 %v1100
  %v1102 = vpop.xlane.xlu0 %1101
  %v1103 = vsel %vm141, %v1091, 0.0
  %1104 = vadd.xlane.f32.xlu0 %v1103
  %v1105 = vpop.xlane.xlu0 %1104
  %v1106 = vmul.f32 %v1096, %v160
  %v1107 = vmul.f32 %v1099, %v160
  %v1108 = vmul.f32 %v1102, %v160
  %v1109 = vmul.f32 %v1105, %v160
  %v1110 = vsub.f32 %v1088, %v1106
  %v1111 = vsub.f32 %v1089, %v1107
  %v1112 = vsub.f32 %v1090, %v1108
  %v1113 = vsub.f32 %v1091, %v1109
  %v1114 = vmul.f32 %v1110, %v1110
  %v1115 = vmul.f32 %v1111, %v1111
  %v1116 = vmul.f32 %v1112, %v1112
  %v1117 = vmul.f32 %v1113, %v1113
  %v1118 = vsel %vm141, %v1114, 0.0
  %1119 = vadd.xlane.f32.xlu0 %v1118
  %v1120 = vpop.xlane.xlu0 %1119
  %v1121 = vsel %vm141, %v1115, 0.0
  %1122 = vadd.xlane.f32.xlu0 %v1121
  %v1123 = vpop.xlane.xlu0 %1122
  %v1124 = vsel %vm141, %v1116, 0.0
  %1125 = vadd.xlane.f32.xlu0 %v1124
  %v1126 = vpop.xlane.xlu0 %1125
  %v1127 = vsel %vm141, %v1117, 0.0
  %1128 = vadd.xlane.f32.xlu0 %v1127
  %v1129 = vpop.xlane.xlu0 %1128
  %v1130 = vmul.f32 %v1120, %v160
  %v1131 = vmul.f32 %v1123, %v160
  %v1132 = vmul.f32 %v1126, %v160
  %v1133 = vmul.f32 %v1129, %v160
  %v1134 = vadd.f32 %v1130, 1e-05
  %v1135 = vadd.f32 %v1131, 1e-05
  %v1136 = vadd.f32 %v1132, 1e-05
  %v1137 = vadd.f32 %v1133, 1e-05
  %v1138 = vrsqrt.pop %v1134
  %v1139 = vmul.f32 %v1138, %v1134
  %v1140 = vmul.f32 %v1139, %v1138
  %v1141 = vmul.f32 0.5, %v1140
  %v1142 = vsub.f32 1.5, %v1141
  %v1143 = vmul.f32 %v1138, %v1142
  %vm1144 = vweird.f32 %v1134
  %vm1145 = vweird.f32 %v1138
  %vm1146 = vmor %vm1144, %vm1145
  %v1147 = vsel %vm1146, %v1138, %v1143
  %v1148 = vrsqrt.pop %v1135
  %v1149 = vmul.f32 %v1148, %v1135
  %v1150 = vmul.f32 %v1149, %v1148
  %v1151 = vmul.f32 0.5, %v1150
  %v1152 = vsub.f32 1.5, %v1151
  %v1153 = vmul.f32 %v1148, %v1152
  %vm1154 = vweird.f32 %v1135
  %vm1155 = vweird.f32 %v1148
  %vm1156 = vmor %vm1154, %vm1155
  %v1157 = vsel %vm1156, %v1148, %v1153
  %v1158 = vrsqrt.pop %v1136
  %v1159 = vmul.f32 %v1158, %v1136
  %v1160 = vmul.f32 %v1159, %v1158
  %v1161 = vmul.f32 0.5, %v1160
  %v1162 = vsub.f32 1.5, %v1161
  %v1163 = vmul.f32 %v1158, %v1162
  %vm1164 = vweird.f32 %v1136
  %vm1165 = vweird.f32 %v1158
  %vm1166 = vmor %vm1164, %vm1165
  %v1167 = vsel %vm1166, %v1158, %v1163
  %v1168 = vrsqrt.pop %v1137
  %v1169 = vmul.f32 %v1168, %v1137
  %v1170 = vmul.f32 %v1169, %v1168
  %v1171 = vmul.f32 0.5, %v1170
  %v1172 = vsub.f32 1.5, %v1171
  %v1173 = vmul.f32 %v1168, %v1172
  %vm1174 = vweird.f32 %v1137
  %vm1175 = vweird.f32 %v1168
  %vm1176 = vmor %vm1174, %vm1175
  %v1177 = vsel %vm1176, %v1168, %v1173
  %v1178 = vmul.f32 %v1110, %v1147
  %v1179 = vmul.f32 %v1111, %v1157
  %v1180 = vmul.f32 %v1112, %v1167
  %v1181 = vmul.f32 %v1113, %v1177
  %v1183 = vperm.slane %v1092, 0
  %v1185 = vmul.f32 %v1178, %v1183
  %v1186 = vmul.f32 %v1179, %v1183
  %v1187 = vmul.f32 %v1180, %v1183
  %v1188 = vmul.f32 %v1181, %v1183
  %v1190 = vperm.slane %v1093, 0
  %v1192 = vadd.f32 %v1185, %v1190
  %v1193 = vadd.f32 %v1186, %v1190
  %v1194 = vadd.f32 %v1187, %v1190
  %v1195 = vadd.f32 %v1188, %v1190
  %v1196 = vld [vmem:[%s18] sm:$0xff]
  %v1197 = vld [vmem:[%s18 + $0x8] sm:$0xff]
  %v1198 = vld [vmem:[%s18 + $0x10] sm:$0xff]
  %v1199 = vld [vmem:[%s18 + $0x18] sm:$0xff]
  %v1200 = vld [vmem:[%s19] sm:$0x1]
  %v1202 = vperm.slane %v1200, 0
  %v1205 = vsel %vm141, %v1192, 0
  %v1208 = vsel %vm141, %v1193, 0
  %v1211 = vsel %vm141, %v1194, 0
  %v1214 = vsel %vm141, %v1195, 0
  %1216 = vmatpush.msra.mxu0 0.0
  %1217 = vmatpush.msra.mxu0 0.0
  %1218 = vmatpush.msra.mxu0 0.0
  %1219 = vmatpush.msra.mxu0 0.0
  %1220 = vmatpush.msra.mxu0 0.0
  %1221 = vmatpush.msra.mxu0 0.0
  %1222 = vmatpush.msra.mxu0 0.0
  %1223 = vmatpush.msra.mxu0 0.0
  %1224 = vmatpush.msra.mxu0 0.0
  %1225 = vmatpush.msra.mxu0 0.0
  %1226 = vmatpush.msra.mxu0 0.0
  %1227 = vmatpush.msra.mxu0 0.0
  %1228 = vmatpush.msra.mxu0 %v1199
  %1229 = vmatpush.msra.mxu0 %v1198
  %1230 = vmatpush.msra.mxu0 %v1197
  %1231 = vmatpush.msra.mxu0 %v1196
  %1232 = vmatmul.f32.gmra.mxu0 %v1205
  %v1233 = vpop.f32.mrf.mxu0
  %v1234 = vadd.f32 %v1202, %v1233
  %1235 = vmatmul.f32.gmra.mxu0 %v1208
  %v1236 = vpop.f32.mrf.mxu0
  %v1237 = vadd.f32 %v1202, %v1236
  %1238 = vmatmul.f32.gmra.mxu0 %v1211
  %v1239 = vpop.f32.mrf.mxu0
  %v1240 = vadd.f32 %v1202, %v1239
  %1241 = vmatmul.f32.gmra.mxu0 %v1214
  %v1242 = vpop.f32.mrf.mxu0
  %v1243 = vadd.f32 %v1202, %v1242
  %1244 = vdwg.mxu0
  %v1245 = vmul.f32 %v1234, %v1234
  %v1246 = vmul.f32 %v1237, %v1237
  %v1247 = vmul.f32 %v1240, %v1240
  %v1248 = vmul.f32 %v1243, %v1243
  %v1249 = vmul.f32 %v1234, %v1245
  %v1250 = vmul.f32 %v1237, %v1246
  %v1251 = vmul.f32 %v1240, %v1247
  %v1252 = vmul.f32 %v1243, %v1248
  %v1253 = vmul.f32 %v1249, 0.044715
  %v1254 = vmul.f32 %v1250, 0.044715
  %v1255 = vmul.f32 %v1251, 0.044715
  %v1256 = vmul.f32 %v1252, 0.044715
  %v1257 = vadd.f32 %v1234, %v1253
  %v1258 = vadd.f32 %v1237, %v1254
  %v1259 = vadd.f32 %v1240, %v1255
  %v1260 = vadd.f32 %v1243, %v1256
  %v1261 = vmul.f32 %v1257, 0.7978846
  %v1262 = vmul.f32 %v1258, 0.7978846
  %v1263 = vmul.f32 %v1259, 0.7978846
  %v1264 = vmul.f32 %v1260, 0.7978846
  %v1265 = vtanh.pop %v1261
  %v1266 = vtanh.pop %v1262
  %v1267 = vtanh.pop %v1263
  %v1268 = vtanh.pop %v1264
  %v1269 = vadd.f32 %v1265, 1.0
  %v1270 = vadd.f32 %v1266, 1.0
  %v1271 = vadd.f32 %v1267, 1.0
  %v1272 = vadd.f32 %v1268, 1.0
  %v1273 = vmul.f32 %v1269, 0.5
  %v1274 = vmul.f32 %v1270, 0.5
  %v1275 = vmul.f32 %v1271, 0.5
  %v1276 = vmul.f32 %v1272, 0.5
  %v1277 = vmul.f32 %v1234, %v1273
  %v1278 = vmul.f32 %v1237, %v1274
  %v1279 = vmul.f32 %v1240, %v1275
  %v1280 = vmul.f32 %v1243, %v1276
  %v1281 = vld [vmem:[%s20] sm:$0xff]
  %v1282 = vld [vmem:[%s20 + $0x8] sm:$0xff]
  %v1283 = vld [vmem:[%s20 + $0x10] sm:$0xff]
  %v1284 = vld [vmem:[%s20 + $0x18] sm:$0xff]
  %v1285 = vld [vmem:[%s20 + $0x20] sm:$0xff]
  %v1286 = vld [vmem:[%s20 + $0x28] sm:$0xff]
  %v1287 = vld [vmem:[%s20 + $0x30] sm:$0xff]
  %v1288 = vld [vmem:[%s20 + $0x38] sm:$0xff]
  %v1289 = vld [vmem:[%s20 + $0x40] sm:$0xff]
  %v1290 = vld [vmem:[%s20 + $0x48] sm:$0xff]
  %v1291 = vld [vmem:[%s20 + $0x50] sm:$0xff]
  %v1292 = vld [vmem:[%s20 + $0x58] sm:$0xff]
  %v1293 = vld [vmem:[%s20 + $0x60] sm:$0xff]
  %v1294 = vld [vmem:[%s20 + $0x68] sm:$0xff]
  %v1295 = vld [vmem:[%s20 + $0x70] sm:$0xff]
  %v1296 = vld [vmem:[%s20 + $0x78] sm:$0xff]
  %v1297 = vld [vmem:[%s21] sm:$0x1]
  %v1299 = vperm.slane %v1297, 0
  %1301 = vmatpush.msra.mxu0 %v1296
  %1302 = vmatpush.msra.mxu0 %v1295
  %1303 = vmatpush.msra.mxu0 %v1294
  %1304 = vmatpush.msra.mxu0 %v1293
  %1305 = vmatpush.msra.mxu0 %v1292
  %1306 = vmatpush.msra.mxu0 %v1291
  %1307 = vmatpush.msra.mxu0 %v1290
  %1308 = vmatpush.msra.mxu0 %v1289
  %1309 = vmatpush.msra.mxu0 %v1288
  %1310 = vmatpush.msra.mxu0 %v1287
  %1311 = vmatpush.msra.mxu0 %v1286
  %1312 = vmatpush.msra.mxu0 %v1285
  %1313 = vmatpush.msra.mxu0 %v1284
  %1314 = vmatpush.msra.mxu0 %v1283
  %1315 = vmatpush.msra.mxu0 %v1282
  %1316 = vmatpush.msra.mxu0 %v1281
  %1317 = vmatmul.f32.gmra.mxu0 %v1277
  %v1318 = vpop.f32.mrf.mxu0
  %v1319 = vadd.f32 %v1299, %v1318
  %1320 = vmatmul.f32.gmra.mxu0 %v1278
  %v1321 = vpop.f32.mrf.mxu0
  %v1322 = vadd.f32 %v1299, %v1321
  %1323 = vmatmul.f32.gmra.mxu0 %v1279
  %v1324 = vpop.f32.mrf.mxu0
  %v1325 = vadd.f32 %v1299, %v1324
  %1326 = vmatmul.f32.gmra.mxu0 %v1280
  %v1327 = vpop.f32.mrf.mxu0
  %v1328 = vadd.f32 %v1299, %v1327
  %1329 = vdwg.mxu0
  %v1330 = vadd.f32 %v1088, %v1319
  %v1331 = vadd.f32 %v1089, %v1322
  %v1332 = vadd.f32 %v1090, %v1325
  %v1333 = vadd.f32 %v1091, %v1328
  %s1334 = scalar_lea.vmem %s5, 1
  %v1335 = vld [vmem:[%s1334] sm:$0x1]
  %s1336 = scalar_lea.vmem %s6, 1
  %v1337 = vld [vmem:[%s1336] sm:$0x1]
  %v1338 = vsel %vm141, %v1330, 0.0
  %1339 = vadd.xlane.f32.xlu0 %v1338
  %v1340 = vpop.xlane.xlu0 %1339
  %v1341 = vsel %vm141, %v1331, 0.0
  %1342 = vadd.xlane.f32.xlu0 %v1341
  %v1343 = vpop.xlane.xlu0 %1342
  %v1344 = vsel %vm141, %v1332, 0.0
  %1345 = vadd.xlane.f32.xlu0 %v1344
  %v1346 = vpop.xlane.xlu0 %1345
  %v1347 = vsel %vm141, %v1333, 0.0
  %1348 = vadd.xlane.f32.xlu0 %v1347
  %v1349 = vpop.xlane.xlu0 %1348
  %v1350 = vmul.f32 %v1340, %v160
  %v1351 = vmul.f32 %v1343, %v160
  %v1352 = vmul.f32 %v1346, %v160
  %v1353 = vmul.f32 %v1349, %v160
  %v1354 = vsub.f32 %v1330, %v1350
  %v1355 = vsub.f32 %v1331, %v1351
  %v1356 = vsub.f32 %v1332, %v1352
  %v1357 = vsub.f32 %v1333, %v1353
  %v1358 = vmul.f32 %v1354, %v1354
  %v1359 = vmul.f32 %v1355, %v1355
  %v1360 = vmul.f32 %v1356, %v1356
  %v1361 = vmul.f32 %v1357, %v1357
  %v1362 = vsel %vm141, %v1358, 0.0
  %1363 = vadd.xlane.f32.xlu0 %v1362
  %v1364 = vpop.xlane.xlu0 %1363
  %v1365 = vsel %vm141, %v1359, 0.0
  %1366 = vadd.xlane.f32.xlu0 %v1365
  %v1367 = vpop.xlane.xlu0 %1366
  %v1368 = vsel %vm141, %v1360, 0.0
  %1369 = vadd.xlane.f32.xlu0 %v1368
  %v1370 = vpop.xlane.xlu0 %1369
  %v1371 = vsel %vm141, %v1361, 0.0
  %1372 = vadd.xlane.f32.xlu0 %v1371
  %v1373 = vpop.xlane.xlu0 %1372
  %v1374 = vmul.f32 %v1364, %v160
  %v1375 = vmul.f32 %v1367, %v160
  %v1376 = vmul.f32 %v1370, %v160
  %v1377 = vmul.f32 %v1373, %v160
  %v1378 = vadd.f32 %v1374, 1e-05
  %v1379 = vadd.f32 %v1375, 1e-05
  %v1380 = vadd.f32 %v1376, 1e-05
  %v1381 = vadd.f32 %v1377, 1e-05
  %v1382 = vrsqrt.pop %v1378
  %v1383 = vmul.f32 %v1382, %v1378
  %v1384 = vmul.f32 %v1383, %v1382
  %v1385 = vmul.f32 0.5, %v1384
  %v1386 = vsub.f32 1.5, %v1385
  %v1387 = vmul.f32 %v1382, %v1386
  %vm1388 = vweird.f32 %v1378
  %vm1389 = vweird.f32 %v1382
  %vm1390 = vmor %vm1388, %vm1389
  %v1391 = vsel %vm1390, %v1382, %v1387
  %v1392 = vrsqrt.pop %v1379
  %v1393 = vmul.f32 %v1392, %v1379
  %v1394 = vmul.f32 %v1393, %v1392
  %v1395 = vmul.f32 0.5, %v1394
  %v1396 = vsub.f32 1.5, %v1395
  %v1397 = vmul.f32 %v1392, %v1396
  %vm1398 = vweird.f32 %v1379
  %vm1399 = vweird.f32 %v1392
  %vm1400 = vmor %vm1398, %vm1399
  %v1401 = vsel %vm1400, %v1392, %v1397
  %v1402 = vrsqrt.pop %v1380
  %v1403 = vmul.f32 %v1402, %v1380
  %v1404 = vmul.f32 %v1403, %v1402
  %v1405 = vmul.f32 0.5, %v1404
  %v1406 = vsub.f32 1.5, %v1405
  %v1407 = vmul.f32 %v1402, %v1406
  %vm1408 = vweird.f32 %v1380
  %vm1409 = vweird.f32 %v1402
  %vm1410 = vmor %vm1408, %vm1409
  %v1411 = vsel %vm1410, %v1402, %v1407
  %v1412 = vrsqrt.pop %v1381
  %v1413 = vmul.f32 %v1412, %v1381
  %v1414 = vmul.f32 %v1413, %v1412
  %v1415 = vmul.f32 0.5, %v1414
  %v1416 = vsub.f32 1.5, %v1415
  %v1417 = vmul.f32 %v1412, %v1416
  %vm1418 = vweird.f32 %v1381
  %vm1419 = vweird.f32 %v1412
  %vm1420 = vmor %vm1418, %vm1419
  %v1421 = vsel %vm1420, %v1412, %v1417
  %v1422 = vmul.f32 %v1354, %v1391
  %v1423 = vmul.f32 %v1355, %v1401
  %v1424 = vmul.f32 %v1356, %v1411
  %v1425 = vmul.f32 %v1357, %v1421
  %v1427 = vperm.slane %v1335, 0
  %v1429 = vmul.f32 %v1422, %v1427
  %v1430 = vmul.f32 %v1423, %v1427
  %v1431 = vmul.f32 %v1424, %v1427
  %v1432 = vmul.f32 %v1425, %v1427
  %v1434 = vperm.slane %v1337, 0
  %v1436 = vadd.f32 %v1429, %v1434
  %v1437 = vadd.f32 %v1430, %v1434
  %v1438 = vadd.f32 %v1431, %v1434
  %v1439 = vadd.f32 %v1432, %v1434
  %s1440 = scalar_lea.vmem %s7, 64
  %v1441 = vld [vmem:[%s1440] sm:$0xff]
  %v1442 = vld [vmem:[%s1440 + $0x8] sm:$0xff]
  %v1443 = vld [vmem:[%s1440 + $0x10] sm:$0xff]
  %v1444 = vld [vmem:[%s1440 + $0x18] sm:$0xff]
  %s1445 = scalar_lea.vmem %s10, 2
  %v1446 = vld [vmem:[%s1445] sm:$0x1]
  %v1448 = vperm.slane %v1446, 0
  %v1451 = vsel %vm141, %v1436, 0
  %v1454 = vsel %vm141, %v1437, 0
  %v1457 = vsel %vm141, %v1438, 0
  %v1460 = vsel %vm141, %v1439, 0
  %1462 = vmatpush.msra.mxu0 0.0
  %1463 = vmatpush.msra.mxu0 0.0
  %1464 = vmatpush.msra.mxu0 0.0
  %1465 = vmatpush.msra.mxu0 0.0
  %1466 = vmatpush.msra.mxu0 0.0
  %1467 = vmatpush.msra.mxu0 0.0
  %1468 = vmatpush.msra.mxu0 0.0
  %1469 = vmatpush.msra.mxu0 0.0
  %1470 = vmatpush.msra.mxu0 0.0
  %1471 = vmatpush.msra.mxu0 0.0
  %1472 = vmatpush.msra.mxu0 0.0
  %1473 = vmatpush.msra.mxu0 0.0
  %1474 = vmatpush.msra.mxu0 %v1444
  %1475 = vmatpush.msra.mxu0 %v1443
  %1476 = vmatpush.msra.mxu0 %v1442
  %1477 = vmatpush.msra.mxu0 %v1441
  %1478 = vmatmul.f32.gmra.mxu0 %v1451
  %v1479 = vpop.f32.mrf.mxu0
  %v1480 = vadd.f32 %v1448, %v1479
  %1481 = vmatmul.f32.gmra.mxu0 %v1454
  %v1482 = vpop.f32.mrf.mxu0
  %v1483 = vadd.f32 %v1448, %v1482
  %1484 = vmatmul.f32.gmra.mxu0 %v1457
  %v1485 = vpop.f32.mrf.mxu0
  %v1486 = vadd.f32 %v1448, %v1485
  %1487 = vmatmul.f32.gmra.mxu0 %v1460
  %v1488 = vpop.f32.mrf.mxu0
  %v1489 = vadd.f32 %v1448, %v1488
  %1490 = vdwg.mxu0
  %s1491 = scalar_lea.vmem %s8, 64
  %v1492 = vld [vmem:[%s1491] sm:$0xff]
  %v1493 = vld [vmem:[%s1491 + $0x8] sm:$0xff]
  %v1494 = vld [vmem:[%s1491 + $0x10] sm:$0xff]
  %v1495 = vld [vmem:[%s1491 + $0x18] sm:$0xff]
  %s1496 = scalar_lea.vmem %s11, 2
  %v1497 = vld [vmem:[%s1496] sm:$0x1]
  %v1499 = vperm.slane %v1497, 0
  %1501 = vmatpush.msra.mxu0 0.0
  %1502 = vmatpush.msra.mxu0 0.0
  %1503 = vmatpush.msra.mxu0 0.0
  %1504 = vmatpush.msra.mxu0 0.0
  %1505 = vmatpush.msra.mxu0 0.0
  %1506 = vmatpush.msra.mxu0 0.0
  %1507 = vmatpush.msra.mxu0 0.0
  %1508 = vmatpush.msra.mxu0 0.0
  %1509 = vmatpush.msra.mxu0 0.0
  %1510 = vmatpush.msra.mxu0 0.0
  %1511 = vmatpush.msra.mxu0 0.0
  %1512 = vmatpush.msra.mxu0 0.0
  %1513 = vmatpush.msra.mxu0 %v1495
  %1514 = vmatpush.msra.mxu0 %v1494
  %1515 = vmatpush.msra.mxu0 %v1493
  %1516 = vmatpush.msra.mxu0 %v1492
  %1517 = vmatmul.f32.gmra.mxu0 %v1451
  %v1518 = vpop.f32.mrf.mxu0
  %v1519 = vadd.f32 %v1499, %v1518
  %1520 = vmatmul.f32.gmra.mxu0 %v1454
  %v1521 = vpop.f32.mrf.mxu0
  %v1522 = vadd.f32 %v1499, %v1521
  %1523 = vmatmul.f32.gmra.mxu0 %v1457
  %v1524 = vpop.f32.mrf.mxu0
  %v1525 = vadd.f32 %v1499, %v1524
  %1526 = vmatmul.f32.gmra.mxu0 %v1460
  %v1527 = vpop.f32.mrf.mxu0
  %v1528 = vadd.f32 %v1499, %v1527
  %1529 = vdwg.mxu0
  %s1530 = scalar_lea.vmem %s9, 64
  %v1531 = vld [vmem:[%s1530] sm:$0xff]
  %v1532 = vld [vmem:[%s1530 + $0x8] sm:$0xff]
  %v1533 = vld [vmem:[%s1530 + $0x10] sm:$0xff]
  %v1534 = vld [vmem:[%s1530 + $0x18] sm:$0xff]
  %s1535 = scalar_lea.vmem %s12, 2
  %v1536 = vld [vmem:[%s1535] sm:$0x1]
  %v1538 = vperm.slane %v1536, 0
  %1540 = vmatpush.msra.mxu0 0.0
  %1541 = vmatpush.msra.mxu0 0.0
  %1542 = vmatpush.msra.mxu0 0.0
  %1543 = vmatpush.msra.mxu0 0.0
  %1544 = vmatpush.msra.mxu0 0.0
  %1545 = vmatpush.msra.mxu0 0.0
  %1546 = vmatpush.msra.mxu0 0.0
  %1547 = vmatpush.msra.mxu0 0.0
  %1548 = vmatpush.msra.mxu0 0.0
  %1549 = vmatpush.msra.mxu0 0.0
  %1550 = vmatpush.msra.mxu0 0.0
  %1551 = vmatpush.msra.mxu0 0.0
  %1552 = vmatpush.msra.mxu0 %v1534
  %1553 = vmatpush.msra.mxu0 %v1533
  %1554 = vmatpush.msra.mxu0 %v1532
  %1555 = vmatpush.msra.mxu0 %v1531
  %1556 = vmatmul.f32.gmra.mxu0 %v1451
  %v1557 = vpop.f32.mrf.mxu0
  %v1558 = vadd.f32 %v1538, %v1557
  %1559 = vmatmul.f32.gmra.mxu0 %v1454
  %v1560 = vpop.f32.mrf.mxu0
  %v1561 = vadd.f32 %v1538, %v1560
  %1562 = vmatmul.f32.gmra.mxu0 %v1457
  %v1563 = vpop.f32.mrf.mxu0
  %v1564 = vadd.f32 %v1538, %v1563
  %1565 = vmatmul.f32.gmra.mxu0 %v1460
  %v1566 = vpop.f32.mrf.mxu0
  %v1567 = vadd.f32 %v1538, %v1566
  %1568 = vdwg.mxu0
  %v1569 = vmul.f32 %v1480, 0.25
  %v1570 = vmul.f32 %v1483, 0.25
  %v1571 = vmul.f32 %v1486, 0.25
  %v1572 = vmul.f32 %v1489, 0.25
  %s1573 = scalar_lea.vmem %s15, 64
  %v1574 = vld [vmem:[%s1573] sm:$0xff]
  %v1575 = vld [vmem:[%s1573 + $0x8] sm:$0xff]
  %v1576 = vld [vmem:[%s1573 + $0x10] sm:$0xff]
  %v1577 = vld [vmem:[%s1573 + $0x18] sm:$0xff]
  %v1579 = vsel %vm486, %v1569, 0
  %v1582 = vsel %vm486, %v1570, 0
  %v1585 = vsel %vm486, %v1571, 0
  %v1588 = vsel %vm486, %v1572, 0
  %v1591 = vsel %vm486, %v1519, 0
  %v1594 = vsel %vm486, %v1522, 0
  %v1597 = vsel %vm486, %v1525, 0
  %v1600 = vsel %vm486, %v1528, 0
  %1602 = vmatpush.xpose.msra.mxu0 0.0
  %1603 = vmatpush.xpose.msra.mxu0 0.0
  %1604 = vmatpush.xpose.msra.mxu0 0.0
  %1605 = vmatpush.xpose.msra.mxu0 0.0
  %1606 = vmatpush.xpose.msra.mxu0 0.0
  %1607 = vmatpush.xpose.msra.mxu0 0.0
  %1608 = vmatpush.xpose.msra.mxu0 0.0
  %1609 = vmatpush.xpose.msra.mxu0 0.0
  %1610 = vmatpush.xpose.msra.mxu0 0.0
  %1611 = vmatpush.xpose.msra.mxu0 0.0
  %1612 = vmatpush.xpose.msra.mxu0 0.0
  %1613 = vmatpush.xpose.msra.mxu0 0.0
  %1614 = vmatpush.xpose.msra.mxu0 %v1600
  %1615 = vmatpush.xpose.msra.mxu0 %v1597
  %1616 = vmatpush.xpose.msra.mxu0 %v1594
  %1617 = vmatpush.xpose.msra.mxu0 %v1591
  %1618 = vmatmul.f32.gmra.mxu0 %v1579
  %v1619 = vpop.f32.mrf.mxu0
  %v1620 = vadd.f32 %v1574, %v1619
  %1621 = vmatmul.f32.gmra.mxu0 %v1582
  %v1622 = vpop.f32.mrf.mxu0
  %v1623 = vadd.f32 %v1575, %v1622
  %1624 = vmatmul.f32.gmra.mxu0 %v1585
  %v1625 = vpop.f32.mrf.mxu0
  %v1626 = vadd.f32 %v1576, %v1625
  %1627 = vmatmul.f32.gmra.mxu0 %v1588
  %v1628 = vpop.f32.mrf.mxu0
  %v1629 = vadd.f32 %v1577, %v1628
  %1630 = vdwg.mxu0
  %v1631 = vsel %vm141, %v1620, -inf
  %1632 = vmax.xlane.f32.xlu0 %v1631
  %v1633 = vpop.xlane.xlu0 %1632
  %v1634 = vsel %vm141, %v1623, -inf
  %1635 = vmax.xlane.f32.xlu0 %v1634
  %v1636 = vpop.xlane.xlu0 %1635
  %v1637 = vsel %vm141, %v1626, -inf
  %1638 = vmax.xlane.f32.xlu0 %v1637
  %v1639 = vpop.xlane.xlu0 %1638
  %v1640 = vsel %vm141, %v1629, -inf
  %1641 = vmax.xlane.f32.xlu0 %v1640
  %v1642 = vpop.xlane.xlu0 %1641
  %v1643 = vsub.f32 %v1620, %v1633
  %v1644 = vsub.f32 %v1623, %v1636
  %v1645 = vsub.f32 %v1626, %v1639
  %v1646 = vsub.f32 %v1629, %v1642
  %v1647 = vmul.f32 %v1643, 1.442695
  %v1648 = vpow.pop %v1647
  %v1649 = vmul.f32 %v1644, 1.442695
  %v1650 = vpow.pop %v1649
  %v1651 = vmul.f32 %v1645, 1.442695
  %v1652 = vpow.pop %v1651
  %v1653 = vmul.f32 %v1646, 1.442695
  %v1654 = vpow.pop %v1653
  %v1655 = vsel %vm141, %v1648, 0.0
  %1656 = vadd.xlane.f32.xlu0 %v1655
  %v1657 = vpop.xlane.xlu0 %1656
  %v1658 = vsel %vm141, %v1650, 0.0
  %1659 = vadd.xlane.f32.xlu0 %v1658
  %v1660 = vpop.xlane.xlu0 %1659
  %v1661 = vsel %vm141, %v1652, 0.0
  %1662 = vadd.xlane.f32.xlu0 %v1661
  %v1663 = vpop.xlane.xlu0 %1662
  %v1664 = vsel %vm141, %v1654, 0.0
  %1665 = vadd.xlane.f32.xlu0 %v1664
  %v1666 = vpop.xlane.xlu0 %1665
  %v1667 = vrcp.pop %v1657
  %v1668 = vmul.f32 %v1657, %v1667
  %v1669 = vsub.f32 1.0, %v1668
  %v1670 = vmul.f32 %v1667, %v1669
  %v1671 = vadd.f32 %v1667, %v1670
  %vm1672 = vweird.f32 %v1657
  %vm1673 = vweird.f32 %v1667
  %vm1674 = vmor %vm1672, %vm1673
  %v1675 = vsel %vm1674, %v1667, %v1671
  %v1676 = vand.u32 2147483647, %v1657
  %vm1677 = vcmp.eq.f32.partialorder %v1676, 8.507059e+37
  %v1678 = vand.u32 %v1657, 2147483648
  %v1679 = vor.u32 1.1754944e-38, %v1678
  %v1680 = vsel %vm1677, %v1679, %v1675
  %v1681 = vrcp.pop %v1660
  %v1682 = vmul.f32 %v1660, %v1681
  %v1683 = vsub.f32 1.0, %v1682
  %v1684 = vmul.f32 %v1681, %v1683
  %v1685 = vadd.f32 %v1681, %v1684
  %vm1686 = vweird.f32 %v1660
  %vm1687 = vweird.f32 %v1681
  %vm1688 = vmor %vm1686, %vm1687
  %v1689 = vsel %vm1688, %v1681, %v1685
  %v1690 = vand.u32 2147483647, %v1660
  %vm1691 = vcmp.eq.f32.partialorder %v1690, 8.507059e+37
  %v1692 = vand.u32 %v1660, 2147483648
  %v1693 = vor.u32 1.1754944e-38, %v1692
  %v1694 = vsel %vm1691, %v1693, %v1689
  %v1695 = vrcp.pop %v1663
  %v1696 = vmul.f32 %v1663, %v1695
  %v1697 = vsub.f32 1.0, %v1696
  %v1698 = vmul.f32 %v1695, %v1697
  %v1699 = vadd.f32 %v1695, %v1698
  %vm1700 = vweird.f32 %v1663
  %vm1701 = vweird.f32 %v1695
  %vm1702 = vmor %vm1700, %vm1701
  %v1703 = vsel %vm1702, %v1695, %v1699
  %v1704 = vand.u32 2147483647, %v1663
  %vm1705 = vcmp.eq.f32.partialorder %v1704, 8.507059e+37
  %v1706 = vand.u32 %v1663, 2147483648
  %v1707 = vor.u32 1.1754944e-38, %v1706
  %v1708 = vsel %vm1705, %v1707, %v1703
  %v1709 = vrcp.pop %v1666
  %v1710 = vmul.f32 %v1666, %v1709
  %v1711 = vsub.f32 1.0, %v1710
  %v1712 = vmul.f32 %v1709, %v1711
  %v1713 = vadd.f32 %v1709, %v1712
  %vm1714 = vweird.f32 %v1666
  %vm1715 = vweird.f32 %v1709
  %vm1716 = vmor %vm1714, %vm1715
  %v1717 = vsel %vm1716, %v1709, %v1713
  %v1718 = vand.u32 2147483647, %v1666
  %vm1719 = vcmp.eq.f32.partialorder %v1718, 8.507059e+37
  %v1720 = vand.u32 %v1666, 2147483648
  %v1721 = vor.u32 1.1754944e-38, %v1720
  %v1722 = vsel %vm1719, %v1721, %v1717
  %v1723 = vmul.f32 %v1648, %v1680
  %v1724 = vmul.f32 %v1650, %v1694
  %v1725 = vmul.f32 %v1652, %v1708
  %v1726 = vmul.f32 %v1654, %v1722
  %v1728 = vsel %vm141, %v1723, 0
  %v1731 = vsel %vm141, %v1724, 0
  %v1734 = vsel %vm141, %v1725, 0
  %v1737 = vsel %vm141, %v1726, 0
  %1739 = vmatpush.msra.mxu0 0.0
  %1740 = vmatpush.msra.mxu0 0.0
  %1741 = vmatpush.msra.mxu0 0.0
  %1742 = vmatpush.msra.mxu0 0.0
  %1743 = vmatpush.msra.mxu0 0.0
  %1744 = vmatpush.msra.mxu0 0.0
  %1745 = vmatpush.msra.mxu0 0.0
  %1746 = vmatpush.msra.mxu0 0.0
  %1747 = vmatpush.msra.mxu0 0.0
  %1748 = vmatpush.msra.mxu0 0.0
  %1749 = vmatpush.msra.mxu0 0.0
  %1750 = vmatpush.msra.mxu0 0.0
  %1751 = vmatpush.msra.mxu0 %v1567
  %1752 = vmatpush.msra.mxu0 %v1564
  %1753 = vmatpush.msra.mxu0 %v1561
  %1754 = vmatpush.msra.mxu0 %v1558
  %1755 = vmatmul.f32.gmra.mxu0 %v1728
  %v1756 = vpop.f32.mrf.mxu0
  %v1757 = vadd.f32 0.0, %v1756
  %1758 = vmatmul.f32.gmra.mxu0 %v1731
  %v1759 = vpop.f32.mrf.mxu0
  %v1760 = vadd.f32 0.0, %v1759
  %1761 = vmatmul.f32.gmra.mxu0 %v1734
  %v1762 = vpop.f32.mrf.mxu0
  %v1763 = vadd.f32 0.0, %v1762
  %1764 = vmatmul.f32.gmra.mxu0 %v1737
  %v1765 = vpop.f32.mrf.mxu0
  %v1766 = vadd.f32 0.0, %v1765
  %1767 = vdwg.mxu0
  %s1768 = scalar_lea.vmem %s13, 32
  %v1769 = vld [vmem:[%s1768] sm:$0xff]
  %v1770 = vld [vmem:[%s1768 + $0x8] sm:$0xff]
  %s1771 = scalar_lea.vmem %s7, 96
  %v1772 = vld [vmem:[%s1771] sm:$0xff]
  %v1773 = vld [vmem:[%s1771 + $0x8] sm:$0xff]
  %v1774 = vld [vmem:[%s1771 + $0x10] sm:$0xff]
  %v1775 = vld [vmem:[%s1771 + $0x18] sm:$0xff]
  %s1776 = scalar_lea.vmem %s10, 3
  %v1777 = vld [vmem:[%s1776] sm:$0x1]
  %v1779 = vperm.slane %v1777, 0
  %1781 = vmatpush.msra.mxu0 0.0
  %1782 = vmatpush.msra.mxu0 0.0
  %1783 = vmatpush.msra.mxu0 0.0
  %1784 = vmatpush.msra.mxu0 0.0
  %1785 = vmatpush.msra.mxu0 0.0
  %1786 = vmatpush.msra.mxu0 0.0
  %1787 = vmatpush.msra.mxu0 0.0
  %1788 = vmatpush.msra.mxu0 0.0
  %1789 = vmatpush.msra.mxu0 0.0
  %1790 = vmatpush.msra.mxu0 0.0
  %1791 = vmatpush.msra.mxu0 0.0
  %1792 = vmatpush.msra.mxu0 0.0
  %1793 = vmatpush.msra.mxu0 %v1775
  %1794 = vmatpush.msra.mxu0 %v1774
  %1795 = vmatpush.msra.mxu0 %v1773
  %1796 = vmatpush.msra.mxu0 %v1772
  %1797 = vmatmul.f32.gmra.mxu0 %v1451
  %v1798 = vpop.f32.mrf.mxu0
  %v1799 = vadd.f32 %v1779, %v1798
  %1800 = vmatmul.f32.gmra.mxu0 %v1454
  %v1801 = vpop.f32.mrf.mxu0
  %v1802 = vadd.f32 %v1779, %v1801
  %1803 = vmatmul.f32.gmra.mxu0 %v1457
  %v1804 = vpop.f32.mrf.mxu0
  %v1805 = vadd.f32 %v1779, %v1804
  %1806 = vmatmul.f32.gmra.mxu0 %v1460
  %v1807 = vpop.f32.mrf.mxu0
  %v1808 = vadd.f32 %v1779, %v1807
  %1809 = vdwg.mxu0
  %s1810 = scalar_lea.vmem %s8, 96
  %v1811 = vld [vmem:[%s1810] sm:$0xff]
  %v1812 = vld [vmem:[%s1810 + $0x8] sm:$0xff]
  %v1813 = vld [vmem:[%s1810 + $0x10] sm:$0xff]
  %v1814 = vld [vmem:[%s1810 + $0x18] sm:$0xff]
  %s1815 = scalar_lea.vmem %s11, 3
  %v1816 = vld [vmem:[%s1815] sm:$0x1]
  %v1818 = vperm.slane %v1816, 0
  %1820 = vmatpush.msra.mxu0 0.0
  %1821 = vmatpush.msra.mxu0 0.0
  %1822 = vmatpush.msra.mxu0 0.0
  %1823 = vmatpush.msra.mxu0 0.0
  %1824 = vmatpush.msra.mxu0 0.0
  %1825 = vmatpush.msra.mxu0 0.0
  %1826 = vmatpush.msra.mxu0 0.0
  %1827 = vmatpush.msra.mxu0 0.0
  %1828 = vmatpush.msra.mxu0 0.0
  %1829 = vmatpush.msra.mxu0 0.0
  %1830 = vmatpush.msra.mxu0 0.0
  %1831 = vmatpush.msra.mxu0 0.0
  %1832 = vmatpush.msra.mxu0 %v1814
  %1833 = vmatpush.msra.mxu0 %v1813
  %1834 = vmatpush.msra.mxu0 %v1812
  %1835 = vmatpush.msra.mxu0 %v1811
  %1836 = vmatmul.f32.gmra.mxu0 %v1451
  %v1837 = vpop.f32.mrf.mxu0
  %v1838 = vadd.f32 %v1818, %v1837
  %1839 = vmatmul.f32.gmra.mxu0 %v1454
  %v1840 = vpop.f32.mrf.mxu0
  %v1841 = vadd.f32 %v1818, %v1840
  %1842 = vmatmul.f32.gmra.mxu0 %v1457
  %v1843 = vpop.f32.mrf.mxu0
  %v1844 = vadd.f32 %v1818, %v1843
  %1845 = vmatmul.f32.gmra.mxu0 %v1460
  %v1846 = vpop.f32.mrf.mxu0
  %v1847 = vadd.f32 %v1818, %v1846
  %1848 = vdwg.mxu0
  %s1849 = scalar_lea.vmem %s9, 96
  %v1850 = vld [vmem:[%s1849] sm:$0xff]
  %v1851 = vld [vmem:[%s1849 + $0x8] sm:$0xff]
  %v1852 = vld [vmem:[%s1849 + $0x10] sm:$0xff]
  %v1853 = vld [vmem:[%s1849 + $0x18] sm:$0xff]
  %s1854 = scalar_lea.vmem %s12, 3
  %v1855 = vld [vmem:[%s1854] sm:$0x1]
  %v1857 = vperm.slane %v1855, 0
  %1859 = vmatpush.msra.mxu0 0.0
  %1860 = vmatpush.msra.mxu0 0.0
  %1861 = vmatpush.msra.mxu0 0.0
  %1862 = vmatpush.msra.mxu0 0.0
  %1863 = vmatpush.msra.mxu0 0.0
  %1864 = vmatpush.msra.mxu0 0.0
  %1865 = vmatpush.msra.mxu0 0.0
  %1866 = vmatpush.msra.mxu0 0.0
  %1867 = vmatpush.msra.mxu0 0.0
  %1868 = vmatpush.msra.mxu0 0.0
  %1869 = vmatpush.msra.mxu0 0.0
  %1870 = vmatpush.msra.mxu0 0.0
  %1871 = vmatpush.msra.mxu0 %v1853
  %1872 = vmatpush.msra.mxu0 %v1852
  %1873 = vmatpush.msra.mxu0 %v1851
  %1874 = vmatpush.msra.mxu0 %v1850
  %1875 = vmatmul.f32.gmra.mxu0 %v1451
  %v1876 = vpop.f32.mrf.mxu0
  %v1877 = vadd.f32 %v1857, %v1876
  %1878 = vmatmul.f32.gmra.mxu0 %v1454
  %v1879 = vpop.f32.mrf.mxu0
  %v1880 = vadd.f32 %v1857, %v1879
  %1881 = vmatmul.f32.gmra.mxu0 %v1457
  %v1882 = vpop.f32.mrf.mxu0
  %v1883 = vadd.f32 %v1857, %v1882
  %1884 = vmatmul.f32.gmra.mxu0 %v1460
  %v1885 = vpop.f32.mrf.mxu0
  %v1886 = vadd.f32 %v1857, %v1885
  %1887 = vdwg.mxu0
  %v1888 = vmul.f32 %v1799, 0.25
  %v1889 = vmul.f32 %v1802, 0.25
  %v1890 = vmul.f32 %v1805, 0.25
  %v1891 = vmul.f32 %v1808, 0.25
  %s1892 = scalar_lea.vmem %s15, 96
  %v1893 = vld [vmem:[%s1892] sm:$0xff]
  %v1894 = vld [vmem:[%s1892 + $0x8] sm:$0xff]
  %v1895 = vld [vmem:[%s1892 + $0x10] sm:$0xff]
  %v1896 = vld [vmem:[%s1892 + $0x18] sm:$0xff]
  %v1898 = vsel %vm486, %v1888, 0
  %v1901 = vsel %vm486, %v1889, 0
  %v1904 = vsel %vm486, %v1890, 0
  %v1907 = vsel %vm486, %v1891, 0
  %v1910 = vsel %vm486, %v1838, 0
  %v1913 = vsel %vm486, %v1841, 0
  %v1916 = vsel %vm486, %v1844, 0
  %v1919 = vsel %vm486, %v1847, 0
  %1921 = vmatpush.xpose.msra.mxu0 0.0
  %1922 = vmatpush.xpose.msra.mxu0 0.0
  %1923 = vmatpush.xpose.msra.mxu0 0.0
  %1924 = vmatpush.xpose.msra.mxu0 0.0
  %1925 = vmatpush.xpose.msra.mxu0 0.0
  %1926 = vmatpush.xpose.msra.mxu0 0.0
  %1927 = vmatpush.xpose.msra.mxu0 0.0
  %1928 = vmatpush.xpose.msra.mxu0 0.0
  %1929 = vmatpush.xpose.msra.mxu0 0.0
  %1930 = vmatpush.xpose.msra.mxu0 0.0
  %1931 = vmatpush.xpose.msra.mxu0 0.0
  %1932 = vmatpush.xpose.msra.mxu0 0.0
  %1933 = vmatpush.xpose.msra.mxu0 %v1919
  %1934 = vmatpush.xpose.msra.mxu0 %v1916
  %1935 = vmatpush.xpose.msra.mxu0 %v1913
  %1936 = vmatpush.xpose.msra.mxu0 %v1910
  %1937 = vmatmul.f32.gmra.mxu0 %v1898
  %v1938 = vpop.f32.mrf.mxu0
  %v1939 = vadd.f32 %v1893, %v1938
  %1940 = vmatmul.f32.gmra.mxu0 %v1901
  %v1941 = vpop.f32.mrf.mxu0
  %v1942 = vadd.f32 %v1894, %v1941
  %1943 = vmatmul.f32.gmra.mxu0 %v1904
  %v1944 = vpop.f32.mrf.mxu0
  %v1945 = vadd.f32 %v1895, %v1944
  %1946 = vmatmul.f32.gmra.mxu0 %v1907
  %v1947 = vpop.f32.mrf.mxu0
  %v1948 = vadd.f32 %v1896, %v1947
  %1949 = vdwg.mxu0
  %v1950 = vsel %vm141, %v1939, -inf
  %1951 = vmax.xlane.f32.xlu0 %v1950
  %v1952 = vpop.xlane.xlu0 %1951
  %v1953 = vsel %vm141, %v1942, -inf
  %1954 = vmax.xlane.f32.xlu0 %v1953
  %v1955 = vpop.xlane.xlu0 %1954
  %v1956 = vsel %vm141, %v1945, -inf
  %1957 = vmax.xlane.f32.xlu0 %v1956
  %v1958 = vpop.xlane.xlu0 %1957
  %v1959 = vsel %vm141, %v1948, -inf
  %1960 = vmax.xlane.f32.xlu0 %v1959
  %v1961 = vpop.xlane.xlu0 %1960
  %v1962 = vsub.f32 %v1939, %v1952
  %v1963 = vsub.f32 %v1942, %v1955
  %v1964 = vsub.f32 %v1945, %v1958
  %v1965 = vsub.f32 %v1948, %v1961
  %v1966 = vmul.f32 %v1962, 1.442695
  %v1967 = vpow.pop %v1966
  %v1968 = vmul.f32 %v1963, 1.442695
  %v1969 = vpow.pop %v1968
  %v1970 = vmul.f32 %v1964, 1.442695
  %v1971 = vpow.pop %v1970
  %v1972 = vmul.f32 %v1965, 1.442695
  %v1973 = vpow.pop %v1972
  %v1974 = vsel %vm141, %v1967, 0.0
  %1975 = vadd.xlane.f32.xlu0 %v1974
  %v1976 = vpop.xlane.xlu0 %1975
  %v1977 = vsel %vm141, %v1969, 0.0
  %1978 = vadd.xlane.f32.xlu0 %v1977
  %v1979 = vpop.xlane.xlu0 %1978
  %v1980 = vsel %vm141, %v1971, 0.0
  %1981 = vadd.xlane.f32.xlu0 %v1980
  %v1982 = vpop.xlane.xlu0 %1981
  %v1983 = vsel %vm141, %v1973, 0.0
  %1984 = vadd.xlane.f32.xlu0 %v1983
  %v1985 = vpop.xlane.xlu0 %1984
  %v1986 = vrcp.pop %v1976
  %v1987 = vmul.f32 %v1976, %v1986
  %v1988 = vsub.f32 1.0, %v1987
  %v1989 = vmul.f32 %v1986, %v1988
  %v1990 = vadd.f32 %v1986, %v1989
  %vm1991 = vweird.f32 %v1976
  %vm1992 = vweird.f32 %v1986
  %vm1993 = vmor %vm1991, %vm1992
  %v1994 = vsel %vm1993, %v1986, %v1990
  %v1995 = vand.u32 2147483647, %v1976
  %vm1996 = vcmp.eq.f32.partialorder %v1995, 8.507059e+37
  %v1997 = vand.u32 %v1976, 2147483648
  %v1998 = vor.u32 1.1754944e-38, %v1997
  %v1999 = vsel %vm1996, %v1998, %v1994
  %v2000 = vrcp.pop %v1979
  %v2001 = vmul.f32 %v1979, %v2000
  %v2002 = vsub.f32 1.0, %v2001
  %v2003 = vmul.f32 %v2000, %v2002
  %v2004 = vadd.f32 %v2000, %v2003
  %vm2005 = vweird.f32 %v1979
  %vm2006 = vweird.f32 %v2000
  %vm2007 = vmor %vm2005, %vm2006
  %v2008 = vsel %vm2007, %v2000, %v2004
  %v2009 = vand.u32 2147483647, %v1979
  %vm2010 = vcmp.eq.f32.partialorder %v2009, 8.507059e+37
  %v2011 = vand.u32 %v1979, 2147483648
  %v2012 = vor.u32 1.1754944e-38, %v2011
  %v2013 = vsel %vm2010, %v2012, %v2008
  %v2014 = vrcp.pop %v1982
  %v2015 = vmul.f32 %v1982, %v2014
  %v2016 = vsub.f32 1.0, %v2015
  %v2017 = vmul.f32 %v2014, %v2016
  %v2018 = vadd.f32 %v2014, %v2017
  %vm2019 = vweird.f32 %v1982
  %vm2020 = vweird.f32 %v2014
  %vm2021 = vmor %vm2019, %vm2020
  %v2022 = vsel %vm2021, %v2014, %v2018
  %v2023 = vand.u32 2147483647, %v1982
  %vm2024 = vcmp.eq.f32.partialorder %v2023, 8.507059e+37
  %v2025 = vand.u32 %v1982, 2147483648
  %v2026 = vor.u32 1.1754944e-38, %v2025
  %v2027 = vsel %vm2024, %v2026, %v2022
  %v2028 = vrcp.pop %v1985
  %v2029 = vmul.f32 %v1985, %v2028
  %v2030 = vsub.f32 1.0, %v2029
  %v2031 = vmul.f32 %v2028, %v2030
  %v2032 = vadd.f32 %v2028, %v2031
  %vm2033 = vweird.f32 %v1985
  %vm2034 = vweird.f32 %v2028
  %vm2035 = vmor %vm2033, %vm2034
  %v2036 = vsel %vm2035, %v2028, %v2032
  %v2037 = vand.u32 2147483647, %v1985
  %vm2038 = vcmp.eq.f32.partialorder %v2037, 8.507059e+37
  %v2039 = vand.u32 %v1985, 2147483648
  %v2040 = vor.u32 1.1754944e-38, %v2039
  %v2041 = vsel %vm2038, %v2040, %v2036
  %v2042 = vmul.f32 %v1967, %v1999
  %v2043 = vmul.f32 %v1969, %v2013
  %v2044 = vmul.f32 %v1971, %v2027
  %v2045 = vmul.f32 %v1973, %v2041
  %v2047 = vsel %vm141, %v2042, 0
  %v2050 = vsel %vm141, %v2043, 0
  %v2053 = vsel %vm141, %v2044, 0
  %v2056 = vsel %vm141, %v2045, 0
  %2058 = vmatpush.msra.mxu0 0.0
  %2059 = vmatpush.msra.mxu0 0.0
  %2060 = vmatpush.msra.mxu0 0.0
  %2061 = vmatpush.msra.mxu0 0.0
  %2062 = vmatpush.msra.mxu0 0.0
  %2063 = vmatpush.msra.mxu0 0.0
  %2064 = vmatpush.msra.mxu0 0.0
  %2065 = vmatpush.msra.mxu0 0.0
  %2066 = vmatpush.msra.mxu0 0.0
  %2067 = vmatpush.msra.mxu0 0.0
  %2068 = vmatpush.msra.mxu0 0.0
  %2069 = vmatpush.msra.mxu0 0.0
  %2070 = vmatpush.msra.mxu0 %v1886
  %2071 = vmatpush.msra.mxu0 %v1883
  %2072 = vmatpush.msra.mxu0 %v1880
  %2073 = vmatpush.msra.mxu0 %v1877
  %2074 = vmatmul.f32.gmra.mxu0 %v2047
  %v2075 = vpop.f32.mrf.mxu0
  %v2076 = vadd.f32 0.0, %v2075
  %2077 = vmatmul.f32.gmra.mxu0 %v2050
  %v2078 = vpop.f32.mrf.mxu0
  %v2079 = vadd.f32 0.0, %v2078
  %2080 = vmatmul.f32.gmra.mxu0 %v2053
  %v2081 = vpop.f32.mrf.mxu0
  %v2082 = vadd.f32 0.0, %v2081
  %2083 = vmatmul.f32.gmra.mxu0 %v2056
  %v2084 = vpop.f32.mrf.mxu0
  %v2085 = vadd.f32 0.0, %v2084
  %2086 = vdwg.mxu0
  %s2087 = scalar_lea.vmem %s13, 48
  %v2088 = vld [vmem:[%s2087] sm:$0xff]
  %v2089 = vld [vmem:[%s2087 + $0x8] sm:$0xff]
  %v2091 = vsel %vm486, %v2076, 0
  %v2094 = vsel %vm486, %v2079, 0
  %v2097 = vsel %vm486, %v2082, 0
  %v2100 = vsel %vm486, %v2085, 0
  %2102 = vmatpush.msra.mxu0 0.0
  %2103 = vmatpush.msra.mxu0 0.0
  %2104 = vmatpush.msra.mxu0 0.0
  %2105 = vmatpush.msra.mxu0 0.0
  %2106 = vmatpush.msra.mxu0 0.0
  %2107 = vmatpush.msra.mxu0 0.0
  %2108 = vmatpush.msra.mxu0 0.0
  %2109 = vmatpush.msra.mxu0 0.0
  %2110 = vmatpush.msra.mxu0 0.0
  %2111 = vmatpush.msra.mxu0 0.0
  %2112 = vmatpush.msra.mxu0 0.0
  %2113 = vmatpush.msra.mxu0 0.0
  %2114 = vmatpush.msra.mxu0 0.0
  %2115 = vmatpush.msra.mxu0 0.0
  %2116 = vmatpush.msra.mxu0 %v2089
  %2117 = vmatpush.msra.mxu0 %v2088
  %2118 = vmatmul.f32.gmra.mxu0 %v2091
  %v2119 = vpop.f32.mrf.mxu0
  %v2120 = vadd.f32 0.0, %v2119
  %2121 = vmatmul.f32.gmra.mxu0 %v2094
  %v2122 = vpop.f32.mrf.mxu0
  %v2123 = vadd.f32 0.0, %v2122
  %2124 = vmatmul.f32.gmra.mxu0 %v2097
  %v2125 = vpop.f32.mrf.mxu0
  %v2126 = vadd.f32 0.0, %v2125
  %2127 = vmatmul.f32.gmra.mxu0 %v2100
  %v2128 = vpop.f32.mrf.mxu0
  %v2129 = vadd.f32 0.0, %v2128
  %2130 = vdwg.mxu0
  %v2132 = vsel %vm486, %v1757, 0
  %v2135 = vsel %vm486, %v1760, 0
  %v2138 = vsel %vm486, %v1763, 0
  %v2141 = vsel %vm486, %v1766, 0
  %2143 = vmatpush.msra.mxu0 0.0
  %2144 = vmatpush.msra.mxu0 0.0
  %2145 = vmatpush.msra.mxu0 0.0
  %2146 = vmatpush.msra.mxu0 0.0
  %2147 = vmatpush.msra.mxu0 0.0
  %2148 = vmatpush.msra.mxu0 0.0
  %2149 = vmatpush.msra.mxu0 0.0
  %2150 = vmatpush.msra.mxu0 0.0
  %2151 = vmatpush.msra.mxu0 0.0
  %2152 = vmatpush.msra.mxu0 0.0
  %2153 = vmatpush.msra.mxu0 0.0
  %2154 = vmatpush.msra.mxu0 0.0
  %2155 = vmatpush.msra.mxu0 0.0
  %2156 = vmatpush.msra.mxu0 0.0
  %2157 = vmatpush.msra.mxu0 %v1770
  %2158 = vmatpush.msra.mxu0 %v1769
  %2159 = vmatmul.f32.gmra.mxu0 %v2132
  %v2160 = vpop.f32.mrf.mxu0
  %v2161 = vadd.f32 %v2120, %v2160
  %2162 = vmatmul.f32.gmra.mxu0 %v2135
  %v2163 = vpop.f32.mrf.mxu0
  %v2164 = vadd.f32 %v2123, %v2163
  %2165 = vmatmul.f32.gmra.mxu0 %v2138
  %v2166 = vpop.f32.mrf.mxu0
  %v2167 = vadd.f32 %v2126, %v2166
  %2168 = vmatmul.f32.gmra.mxu0 %v2141
  %v2169 = vpop.f32.mrf.mxu0
  %v2170 = vadd.f32 %v2129, %v2169
  %2171 = vdwg.mxu0
  %v2172 = vadd.f32 %v1330, %v2161
  %v2173 = vadd.f32 %v1331, %v2164
  %v2174 = vadd.f32 %v1332, %v2167
  %v2175 = vadd.f32 %v1333, %v2170
  %s2176 = scalar_lea.vmem %s14, 1
  %v2177 = vld [vmem:[%s2176] sm:$0x1]
  %v2179 = vperm.slane %v2177, 0
  %v2181 = vadd.f32 %v2172, %v2179
  %v2182 = vadd.f32 %v2173, %v2179
  %v2183 = vadd.f32 %v2174, %v2179
  %v2184 = vadd.f32 %v2175, %v2179
  %s2185 = scalar_lea.vmem %s16, 1
  %v2186 = vld [vmem:[%s2185] sm:$0x1]
  %s2187 = scalar_lea.vmem %s17, 1
  %v2188 = vld [vmem:[%s2187] sm:$0x1]
  %v2189 = vsel %vm141, %v2181, 0.0
  %2190 = vadd.xlane.f32.xlu0 %v2189
  %v2191 = vpop.xlane.xlu0 %2190
  %v2192 = vsel %vm141, %v2182, 0.0
  %2193 = vadd.xlane.f32.xlu0 %v2192
  %v2194 = vpop.xlane.xlu0 %2193
  %v2195 = vsel %vm141, %v2183, 0.0
  %2196 = vadd.xlane.f32.xlu0 %v2195
  %v2197 = vpop.xlane.xlu0 %2196
  %v2198 = vsel %vm141, %v2184, 0.0
  %2199 = vadd.xlane.f32.xlu0 %v2198
  %v2200 = vpop.xlane.xlu0 %2199
  %v2201 = vmul.f32 %v2191, %v160
  %v2202 = vmul.f32 %v2194, %v160
  %v2203 = vmul.f32 %v2197, %v160
  %v2204 = vmul.f32 %v2200, %v160
  %v2205 = vsub.f32 %v2181, %v2201
  %v2206 = vsub.f32 %v2182, %v2202
  %v2207 = vsub.f32 %v2183, %v2203
  %v2208 = vsub.f32 %v2184, %v2204
  %v2209 = vmul.f32 %v2205, %v2205
  %v2210 = vmul.f32 %v2206, %v2206
  %v2211 = vmul.f32 %v2207, %v2207
  %v2212 = vmul.f32 %v2208, %v2208
  %v2213 = vsel %vm141, %v2209, 0.0
  %2214 = vadd.xlane.f32.xlu0 %v2213
  %v2215 = vpop.xlane.xlu0 %2214
  %v2216 = vsel %vm141, %v2210, 0.0
  %2217 = vadd.xlane.f32.xlu0 %v2216
  %v2218 = vpop.xlane.xlu0 %2217
  %v2219 = vsel %vm141, %v2211, 0.0
  %2220 = vadd.xlane.f32.xlu0 %v2219
  %v2221 = vpop.xlane.xlu0 %2220
  %v2222 = vsel %vm141, %v2212, 0.0
  %2223 = vadd.xlane.f32.xlu0 %v2222
  %v2224 = vpop.xlane.xlu0 %2223
  %v2225 = vmul.f32 %v2215, %v160
  %v2226 = vmul.f32 %v2218, %v160
  %v2227 = vmul.f32 %v2221, %v160
  %v2228 = vmul.f32 %v2224, %v160
  %v2229 = vadd.f32 %v2225, 1e-05
  %v2230 = vadd.f32 %v2226, 1e-05
  %v2231 = vadd.f32 %v2227, 1e-05
  %v2232 = vadd.f32 %v2228, 1e-05
  %v2233 = vrsqrt.pop %v2229
  %v2234 = vmul.f32 %v2233, %v2229
  %v2235 = vmul.f32 %v2234, %v2233
  %v2236 = vmul.f32 0.5, %v2235
  %v2237 = vsub.f32 1.5, %v2236
  %v2238 = vmul.f32 %v2233, %v2237
  %vm2239 = vweird.f32 %v2229
  %vm2240 = vweird.f32 %v2233
  %vm2241 = vmor %vm2239, %vm2240
  %v2242 = vsel %vm2241, %v2233, %v2238
  %v2243 = vrsqrt.pop %v2230
  %v2244 = vmul.f32 %v2243, %v2230
  %v2245 = vmul.f32 %v2244, %v2243
  %v2246 = vmul.f32 0.5, %v2245
  %v2247 = vsub.f32 1.5, %v2246
  %v2248 = vmul.f32 %v2243, %v2247
  %vm2249 = vweird.f32 %v2230
  %vm2250 = vweird.f32 %v2243
  %vm2251 = vmor %vm2249, %vm2250
  %v2252 = vsel %vm2251, %v2243, %v2248
  %v2253 = vrsqrt.pop %v2231
  %v2254 = vmul.f32 %v2253, %v2231
  %v2255 = vmul.f32 %v2254, %v2253
  %v2256 = vmul.f32 0.5, %v2255
  %v2257 = vsub.f32 1.5, %v2256
  %v2258 = vmul.f32 %v2253, %v2257
  %vm2259 = vweird.f32 %v2231
  %vm2260 = vweird.f32 %v2253
  %vm2261 = vmor %vm2259, %vm2260
  %v2262 = vsel %vm2261, %v2253, %v2258
  %v2263 = vrsqrt.pop %v2232
  %v2264 = vmul.f32 %v2263, %v2232
  %v2265 = vmul.f32 %v2264, %v2263
  %v2266 = vmul.f32 0.5, %v2265
  %v2267 = vsub.f32 1.5, %v2266
  %v2268 = vmul.f32 %v2263, %v2267
  %vm2269 = vweird.f32 %v2232
  %vm2270 = vweird.f32 %v2263
  %vm2271 = vmor %vm2269, %vm2270
  %v2272 = vsel %vm2271, %v2263, %v2268
  %v2273 = vmul.f32 %v2205, %v2242
  %v2274 = vmul.f32 %v2206, %v2252
  %v2275 = vmul.f32 %v2207, %v2262
  %v2276 = vmul.f32 %v2208, %v2272
  %v2278 = vperm.slane %v2186, 0
  %v2280 = vmul.f32 %v2273, %v2278
  %v2281 = vmul.f32 %v2274, %v2278
  %v2282 = vmul.f32 %v2275, %v2278
  %v2283 = vmul.f32 %v2276, %v2278
  %v2285 = vperm.slane %v2188, 0
  %v2287 = vadd.f32 %v2280, %v2285
  %v2288 = vadd.f32 %v2281, %v2285
  %v2289 = vadd.f32 %v2282, %v2285
  %v2290 = vadd.f32 %v2283, %v2285
  %s2291 = scalar_lea.vmem %s18, 32
  %v2292 = vld [vmem:[%s2291] sm:$0xff]
  %v2293 = vld [vmem:[%s2291 + $0x8] sm:$0xff]
  %v2294 = vld [vmem:[%s2291 + $0x10] sm:$0xff]
  %v2295 = vld [vmem:[%s2291 + $0x18] sm:$0xff]
  %s2296 = scalar_lea.vmem %s19, 1
  %v2297 = vld [vmem:[%s2296] sm:$0x1]
  %v2299 = vperm.slane %v2297, 0
  %v2302 = vsel %vm141, %v2287, 0
  %v2305 = vsel %vm141, %v2288, 0
  %v2308 = vsel %vm141, %v2289, 0
  %v2311 = vsel %vm141, %v2290, 0
  %2313 = vmatpush.msra.mxu0 0.0
  %2314 = vmatpush.msra.mxu0 0.0
  %2315 = vmatpush.msra.mxu0 0.0
  %2316 = vmatpush.msra.mxu0 0.0
  %2317 = vmatpush.msra.mxu0 0.0
  %2318 = vmatpush.msra.mxu0 0.0
  %2319 = vmatpush.msra.mxu0 0.0
  %2320 = vmatpush.msra.mxu0 0.0
  %2321 = vmatpush.msra.mxu0 0.0
  %2322 = vmatpush.msra.mxu0 0.0
  %2323 = vmatpush.msra.mxu0 0.0
  %2324 = vmatpush.msra.mxu0 0.0
  %2325 = vmatpush.msra.mxu0 %v2295
  %2326 = vmatpush.msra.mxu0 %v2294
  %2327 = vmatpush.msra.mxu0 %v2293
  %2328 = vmatpush.msra.mxu0 %v2292
  %2329 = vmatmul.f32.gmra.mxu0 %v2302
  %v2330 = vpop.f32.mrf.mxu0
  %v2331 = vadd.f32 %v2299, %v2330
  %2332 = vmatmul.f32.gmra.mxu0 %v2305
  %v2333 = vpop.f32.mrf.mxu0
  %v2334 = vadd.f32 %v2299, %v2333
  %2335 = vmatmul.f32.gmra.mxu0 %v2308
  %v2336 = vpop.f32.mrf.mxu0
  %v2337 = vadd.f32 %v2299, %v2336
  %2338 = vmatmul.f32.gmra.mxu0 %v2311
  %v2339 = vpop.f32.mrf.mxu0
  %v2340 = vadd.f32 %v2299, %v2339
  %2341 = vdwg.mxu0
  %v2342 = vmul.f32 %v2331, %v2331
  %v2343 = vmul.f32 %v2334, %v2334
  %v2344 = vmul.f32 %v2337, %v2337
  %v2345 = vmul.f32 %v2340, %v2340
  %v2346 = vmul.f32 %v2331, %v2342
  %v2347 = vmul.f32 %v2334, %v2343
  %v2348 = vmul.f32 %v2337, %v2344
  %v2349 = vmul.f32 %v2340, %v2345
  %v2350 = vmul.f32 %v2346, 0.044715
  %v2351 = vmul.f32 %v2347, 0.044715
  %v2352 = vmul.f32 %v2348, 0.044715
  %v2353 = vmul.f32 %v2349, 0.044715
  %v2354 = vadd.f32 %v2331, %v2350
  %v2355 = vadd.f32 %v2334, %v2351
  %v2356 = vadd.f32 %v2337, %v2352
  %v2357 = vadd.f32 %v2340, %v2353
  %v2358 = vmul.f32 %v2354, 0.7978846
  %v2359 = vmul.f32 %v2355, 0.7978846
  %v2360 = vmul.f32 %v2356, 0.7978846
  %v2361 = vmul.f32 %v2357, 0.7978846
  %v2362 = vtanh.pop %v2358
  %v2363 = vtanh.pop %v2359
  %v2364 = vtanh.pop %v2360
  %v2365 = vtanh.pop %v2361
  %v2366 = vadd.f32 %v2362, 1.0
  %v2367 = vadd.f32 %v2363, 1.0
  %v2368 = vadd.f32 %v2364, 1.0
  %v2369 = vadd.f32 %v2365, 1.0
  %v2370 = vmul.f32 %v2366, 0.5
  %v2371 = vmul.f32 %v2367, 0.5
  %v2372 = vmul.f32 %v2368, 0.5
  %v2373 = vmul.f32 %v2369, 0.5
  %v2374 = vmul.f32 %v2331, %v2370
  %v2375 = vmul.f32 %v2334, %v2371
  %v2376 = vmul.f32 %v2337, %v2372
  %v2377 = vmul.f32 %v2340, %v2373
  %s2378 = scalar_lea.vmem %s20, 128
  %v2379 = vld [vmem:[%s2378] sm:$0xff]
  %v2380 = vld [vmem:[%s2378 + $0x8] sm:$0xff]
  %v2381 = vld [vmem:[%s2378 + $0x10] sm:$0xff]
  %v2382 = vld [vmem:[%s2378 + $0x18] sm:$0xff]
  %v2383 = vld [vmem:[%s2378 + $0x20] sm:$0xff]
  %v2384 = vld [vmem:[%s2378 + $0x28] sm:$0xff]
  %v2385 = vld [vmem:[%s2378 + $0x30] sm:$0xff]
  %v2386 = vld [vmem:[%s2378 + $0x38] sm:$0xff]
  %v2387 = vld [vmem:[%s2378 + $0x40] sm:$0xff]
  %v2388 = vld [vmem:[%s2378 + $0x48] sm:$0xff]
  %v2389 = vld [vmem:[%s2378 + $0x50] sm:$0xff]
  %v2390 = vld [vmem:[%s2378 + $0x58] sm:$0xff]
  %v2391 = vld [vmem:[%s2378 + $0x60] sm:$0xff]
  %v2392 = vld [vmem:[%s2378 + $0x68] sm:$0xff]
  %v2393 = vld [vmem:[%s2378 + $0x70] sm:$0xff]
  %v2394 = vld [vmem:[%s2378 + $0x78] sm:$0xff]
  %s2395 = scalar_lea.vmem %s21, 1
  %v2396 = vld [vmem:[%s2395] sm:$0x1]
  %v2398 = vperm.slane %v2396, 0
  %2400 = vmatpush.msra.mxu0 %v2394
  %2401 = vmatpush.msra.mxu0 %v2393
  %2402 = vmatpush.msra.mxu0 %v2392
  %2403 = vmatpush.msra.mxu0 %v2391
  %2404 = vmatpush.msra.mxu0 %v2390
  %2405 = vmatpush.msra.mxu0 %v2389
  %2406 = vmatpush.msra.mxu0 %v2388
  %2407 = vmatpush.msra.mxu0 %v2387
  %2408 = vmatpush.msra.mxu0 %v2386
  %2409 = vmatpush.msra.mxu0 %v2385
  %2410 = vmatpush.msra.mxu0 %v2384
  %2411 = vmatpush.msra.mxu0 %v2383
  %2412 = vmatpush.msra.mxu0 %v2382
  %2413 = vmatpush.msra.mxu0 %v2381
  %2414 = vmatpush.msra.mxu0 %v2380
  %2415 = vmatpush.msra.mxu0 %v2379
  %2416 = vmatmul.f32.gmra.mxu0 %v2374
  %v2417 = vpop.f32.mrf.mxu0
  %v2418 = vadd.f32 %v2398, %v2417
  %2419 = vmatmul.f32.gmra.mxu0 %v2375
  %v2420 = vpop.f32.mrf.mxu0
  %v2421 = vadd.f32 %v2398, %v2420
  %2422 = vmatmul.f32.gmra.mxu0 %v2376
  %v2423 = vpop.f32.mrf.mxu0
  %v2424 = vadd.f32 %v2398, %v2423
  %2425 = vmatmul.f32.gmra.mxu0 %v2377
  %v2426 = vpop.f32.mrf.mxu0
  %v2427 = vadd.f32 %v2398, %v2426
  %2428 = vdwg.mxu0
  %v2429 = vadd.f32 %v2181, %v2418
  %v2430 = vadd.f32 %v2182, %v2421
  %v2431 = vadd.f32 %v2183, %v2424
  %v2432 = vadd.f32 %v2184, %v2427
  %v2433 = vld [vmem:[%s22] sm:$0x1]
  %v2434 = vld [vmem:[%s23] sm:$0x1]
  %v2435 = vsel %vm141, %v2429, 0.0
  %2436 = vadd.xlane.f32.xlu0 %v2435
  %v2437 = vpop.xlane.xlu0 %2436
  %v2438 = vsel %vm141, %v2430, 0.0
  %2439 = vadd.xlane.f32.xlu0 %v2438
  %v2440 = vpop.xlane.xlu0 %2439
  %v2441 = vsel %vm141, %v2431, 0.0
  %2442 = vadd.xlane.f32.xlu0 %v2441
  %v2443 = vpop.xlane.xlu0 %2442
  %v2444 = vsel %vm141, %v2432, 0.0
  %2445 = vadd.xlane.f32.xlu0 %v2444
  %v2446 = vpop.xlane.xlu0 %2445
  %v2447 = vmul.f32 %v2437, %v160
  %v2448 = vmul.f32 %v2440, %v160
  %v2449 = vmul.f32 %v2443, %v160
  %v2450 = vmul.f32 %v2446, %v160
  %v2451 = vsub.f32 %v2429, %v2447
  %v2452 = vsub.f32 %v2430, %v2448
  %v2453 = vsub.f32 %v2431, %v2449
  %v2454 = vsub.f32 %v2432, %v2450
  %v2455 = vmul.f32 %v2451, %v2451
  %v2456 = vmul.f32 %v2452, %v2452
  %v2457 = vmul.f32 %v2453, %v2453
  %v2458 = vmul.f32 %v2454, %v2454
  %v2459 = vsel %vm141, %v2455, 0.0
  %2460 = vadd.xlane.f32.xlu0 %v2459
  %v2461 = vpop.xlane.xlu0 %2460
  %v2462 = vsel %vm141, %v2456, 0.0
  %2463 = vadd.xlane.f32.xlu0 %v2462
  %v2464 = vpop.xlane.xlu0 %2463
  %v2465 = vsel %vm141, %v2457, 0.0
  %2466 = vadd.xlane.f32.xlu0 %v2465
  %v2467 = vpop.xlane.xlu0 %2466
  %v2468 = vsel %vm141, %v2458, 0.0
  %2469 = vadd.xlane.f32.xlu0 %v2468
  %v2470 = vpop.xlane.xlu0 %2469
  %v2471 = vmul.f32 %v2461, %v160
  %v2472 = vmul.f32 %v2464, %v160
  %v2473 = vmul.f32 %v2467, %v160
  %v2474 = vmul.f32 %v2470, %v160
  %v2475 = vadd.f32 %v2471, 1e-05
  %v2476 = vadd.f32 %v2472, 1e-05
  %v2477 = vadd.f32 %v2473, 1e-05
  %v2478 = vadd.f32 %v2474, 1e-05
  %v2479 = vrsqrt.pop %v2475
  %v2480 = vmul.f32 %v2479, %v2475
  %v2481 = vmul.f32 %v2480, %v2479
  %v2482 = vmul.f32 0.5, %v2481
  %v2483 = vsub.f32 1.5, %v2482
  %v2484 = vmul.f32 %v2479, %v2483
  %vm2485 = vweird.f32 %v2475
  %vm2486 = vweird.f32 %v2479
  %vm2487 = vmor %vm2485, %vm2486
  %v2488 = vsel %vm2487, %v2479, %v2484
  %v2489 = vrsqrt.pop %v2476
  %v2490 = vmul.f32 %v2489, %v2476
  %v2491 = vmul.f32 %v2490, %v2489
  %v2492 = vmul.f32 0.5, %v2491
  %v2493 = vsub.f32 1.5, %v2492
  %v2494 = vmul.f32 %v2489, %v2493
  %vm2495 = vweird.f32 %v2476
  %vm2496 = vweird.f32 %v2489
  %vm2497 = vmor %vm2495, %vm2496
  %v2498 = vsel %vm2497, %v2489, %v2494
  %v2499 = vrsqrt.pop %v2477
  %v2500 = vmul.f32 %v2499, %v2477
  %v2501 = vmul.f32 %v2500, %v2499
  %v2502 = vmul.f32 0.5, %v2501
  %v2503 = vsub.f32 1.5, %v2502
  %v2504 = vmul.f32 %v2499, %v2503
  %vm2505 = vweird.f32 %v2477
  %vm2506 = vweird.f32 %v2499
  %vm2507 = vmor %vm2505, %vm2506
  %v2508 = vsel %vm2507, %v2499, %v2504
  %v2509 = vrsqrt.pop %v2478
  %v2510 = vmul.f32 %v2509, %v2478
  %v2511 = vmul.f32 %v2510, %v2509
  %v2512 = vmul.f32 0.5, %v2511
  %v2513 = vsub.f32 1.5, %v2512
  %v2514 = vmul.f32 %v2509, %v2513
  %vm2515 = vweird.f32 %v2478
  %vm2516 = vweird.f32 %v2509
  %vm2517 = vmor %vm2515, %vm2516
  %v2518 = vsel %vm2517, %v2509, %v2514
  %v2519 = vmul.f32 %v2451, %v2488
  %v2520 = vmul.f32 %v2452, %v2498
  %v2521 = vmul.f32 %v2453, %v2508
  %v2522 = vmul.f32 %v2454, %v2518
  %v2524 = vperm.slane %v2433, 0
  %v2526 = vmul.f32 %v2519, %v2524
  %v2527 = vmul.f32 %v2520, %v2524
  %v2528 = vmul.f32 %v2521, %v2524
  %v2529 = vmul.f32 %v2522, %v2524
  %v2531 = vperm.slane %v2434, 0
  %v2533 = vadd.f32 %v2526, %v2531
  %v2534 = vadd.f32 %v2527, %v2531
  %v2535 = vadd.f32 %v2528, %v2531
  %v2536 = vadd.f32 %v2529, %v2531
  %v2537 = vld [vmem:[%s24] sm:$0xff]
  %v2538 = vld [vmem:[%s24 + $0x8] sm:$0xff]
  %v2539 = vld [vmem:[%s24 + $0x10] sm:$0xff]
  %v2540 = vld [vmem:[%s24 + $0x18] sm:$0xff]
  %v2541 = vld [vmem:[%s25] sm:$0x1]
  %v2543 = vperm.slane %v2541, 0
  %v2546 = vsel %vm141, %v2533, 0
  %v2549 = vsel %vm141, %v2534, 0
  %v2552 = vsel %vm141, %v2535, 0
  %v2555 = vsel %vm141, %v2536, 0
  %2557 = vmatpush.msra.mxu0 0.0
  %2558 = vmatpush.msra.mxu0 0.0
  %2559 = vmatpush.msra.mxu0 0.0
  %2560 = vmatpush.msra.mxu0 0.0
  %2561 = vmatpush.msra.mxu0 0.0
  %2562 = vmatpush.msra.mxu0 0.0
  %2563 = vmatpush.msra.mxu0 0.0
  %2564 = vmatpush.msra.mxu0 0.0
  %2565 = vmatpush.msra.mxu0 0.0
  %2566 = vmatpush.msra.mxu0 0.0
  %2567 = vmatpush.msra.mxu0 0.0
  %2568 = vmatpush.msra.mxu0 0.0
  %2569 = vmatpush.msra.mxu0 %v2540
  %2570 = vmatpush.msra.mxu0 %v2539
  %2571 = vmatpush.msra.mxu0 %v2538
  %2572 = vmatpush.msra.mxu0 %v2537
  %2573 = vmatmul.f32.gmra.mxu0 %v2546
  %v2574 = vpop.f32.mrf.mxu0
  %v2575 = vadd.f32 %v2543, %v2574
  %2576 = vmatmul.f32.gmra.mxu0 %v2549
  %v2577 = vpop.f32.mrf.mxu0
  %v2578 = vadd.f32 %v2543, %v2577
  %2579 = vmatmul.f32.gmra.mxu0 %v2552
  %v2580 = vpop.f32.mrf.mxu0
  %v2581 = vadd.f32 %v2543, %v2580
  %2582 = vmatmul.f32.gmra.mxu0 %v2555
  %v2583 = vpop.f32.mrf.mxu0
  %v2584 = vadd.f32 %v2543, %v2583
  %2585 = vdwg.mxu0
  %vm2586 = vcmask 523264
  %2587 = vst.msk [vmem:[%s26] sm:$0xff] %vm2586, %v2575
  %2588 = vst.msk [vmem:[%s26 + $0x8] sm:$0xff] %vm2586, %v2578
  %2589 = vst.msk [vmem:[%s26 + $0x10] sm:$0xff] %vm2586, %v2581
  %2590 = vst.msk [vmem:[%s26 + $0x18] sm:$0xff] %vm2586, %v2584
  // Predicated region
  $region106: #{swin_unet_forward.1} parent=0 // pred_check
    _
  $region107: #{swin_unet_forward.1} parent=0 // pred_check_branch
    %2592 = sbr.rel (0) target = $region109
  $region108: #{swin_unet_forward.1} parent=0 // pred_region
    _
  $region109: #{swin_unet_forward.1} parent=0 // pred_fallthru
    _
  // Predicated region
  $region110: #{swin_unet_forward.1} parent=0 // pred_check
    _
  $region111: #{swin_unet_forward.1} parent=0 // pred_check_branch
    %2594 = sbr.rel (0) target = $region113
  $region112: #{swin_unet_forward.1} parent=0 // pred_region
    _
  $region113: #{swin_unet_forward.1} parent=0 // pred_fallthru
    _

</llo_original>
